<compile_context>
chip_gen: v5e
topology: v5e:2x2
jax: 0.10.0
libtpu: 0.0.40
codegen_flags: <defaults>
</compile_context>

<pallas_src>
import jax
import jax.numpy as jnp
from jax.experimental import pallas as pl
from jax.experimental.pallas import tpu as pltpu


# ---- module structural hyper-parameters (match the PyTorch module) ----------
EMBED_DIMS = 256
NUM_HEADS = 8
NUM_LEVELS = 4
NUM_POINTS = 8
LP = NUM_LEVELS * NUM_POINTS                 # 32  (softmax segment length)
HEAD_SHIFT = LP.bit_length() - 1             # 5   (col >> 5 == col // LP)
assert (1 << HEAD_SHIFT) == LP
OFF_DIM = NUM_HEADS * LP * 2                 # 512 (sampling_offsets out dim)
ATT_DIM = NUM_HEADS * LP                     # 256 (attention_weights out dim)
QOUT_DIM = OFF_DIM + ATT_DIM                 # 768 (fused query GEMM out dim)

# ---- small run shapes (consistent with the module, kept small) --------------
BS = 2
NUM_QUERY = 64
NUM_VALUE = 32


# -------------------- fused kernel -------------------------------------------
def fused_kernel(v_ref, q_ref, w_val_ref, b_val_ref, w_q_ref, b_q_ref,
                 vout_ref, off_ref, att_ref):
    # v_ref: (Rv, E) f32     q_ref: (Rq, E) f32
    # w_val: (E, E) bf16     b_val: (1, E) f32
    # w_q:   (E, 768) bf16   b_q:   (1, 768) f32
    # vout:  (Rv, E) f32     off: (Rq, 512) f32     att: (Rq, 256) f32

    # bf16 activations, bf16 weights, f32 accumulation (MXU-native).
    # NOTE: sampling offsets therefore carry bf16 input precision; keep the
    # query GEMM in f32 instead if sub-pixel offset resolution ever matters.
    v_bf = v_ref[...].astype(jnp.bfloat16)
    q_bf = q_ref[...].astype(jnp.bfloat16)

    # ---- value projection ----------------------------------------------------
    vout = jnp.dot(v_bf, w_val_ref[...],
                   preferred_element_type=jnp.float32) + b_val_ref[...]
    vout_ref[...] = vout.astype(vout_ref.dtype)

    # ---- fused query-side GEMM: offsets + attention logits in one pass -------
    qo = jnp.dot(q_bf, w_q_ref[...],
                 preferred_element_type=jnp.float32) + b_q_ref[...]   # (Rq, 768)

    # sampling offsets: first 512 columns (128-lane-aligned static slice)
    off_ref[...] = qo[:, :OFF_DIM].astype(off_ref.dtype)

    # attention logits: last 256 columns (128-lane-aligned static slice)
    logits = qo[:, OFF_DIM:]                                          # (Rq, 256)

    # ---- per-head softmax over LP=32 entries, kept fully 2D / lane-dense -----
    # Per-HEAD max stabilizer (fixes the row-wide-max underflow hazard): 8
    # masked row-maxes assembled back with selects; everything stays (Rq, 256).
    col_head = jax.lax.broadcasted_iota(jnp.int32, (1, ATT_DIM), 1) >> HEAD_SHIFT
    m_full = jnp.full_like(logits, -jnp.inf)
    for h in range(NUM_HEADS):
        in_h = col_head == h                                          # (1, 256)
        m_h = jnp.max(jnp.where(in_h, logits, -jnp.inf),
                      axis=-1, keepdims=True)                         # (Rq, 1)
        m_full = jnp.where(in_h, m_h, m_full)                         # (Rq, 256)
    e = jnp.exp(logits - m_full)                                      # (Rq, 256)

    # Per-head sums = e @ block-diagonal(ones, block=LP): segmented reduction on
    # the MXU, no relayout.  Mask built from skinny iotas with shifts, in bf16.
    ci = jax.lax.broadcasted_iota(jnp.int32, (ATT_DIM, 1), 0) >> HEAD_SHIFT
    cj = jax.lax.broadcasted_iota(jnp.int32, (1, ATT_DIM), 1) >> HEAD_SHIFT
    blockdiag = (ci == cj).astype(jnp.bfloat16)                       # (256, 256)

    s = jnp.dot(e.astype(jnp.bfloat16), blockdiag,
                preferred_element_type=jnp.float32)                   # (Rq, 256)
    # Exact reciprocal: downstream weighted sum assumes normalized weights.
    att_ref[...] = (e * pl.reciprocal(s, approx=False)).astype(att_ref.dtype)


# -------------------- wrapper --------------------------------------------------
def ms_deformable_attention_3d(query, value, params):
    bs, nq, e = query.shape
    _, nv, _ = value.shape
    rq, rv = bs * nq, bs * nv

    # Fold batch into rows (sublane-aligned row counts, no size-1 leading dim).
    q2 = query.reshape(rq, e)
    v2 = value.reshape(rv, e)

    vmem = pltpu.MemorySpace.VMEM
    vout, off, att = pl.pallas_call(
        fused_kernel,
        out_shape=(
            jax.ShapeDtypeStruct((rv, e), value.dtype),
            jax.ShapeDtypeStruct((rq, OFF_DIM), query.dtype),
            jax.ShapeDtypeStruct((rq, ATT_DIM), query.dtype),
        ),
        # Single invocation, no grid: whole operands live in VMEM, no
        # double-buffering / pipeline bookkeeping.
        in_specs=[pl.BlockSpec(memory_space=vmem)] * 6,
        out_specs=(
            pl.BlockSpec(memory_space=vmem),
            pl.BlockSpec(memory_space=vmem),
            pl.BlockSpec(memory_space=vmem),
        ),
    )(v2, q2, params["w_val"], params["b_val"], params["w_q"], params["b_q"])

    value_out = vout.reshape(bs, nv, NUM_HEADS, e // NUM_HEADS)
    sampling_offsets = off.reshape(bs, nq, NUM_HEADS, NUM_LEVELS, NUM_POINTS, 2)
    attention_weights = att.reshape(bs, nq, NUM_HEADS, NUM_LEVELS, NUM_POINTS)
    return value_out, sampling_offsets, attention_weights


# -------------------- parameter init (weight fusion hoisted here) --------------
def init_params(key):
    k = jax.random.split(key, 6)
    scale = 0.05
    w_val = scale * jax.random.normal(k[0], (EMBED_DIMS, EMBED_DIMS), jnp.float32)
    b_val = scale * jax.random.normal(k[1], (1, EMBED_DIMS), jnp.float32)
    w_off = scale * jax.random.normal(k[2], (EMBED_DIMS, OFF_DIM), jnp.float32)
    b_off = scale * jax.random.normal(k[3], (1, OFF_DIM), jnp.float32)
    w_att = scale * jax.random.normal(k[4], (EMBED_DIMS, ATT_DIM), jnp.float32)
    b_att = scale * jax.random.normal(k[5], (1, ATT_DIM), jnp.float32)
    # Fuse the two query-side Linears ONCE (no per-forward concat); store the
    # GEMM weights in bf16, keep biases f32 (added after f32 accumulation).
    return {
        "w_val": w_val.astype(jnp.bfloat16),
        "b_val": b_val,
        "w_q": jnp.concatenate([w_off, w_att], axis=1).astype(jnp.bfloat16),
        "b_q": jnp.concatenate([b_off, b_att], axis=1),
    }


# -------------------- pure-JAX reference (for verification) -------------------
def reference(query, value, params):
    bs, nq, e = query.shape
    _, nv, _ = value.shape
    w_val = params["w_val"].astype(jnp.float32)
    w_q = params["w_q"].astype(jnp.float32)
    w_off, w_att = w_q[:, :OFF_DIM], w_q[:, OFF_DIM:]
    b_off, b_att = params["b_q"][0, :OFF_DIM], params["b_q"][0, OFF_DIM:]

    v = value @ w_val + params["b_val"][0]
    v = v.reshape(bs, nv, NUM_HEADS, e // NUM_HEADS)
    off = (query @ w_off + b_off).reshape(
        bs, nq, NUM_HEADS, NUM_LEVELS, NUM_POINTS, 2)
    att = jax.nn.softmax(
        (query @ w_att + b_att).reshape(bs, nq, NUM_HEADS, LP), axis=-1)
    att = att.reshape(bs, nq, NUM_HEADS, NUM_LEVELS, NUM_POINTS)
    return v, off, att


# -------------------- main ------------------------------------------------------
if __name__ == "__main__":
    key = jax.random.PRNGKey(0)
    k_q, k_v, k_p = jax.random.split(key, 3)

    query = jax.random.normal(k_q, (BS, NUM_QUERY, EMBED_DIMS), jnp.float32)
    value = jax.random.normal(k_v, (BS, NUM_VALUE, EMBED_DIMS), jnp.float32)
    params = init_params(k_p)

    v_out, off_out, att_out = ms_deformable_attention_3d(query, value, params)
    jax.block_until_ready((v_out, off_out, att_out))

    v_ref, off_ref, att_ref = reference(query, value, params)
    assert v_out.shape == (BS, NUM_VALUE, NUM_HEADS, EMBED_DIMS // NUM_HEADS)
    assert off_out.shape == (BS, NUM_QUERY, NUM_HEADS, NUM_LEVELS, NUM_POINTS, 2)
    assert att_out.shape == (BS, NUM_QUERY, NUM_HEADS, NUM_LEVELS, NUM_POINTS)

    # Kernel casts activations to bf16 (reference keeps them f32), so GEMM
    # outputs differ by the activation-quantization noise (~1e-3 RMS).
    assert jnp.allclose(v_out, v_ref, atol=2e-2)
    assert jnp.allclose(off_out, off_ref, atol=2e-2)
    assert jnp.allclose(att_out, att_ref, atol=1e-2)
    assert bool(jnp.all(jnp.isfinite(att_out)))

    print("KERNEL_OK")
</pallas_src>

<mosaic_0001>
module attributes {stable_mosaic.version = 11 : i64} {
  func.func @fused_kernel(%arg0: memref<64x256xf32, #tpu.memory_space<vmem>>, %arg1: memref<128x256xf32, #tpu.memory_space<vmem>>, %arg2: memref<256x256xbf16, #tpu.memory_space<vmem>>, %arg3: memref<1x256xf32, #tpu.memory_space<vmem>>, %arg4: memref<256x768xbf16, #tpu.memory_space<vmem>>, %arg5: memref<1x768xf32, #tpu.memory_space<vmem>>, %arg6: memref<64x256xf32, #tpu.memory_space<vmem>>, %arg7: memref<128x512xf32, #tpu.memory_space<vmem>>, %arg8: memref<128x256xf32, #tpu.memory_space<vmem>>) attributes {dimension_semantics = [], scalar_prefetch = 0 : i64, scratch_operands = 0 : i64, tpu.core_type = #tpu.core_type<tc>} {
    %c0 = arith.constant 0 : index
    %c0_0 = arith.constant 0 : index
    %0 = vector.load %arg0[%c0, %c0_0] : memref<64x256xf32, #tpu.memory_space<vmem>>, vector<64x256xf32>
    %1 = arith.truncf %0 : vector<64x256xf32> to vector<64x256xbf16>
    %c0_1 = arith.constant 0 : index
    %c0_2 = arith.constant 0 : index
    %2 = vector.load %arg1[%c0_1, %c0_2] : memref<128x256xf32, #tpu.memory_space<vmem>>, vector<128x256xf32>
    %3 = arith.truncf %2 : vector<128x256xf32> to vector<128x256xbf16>
    %c0_3 = arith.constant 0 : index
    %c0_4 = arith.constant 0 : index
    %4 = vector.load %arg2[%c0_3, %c0_4] : memref<256x256xbf16, #tpu.memory_space<vmem>>, vector<256x256xbf16>
    %cst = arith.constant dense<0.000000e+00> : vector<64x256xf32>
    %5 = tpu.matmul %1, %4, %cst {dimension_numbers = #tpu.dot_dimension_numbers<[1], [0], [0], [1], [0, 0, 1, 1], [], []>} : vector<64x256xbf16>, vector<256x256xbf16>, vector<64x256xf32> -> vector<64x256xf32>
    %c0_5 = arith.constant 0 : index
    %c0_6 = arith.constant 0 : index
    %6 = vector.load %arg3[%c0_5, %c0_6] : memref<1x256xf32, #tpu.memory_space<vmem>>, vector<1x256xf32>
    %7 = vector.broadcast %6 : vector<1x256xf32> to vector<64x256xf32>
    %8 = arith.addf %5, %7 : vector<64x256xf32>
    %c0_7 = arith.constant 0 : index
    %c0_8 = arith.constant 0 : index
    %9 = vector.load %arg6[%c0_7, %c0_8] : memref<64x256xf32, #tpu.memory_space<vmem>>, vector<64x256xf32>
    tpu.vector_store %arg6[%c0_7, %c0_8], %8 {strides = array<i32>} : memref<64x256xf32, #tpu.memory_space<vmem>>, vector<64x256xf32>,
    %c0_9 = arith.constant 0 : index
    %c0_10 = arith.constant 0 : index
    %10 = vector.load %arg4[%c0_9, %c0_10] : memref<256x768xbf16, #tpu.memory_space<vmem>>, vector<256x768xbf16>
    %cst_11 = arith.constant dense<0.000000e+00> : vector<128x768xf32>
    %11 = tpu.matmul %3, %10, %cst_11 {dimension_numbers = #tpu.dot_dimension_numbers<[1], [0], [0], [1], [0, 0, 1, 1], [], []>} : vector<128x256xbf16>, vector<256x768xbf16>, vector<128x768xf32> -> vector<128x768xf32>
    %c0_12 = arith.constant 0 : index
    %c0_13 = arith.constant 0 : index
    %12 = vector.load %arg5[%c0_12, %c0_13] : memref<1x768xf32, #tpu.memory_space<vmem>>, vector<1x768xf32>
    %13 = vector.broadcast %12 : vector<1x768xf32> to vector<128x768xf32>
    %14 = arith.addf %11, %13 : vector<128x768xf32>
    %15 = vector.extract_strided_slice %14 {offsets = [0, 0], sizes = [128, 512], strides = [1, 1]} : vector<128x768xf32> to vector<128x512xf32>
    %c0_14 = arith.constant 0 : index
    %c0_15 = arith.constant 0 : index
    %16 = vector.load %arg7[%c0_14, %c0_15] : memref<128x512xf32, #tpu.memory_space<vmem>>, vector<128x512xf32>
    tpu.vector_store %arg7[%c0_14, %c0_15], %15 {strides = array<i32>} : memref<128x512xf32, #tpu.memory_space<vmem>>, vector<128x512xf32>,
    %17 = vector.extract_strided_slice %14 {offsets = [0, 512], sizes = [128, 256], strides = [1, 1]} : vector<128x768xf32> to vector<128x256xf32>
    %18 = tpu.iota {dimensions = array<i32: 1>} : vector<1x256xi32>
    %c5_i32 = arith.constant 5 : i32
    %19 = vector.broadcast %c5_i32 : i32 to vector<1x256xi32>
    %20 = arith.shrsi %18, %19 : vector<1x256xi32>
    %cst_16 = arith.constant 0xFF800000 : f32
    %21 = vector.broadcast %cst_16 : f32 to vector<128x256xf32>
    %c0_i32 = arith.constant 0 : i32
    %22 = vector.broadcast %c0_i32 : i32 to vector<1x256xi32>
    %23 = arith.cmpi eq, %20, %22 : vector<1x256xi32>
    %cst_17 = arith.constant 0xFF800000 : f32
    %24 = vector.shape_cast %23 : vector<1x256xi1> to vector<1x256xi1>
    %25 = vector.broadcast %24 : vector<1x256xi1> to vector<128x256xi1>
    %26 = vector.broadcast %cst_17 : f32 to vector<128x256xf32>
    %27 = arith.select %25, %17, %26 : vector<128x256xi1>, vector<128x256xf32>
    %cst_18 = arith.constant dense<0xFF800000> : vector<128xf32>
    %28 = vector.multi_reduction <maximumf>, %27, %cst_18 [1] : vector<128x256xf32> to vector<128xf32>
    %29 = vector.shape_cast %28 : vector<128xf32> to vector<128x1xf32>
    %30 = vector.shape_cast %23 : vector<1x256xi1> to vector<1x256xi1>
    %31 = vector.broadcast %30 : vector<1x256xi1> to vector<128x256xi1>
    %32 = vector.shape_cast %29 : vector<128x1xf32> to vector<128x1xf32>
    %33 = vector.broadcast %32 : vector<128x1xf32> to vector<128x256xf32>
    %34 = arith.select %31, %33, %21 : vector<128x256xi1>, vector<128x256xf32>
    %c1_i32 = arith.constant 1 : i32
    %35 = vector.broadcast %c1_i32 : i32 to vector<1x256xi32>
    %36 = arith.cmpi eq, %20, %35 : vector<1x256xi32>
    %cst_19 = arith.constant 0xFF800000 : f32
    %37 = vector.shape_cast %36 : vector<1x256xi1> to vector<1x256xi1>
    %38 = vector.broadcast %37 : vector<1x256xi1> to vector<128x256xi1>
    %39 = vector.broadcast %cst_19 : f32 to vector<128x256xf32>
    %40 = arith.select %38, %17, %39 : vector<128x256xi1>, vector<128x256xf32>
    %cst_20 = arith.constant dense<0xFF800000> : vector<128xf32>
    %41 = vector.multi_reduction <maximumf>, %40, %cst_20 [1] : vector<128x256xf32> to vector<128xf32>
    %42 = vector.shape_cast %41 : vector<128xf32> to vector<128x1xf32>
    %43 = vector.shape_cast %36 : vector<1x256xi1> to vector<1x256xi1>
    %44 = vector.broadcast %43 : vector<1x256xi1> to vector<128x256xi1>
    %45 = vector.shape_cast %42 : vector<128x1xf32> to vector<128x1xf32>
    %46 = vector.broadcast %45 : vector<128x1xf32> to vector<128x256xf32>
    %47 = arith.select %44, %46, %34 : vector<128x256xi1>, vector<128x256xf32>
    %c2_i32 = arith.constant 2 : i32
    %48 = vector.broadcast %c2_i32 : i32 to vector<1x256xi32>
    %49 = arith.cmpi eq, %20, %48 : vector<1x256xi32>
    %cst_21 = arith.constant 0xFF800000 : f32
    %50 = vector.shape_cast %49 : vector<1x256xi1> to vector<1x256xi1>
    %51 = vector.broadcast %50 : vector<1x256xi1> to vector<128x256xi1>
    %52 = vector.broadcast %cst_21 : f32 to vector<128x256xf32>
    %53 = arith.select %51, %17, %52 : vector<128x256xi1>, vector<128x256xf32>
    %cst_22 = arith.constant dense<0xFF800000> : vector<128xf32>
    %54 = vector.multi_reduction <maximumf>, %53, %cst_22 [1] : vector<128x256xf32> to vector<128xf32>
    %55 = vector.shape_cast %54 : vector<128xf32> to vector<128x1xf32>
    %56 = vector.shape_cast %49 : vector<1x256xi1> to vector<1x256xi1>
    %57 = vector.broadcast %56 : vector<1x256xi1> to vector<128x256xi1>
    %58 = vector.shape_cast %55 : vector<128x1xf32> to vector<128x1xf32>
    %59 = vector.broadcast %58 : vector<128x1xf32> to vector<128x256xf32>
    %60 = arith.select %57, %59, %47 : vector<128x256xi1>, vector<128x256xf32>
    %c3_i32 = arith.constant 3 : i32
    %61 = vector.broadcast %c3_i32 : i32 to vector<1x256xi32>
    %62 = arith.cmpi eq, %20, %61 : vector<1x256xi32>
    %cst_23 = arith.constant 0xFF800000 : f32
    %63 = vector.shape_cast %62 : vector<1x256xi1> to vector<1x256xi1>
    %64 = vector.broadcast %63 : vector<1x256xi1> to vector<128x256xi1>
    %65 = vector.broadcast %cst_23 : f32 to vector<128x256xf32>
    %66 = arith.select %64, %17, %65 : vector<128x256xi1>, vector<128x256xf32>
    %cst_24 = arith.constant dense<0xFF800000> : vector<128xf32>
    %67 = vector.multi_reduction <maximumf>, %66, %cst_24 [1] : vector<128x256xf32> to vector<128xf32>
    %68 = vector.shape_cast %67 : vector<128xf32> to vector<128x1xf32>
    %69 = vector.shape_cast %62 : vector<1x256xi1> to vector<1x256xi1>
    %70 = vector.broadcast %69 : vector<1x256xi1> to vector<128x256xi1>
    %71 = vector.shape_cast %68 : vector<128x1xf32> to vector<128x1xf32>
    %72 = vector.broadcast %71 : vector<128x1xf32> to vector<128x256xf32>
    %73 = arith.select %70, %72, %60 : vector<128x256xi1>, vector<128x256xf32>
    %c4_i32 = arith.constant 4 : i32
    %74 = vector.broadcast %c4_i32 : i32 to vector<1x256xi32>
    %75 = arith.cmpi eq, %20, %74 : vector<1x256xi32>
    %cst_25 = arith.constant 0xFF800000 : f32
    %76 = vector.shape_cast %75 : vector<1x256xi1> to vector<1x256xi1>
    %77 = vector.broadcast %76 : vector<1x256xi1> to vector<128x256xi1>
    %78 = vector.broadcast %cst_25 : f32 to vector<128x256xf32>
    %79 = arith.select %77, %17, %78 : vector<128x256xi1>, vector<128x256xf32>
    %cst_26 = arith.constant dense<0xFF800000> : vector<128xf32>
    %80 = vector.multi_reduction <maximumf>, %79, %cst_26 [1] : vector<128x256xf32> to vector<128xf32>
    %81 = vector.shape_cast %80 : vector<128xf32> to vector<128x1xf32>
    %82 = vector.shape_cast %75 : vector<1x256xi1> to vector<1x256xi1>
    %83 = vector.broadcast %82 : vector<1x256xi1> to vector<128x256xi1>
    %84 = vector.shape_cast %81 : vector<128x1xf32> to vector<128x1xf32>
    %85 = vector.broadcast %84 : vector<128x1xf32> to vector<128x256xf32>
    %86 = arith.select %83, %85, %73 : vector<128x256xi1>, vector<128x256xf32>
    %c5_i32_27 = arith.constant 5 : i32
    %87 = vector.broadcast %c5_i32_27 : i32 to vector<1x256xi32>
    %88 = arith.cmpi eq, %20, %87 : vector<1x256xi32>
    %cst_28 = arith.constant 0xFF800000 : f32
    %89 = vector.shape_cast %88 : vector<1x256xi1> to vector<1x256xi1>
    %90 = vector.broadcast %89 : vector<1x256xi1> to vector<128x256xi1>
    %91 = vector.broadcast %cst_28 : f32 to vector<128x256xf32>
    %92 = arith.select %90, %17, %91 : vector<128x256xi1>, vector<128x256xf32>
    %cst_29 = arith.constant dense<0xFF800000> : vector<128xf32>
    %93 = vector.multi_reduction <maximumf>, %92, %cst_29 [1] : vector<128x256xf32> to vector<128xf32>
    %94 = vector.shape_cast %93 : vector<128xf32> to vector<128x1xf32>
    %95 = vector.shape_cast %88 : vector<1x256xi1> to vector<1x256xi1>
    %96 = vector.broadcast %95 : vector<1x256xi1> to vector<128x256xi1>
    %97 = vector.shape_cast %94 : vector<128x1xf32> to vector<128x1xf32>
    %98 = vector.broadcast %97 : vector<128x1xf32> to vector<128x256xf32>
    %99 = arith.select %96, %98, %86 : vector<128x256xi1>, vector<128x256xf32>
    %c6_i32 = arith.constant 6 : i32
    %100 = vector.broadcast %c6_i32 : i32 to vector<1x256xi32>
    %101 = arith.cmpi eq, %20, %100 : vector<1x256xi32>
    %cst_30 = arith.constant 0xFF800000 : f32
    %102 = vector.shape_cast %101 : vector<1x256xi1> to vector<1x256xi1>
    %103 = vector.broadcast %102 : vector<1x256xi1> to vector<128x256xi1>
    %104 = vector.broadcast %cst_30 : f32 to vector<128x256xf32>
    %105 = arith.select %103, %17, %104 : vector<128x256xi1>, vector<128x256xf32>
    %cst_31 = arith.constant dense<0xFF800000> : vector<128xf32>
    %106 = vector.multi_reduction <maximumf>, %105, %cst_31 [1] : vector<128x256xf32> to vector<128xf32>
    %107 = vector.shape_cast %106 : vector<128xf32> to vector<128x1xf32>
    %108 = vector.shape_cast %101 : vector<1x256xi1> to vector<1x256xi1>
    %109 = vector.broadcast %108 : vector<1x256xi1> to vector<128x256xi1>
    %110 = vector.shape_cast %107 : vector<128x1xf32> to vector<128x1xf32>
    %111 = vector.broadcast %110 : vector<128x1xf32> to vector<128x256xf32>
    %112 = arith.select %109, %111, %99 : vector<128x256xi1>, vector<128x256xf32>
    %c7_i32 = arith.constant 7 : i32
    %113 = vector.broadcast %c7_i32 : i32 to vector<1x256xi32>
    %114 = arith.cmpi eq, %20, %113 : vector<1x256xi32>
    %cst_32 = arith.constant 0xFF800000 : f32
    %115 = vector.shape_cast %114 : vector<1x256xi1> to vector<1x256xi1>
    %116 = vector.broadcast %115 : vector<1x256xi1> to vector<128x256xi1>
    %117 = vector.broadcast %cst_32 : f32 to vector<128x256xf32>
    %118 = arith.select %116, %17, %117 : vector<128x256xi1>, vector<128x256xf32>
    %cst_33 = arith.constant dense<0xFF800000> : vector<128xf32>
    %119 = vector.multi_reduction <maximumf>, %118, %cst_33 [1] : vector<128x256xf32> to vector<128xf32>
    %120 = vector.shape_cast %119 : vector<128xf32> to vector<128x1xf32>
    %121 = vector.shape_cast %114 : vector<1x256xi1> to vector<1x256xi1>
    %122 = vector.broadcast %121 : vector<1x256xi1> to vector<128x256xi1>
    %123 = vector.shape_cast %120 : vector<128x1xf32> to vector<128x1xf32>
    %124 = vector.broadcast %123 : vector<128x1xf32> to vector<128x256xf32>
    %125 = arith.select %122, %124, %112 : vector<128x256xi1>, vector<128x256xf32>
    %126 = arith.subf %17, %125 : vector<128x256xf32>
    %127 = math.exp %126 : vector<128x256xf32>
    %128 = tpu.iota {dimensions = array<i32: 0>} : vector<256x1xi32>
    %c5_i32_34 = arith.constant 5 : i32
    %129 = vector.broadcast %c5_i32_34 : i32 to vector<256x1xi32>
    %130 = arith.shrsi %128, %129 : vector<256x1xi32>
    %131 = tpu.iota {dimensions = array<i32: 1>} : vector<1x256xi32>
    %c5_i32_35 = arith.constant 5 : i32
    %132 = vector.broadcast %c5_i32_35 : i32 to vector<1x256xi32>
    %133 = arith.shrsi %131, %132 : vector<1x256xi32>
    %134 = vector.broadcast %130 : vector<256x1xi32> to vector<256x256xi32>
    %135 = vector.broadcast %133 : vector<1x256xi32> to vector<256x256xi32>
    %136 = arith.cmpi eq, %134, %135 : vector<256x256xi32>
    %137 = arith.extui %136 : vector<256x256xi1> to vector<256x256xi32>
    %138 = arith.sitofp %137 : vector<256x256xi32> to vector<256x256xf32>
    %139 = arith.truncf %138 : vector<256x256xf32> to vector<256x256xbf16>
    %140 = arith.truncf %127 : vector<128x256xf32> to vector<128x256xbf16>
    %cst_36 = arith.constant dense<0.000000e+00> : vector<128x256xf32>
    %141 = tpu.matmul %140, %139, %cst_36 {dimension_numbers = #tpu.dot_dimension_numbers<[1], [0], [0], [1], [0, 0, 1, 1], [], []>} : vector<128x256xbf16>, vector<256x256xbf16>, vector<128x256xf32> -> vector<128x256xf32>
    %142 = tpu.reciprocal %141 : vector<128x256xf32> -> vector<128x256xf32>
    %143 = arith.mulf %127, %142 : vector<128x256xf32>
    %c0_37 = arith.constant 0 : index
    %c0_38 = arith.constant 0 : index
    %144 = vector.load %arg8[%c0_37, %c0_38] : memref<128x256xf32, #tpu.memory_space<vmem>>, vector<128x256xf32>
    tpu.vector_store %arg8[%c0_37, %c0_38], %143 {strides = array<i32>} : memref<128x256xf32, #tpu.memory_space<vmem>>, vector<128x256xf32>,
    return
  }
}

</mosaic_0001>

<llo_original>
// kernel: tpu_custom_call.1
$region0: #{tpu_custom_call.1}
  #allocation0 [shape = 'u32[]', space=smem, size = 0x4, offset = 0x4, fixed_abs, tag = 'smem constant byte address 0x4 - core index']
  #allocation1 [shape = 'u32[72,128]{1,0:T(1,128)}', space=vmem, size = 0x9000, scoped, tag = 'internal scratch']
  %s0 = inlined_call_operand.hbm [shape: f32[64,256], index: 0, kind: input, shape index: {}]
  %s1 = inlined_call_operand.hbm [shape: f32[128,256], index: 1, kind: input, shape index: {}]
  %s2 = inlined_call_operand.hbm [shape: bf16[256,256], index: 2, kind: input, shape index: {}]
  %s3 = inlined_call_operand.vmem [shape: f32[1,256], index: 3, kind: input, shape index: {}]
  %s4 = inlined_call_operand.hbm [shape: bf16[256,768], index: 4, kind: input, shape index: {}]
  %s5 = inlined_call_operand.hbm [shape: f32[1,768], index: 5, kind: input, shape index: {}]
  %s6 = inlined_call_operand.hbm [shape: f32[64,256], index: 6, kind: output, shape index: {0}]
  %s7 = inlined_call_operand.hbm [shape: f32[128,512], index: 7, kind: output, shape index: {1}]
  %s8 = inlined_call_operand.hbm [shape: f32[128,256], index: 8, kind: output, shape index: {2}]
  %9 = xla_tuple %s6, %s7, %s8
  %s10 = sld [smem:[#allocation0]]
  $region70: #{tpu_custom_call.1} parent=0
    _
  %s12 = ssub.s32 1, %s10
  %s13 = scalar_select 0, %s12, %s10
  $region1: #{tpu_custom_call.1} parent=0
    #allocation2 [shape = 'u8[65536]{0}', space=vmem, size = 0x10000, scoped, tag = 'input window, operand 0, single buffered']
    #allocation3 [shape = 's32[1]{0}', space=sflag, size = 0x4, scoped, tag = 'scoped memory for tpu_custom_call.1']
    #allocation4 [shape = 's32[1]{0}', space=sflag, size = 0x4, scoped, tag = 'scoped memory for tpu_custom_call.1']
    #allocation5 [shape = 'u8[131072]{0}', space=vmem, size = 0x20000, scoped, tag = 'input window, operand 1, single buffered']
    #allocation6 [shape = 's32[1]{0}', space=sflag, size = 0x4, scoped, tag = 'scoped memory for tpu_custom_call.1']
    #allocation7 [shape = 'u8[131072]{0}', space=vmem, size = 0x20000, scoped, tag = 'input window, operand 2, single buffered']
    #allocation8 [shape = 'u8[393216]{0}', space=vmem, size = 0x60000, scoped, tag = 'input window, operand 4, single buffered']
    #allocation9 [shape = 's32[1]{0}', space=sflag, size = 0x4, scoped, tag = 'scoped memory for tpu_custom_call.1']
    #allocation10 [shape = 'u8[3072]{0}', space=vmem, size = 0xc00, scoped, tag = 'input window, operand 5, single buffered']
    #allocation11 [shape = 'u8[65536]{0}', space=vmem, size = 0x10000, scoped, tag = 'output window, operand 0, single buffered']
    #allocation12 [shape = 'u8[262144]{0}', space=vmem, size = 0x40000, scoped, tag = 'output window, operand 1, single buffered']
    #allocation13 [shape = 's32[1]{0}', space=sflag, size = 0x4, scoped, tag = 'scoped memory for tpu_custom_call.1']
    #allocation14 [shape = 'u8[131072]{0}', space=vmem, size = 0x20000, scoped, tag = 'output window, operand 2, single buffered']
    %14 = vsyncpa [#allocation3], 0
    %15 = vsyncpa [#allocation6], 0
    %16 = vsyncpa [#allocation9], 0
    %17 = vsyncpa [#allocation4], 0
    %18 = vsyncpa [#allocation13], 0
    // Predicated region
    $region2: #{tpu_custom_call.1} parent=1 // pred_check
      _
    $region3: #{tpu_custom_call.1} parent=1 // pred_check_branch
      %20 = sbr.rel (0) target = $region5
    $region4: #{tpu_custom_call.1} parent=1 // pred_region
      %22 = vsyncadd [#allocation3], 0
      %s23 = sshll.u32 %s0, 4
      %s24 = int_to_ptr.hbm [resolvable:$true] %s23
      %s25 = sshll.u32 [#allocation2], 4
      %s26 = int_to_ptr.vmem [resolvable:$true] %s25
      %31 = dma.hbm_to_vmem [thread:$0]  %s24, 2048, %s26, [#allocation3], 256, 256, 16
    $region5: #{tpu_custom_call.1} parent=1 // pred_fallthru
      _
    // Predicated region
    $region6: #{tpu_custom_call.1} parent=1 // pred_check
      _
    $region7: #{tpu_custom_call.1} parent=1 // pred_check_branch
      %33 = sbr.rel (0) target = $region9
    $region8: #{tpu_custom_call.1} parent=1 // pred_region
      %35 = vsyncadd [#allocation6], 0
      %s36 = sshll.u32 %s1, 4
      %s37 = int_to_ptr.hbm [resolvable:$true] %s36
      %s38 = sshll.u32 [#allocation5], 4
      %s39 = int_to_ptr.vmem [resolvable:$true] %s38
      %44 = dma.hbm_to_vmem [thread:$0]  %s37, 4096, %s39, [#allocation6], 256, 256, 16
    $region9: #{tpu_custom_call.1} parent=1 // pred_fallthru
      _
    // Predicated region
    $region10: #{tpu_custom_call.1} parent=1 // pred_check
      _
    $region11: #{tpu_custom_call.1} parent=1 // pred_check_branch
      %46 = sbr.rel (0) target = $region13
    $region12: #{tpu_custom_call.1} parent=1 // pred_region
      %48 = vsyncadd [#allocation6], 0
      %s49 = sshll.u32 %s2, 4
      %s50 = int_to_ptr.hbm [resolvable:$true] %s49
      %s51 = sshll.u32 [#allocation7], 4
      %s52 = int_to_ptr.vmem [resolvable:$true] %s51
      %57 = dma.hbm_to_vmem [thread:$0]  %s50, 4096, %s52, [#allocation6], 128, 128, 8
    $region13: #{tpu_custom_call.1} parent=1 // pred_fallthru
      _
    // Predicated region
    $region14: #{tpu_custom_call.1} parent=1 // pred_check
      _
    $region15: #{tpu_custom_call.1} parent=1 // pred_check_branch
      %59 = sbr.rel (0) target = $region17
    $region16: #{tpu_custom_call.1} parent=1 // pred_region
      _
    $region17: #{tpu_custom_call.1} parent=1 // pred_fallthru
      _
    // Predicated region
    $region18: #{tpu_custom_call.1} parent=1 // pred_check
      _
    $region19: #{tpu_custom_call.1} parent=1 // pred_check_branch
      %61 = sbr.rel (0) target = $region21
    $region20: #{tpu_custom_call.1} parent=1 // pred_region
      %63 = vsyncadd [#allocation9], 0
      %s64 = sshll.u32 %s4, 4
      %s65 = int_to_ptr.hbm [resolvable:$true] %s64
      %s66 = sshll.u32 [#allocation8], 4
      %s67 = int_to_ptr.vmem [resolvable:$true] %s66
      %72 = dma.hbm_to_vmem [thread:$0]  %s65, 12288, %s67, [#allocation9], 384, 384, 24
    $region21: #{tpu_custom_call.1} parent=1 // pred_fallthru
      _
    // Predicated region
    $region22: #{tpu_custom_call.1} parent=1 // pred_check
      _
    $region23: #{tpu_custom_call.1} parent=1 // pred_check_branch
      %74 = sbr.rel (0) target = $region25
    $region24: #{tpu_custom_call.1} parent=1 // pred_region
      %76 = vsyncadd [#allocation9], 0
      %s78 = sshll.u32 %s5, 4
      %s79 = int_to_ptr.hbm [resolvable:$true] %s78
      %s80 = sshll.u32 [#allocation10], 4
      %s81 = int_to_ptr.vmem [resolvable:$true] %s80
      %83 = dma.hbm_to_vmem [thread:$0]  %s79, 96, %s81, [#allocation9]
    $region25: #{tpu_custom_call.1} parent=1 // pred_fallthru
      _
    // Predicated region
    $region26: #{tpu_custom_call.1} parent=1 // pred_check
      _
    $region27: #{tpu_custom_call.1} parent=1 // pred_check_branch
      %85 = sbr.rel (0) target = $region29
    $region28: #{tpu_custom_call.1} parent=1 // pred_region
      %87 = dma.done [#allocation3], 2048
    $region29: #{tpu_custom_call.1} parent=1 // pred_fallthru
      _
    // Predicated region
    $region30: #{tpu_custom_call.1} parent=1 // pred_check
      _
    $region31: #{tpu_custom_call.1} parent=1 // pred_check_branch
      %89 = sbr.rel (0) target = $region33
    $region32: #{tpu_custom_call.1} parent=1 // pred_region
      %91 = dma.done [#allocation6], 4096
    $region33: #{tpu_custom_call.1} parent=1 // pred_fallthru
      _
    // Predicated region
    $region34: #{tpu_custom_call.1} parent=1 // pred_check
      _
    $region35: #{tpu_custom_call.1} parent=1 // pred_check_branch
      %93 = sbr.rel (0) target = $region37
    $region36: #{tpu_custom_call.1} parent=1 // pred_region
      %95 = dma.done [#allocation6], 4096
    $region37: #{tpu_custom_call.1} parent=1 // pred_fallthru
      _
    // Predicated region
    $region38: #{tpu_custom_call.1} parent=1 // pred_check
      _
    $region39: #{tpu_custom_call.1} parent=1 // pred_check_branch
      %97 = sbr.rel (0) target = $region41
    $region40: #{tpu_custom_call.1} parent=1 // pred_region
      %99 = dma.done [#allocation9], 12288
    $region41: #{tpu_custom_call.1} parent=1 // pred_fallthru
      _
    // Predicated region
    $region42: #{tpu_custom_call.1} parent=1 // pred_check
      _
    $region43: #{tpu_custom_call.1} parent=1 // pred_check_branch
      %101 = sbr.rel (0) target = $region45
    $region44: #{tpu_custom_call.1} parent=1 // pred_region
      %103 = dma.done [#allocation9], 96
    $region45: #{tpu_custom_call.1} parent=1 // pred_fallthru
      _
    %v104 = vld [vmem:[#allocation2] sm:$0xff]
    %v105 = vld [vmem:[#allocation2 + $0x8] sm:$0xff]
    %v106 = vld [vmem:[#allocation2 + $0x10] sm:$0xff]
    %v107 = vld [vmem:[#allocation2 + $0x18] sm:$0xff]
    %v108 = vld [vmem:[#allocation2 + $0x20] sm:$0xff]
    %v109 = vld [vmem:[#allocation2 + $0x28] sm:$0xff]
    %v110 = vld [vmem:[#allocation2 + $0x30] sm:$0xff]
    %v111 = vld [vmem:[#allocation2 + $0x38] sm:$0xff]
    %v112 = vld [vmem:[#allocation2 + $0x40] sm:$0xff]
    %v113 = vld [vmem:[#allocation2 + $0x48] sm:$0xff]
    %v114 = vld [vmem:[#allocation2 + $0x50] sm:$0xff]
    %v115 = vld [vmem:[#allocation2 + $0x58] sm:$0xff]
    %v116 = vld [vmem:[#allocation2 + $0x60] sm:$0xff]
    %v117 = vld [vmem:[#allocation2 + $0x68] sm:$0xff]
    %v118 = vld [vmem:[#allocation2 + $0x70] sm:$0xff]
    %v119 = vld [vmem:[#allocation2 + $0x78] sm:$0xff]
    %v120 = vpack.c.bf16 %v106, %v104
    %v121 = vpack.c.bf16 %v107, %v105
    %v122 = vpack.c.bf16 %v110, %v108
    %v123 = vpack.c.bf16 %v111, %v109
    %v124 = vpack.c.bf16 %v114, %v112
    %v125 = vpack.c.bf16 %v115, %v113
    %v126 = vpack.c.bf16 %v118, %v116
    %v127 = vpack.c.bf16 %v119, %v117
    %v128 = vld [vmem:[#allocation5] sm:$0xff]
    %v129 = vld [vmem:[#allocation5 + $0x8] sm:$0xff]
    %v130 = vld [vmem:[#allocation5 + $0x10] sm:$0xff]
    %v131 = vld [vmem:[#allocation5 + $0x18] sm:$0xff]
    %v132 = vld [vmem:[#allocation5 + $0x20] sm:$0xff]
    %v133 = vld [vmem:[#allocation5 + $0x28] sm:$0xff]
    %v134 = vld [vmem:[#allocation5 + $0x30] sm:$0xff]
    %v135 = vld [vmem:[#allocation5 + $0x38] sm:$0xff]
    %v136 = vld [vmem:[#allocation5 + $0x40] sm:$0xff]
    %v137 = vld [vmem:[#allocation5 + $0x48] sm:$0xff]
    %v138 = vld [vmem:[#allocation5 + $0x50] sm:$0xff]
    %v139 = vld [vmem:[#allocation5 + $0x58] sm:$0xff]
    %v140 = vld [vmem:[#allocation5 + $0x60] sm:$0xff]
    %v141 = vld [vmem:[#allocation5 + $0x68] sm:$0xff]
    %v142 = vld [vmem:[#allocation5 + $0x70] sm:$0xff]
    %v143 = vld [vmem:[#allocation5 + $0x78] sm:$0xff]
    %v144 = vld [vmem:[#allocation5 + $0x80] sm:$0xff]
    %v145 = vld [vmem:[#allocation5 + $0x88] sm:$0xff]
    %v146 = vld [vmem:[#allocation5 + $0x90] sm:$0xff]
    %v147 = vld [vmem:[#allocation5 + $0x98] sm:$0xff]
    %v148 = vld [vmem:[#allocation5 + $0xa0] sm:$0xff]
    %v149 = vld [vmem:[#allocation5 + $0xa8] sm:$0xff]
    %v150 = vld [vmem:[#allocation5 + $0xb0] sm:$0xff]
    %v151 = vld [vmem:[#allocation5 + $0xb8] sm:$0xff]
    %v152 = vld [vmem:[#allocation5 + $0xc0] sm:$0xff]
    %v153 = vld [vmem:[#allocation5 + $0xc8] sm:$0xff]
    %v154 = vld [vmem:[#allocation5 + $0xd0] sm:$0xff]
    %v155 = vld [vmem:[#allocation5 + $0xd8] sm:$0xff]
    %v156 = vld [vmem:[#allocation5 + $0xe0] sm:$0xff]
    %v157 = vld [vmem:[#allocation5 + $0xe8] sm:$0xff]
    %v158 = vld [vmem:[#allocation5 + $0xf0] sm:$0xff]
    %v159 = vld [vmem:[#allocation5 + $0xf8] sm:$0xff]
    %v160 = vpack.c.bf16 %v130, %v128
    %v161 = vpack.c.bf16 %v131, %v129
    %v162 = vpack.c.bf16 %v134, %v132
    %v163 = vpack.c.bf16 %v135, %v133
    %v164 = vpack.c.bf16 %v138, %v136
    %v165 = vpack.c.bf16 %v139, %v137
    %v166 = vpack.c.bf16 %v142, %v140
    %v167 = vpack.c.bf16 %v143, %v141
    %v168 = vpack.c.bf16 %v146, %v144
    %v169 = vpack.c.bf16 %v147, %v145
    %v170 = vpack.c.bf16 %v150, %v148
    %v171 = vpack.c.bf16 %v151, %v149
    %v172 = vpack.c.bf16 %v154, %v152
    %v173 = vpack.c.bf16 %v155, %v153
    %v174 = vpack.c.bf16 %v158, %v156
    %v175 = vpack.c.bf16 %v159, %v157
    %v176 = vld [vmem:[#allocation7] sm:$0xff]
    %v177 = vld [vmem:[#allocation7 + $0x8] sm:$0xff]
    %v178 = vld [vmem:[#allocation7 + $0x10] sm:$0xff]
    %v179 = vld [vmem:[#allocation7 + $0x18] sm:$0xff]
    %v180 = vld [vmem:[#allocation7 + $0x20] sm:$0xff]
    %v181 = vld [vmem:[#allocation7 + $0x28] sm:$0xff]
    %v182 = vld [vmem:[#allocation7 + $0x30] sm:$0xff]
    %v183 = vld [vmem:[#allocation7 + $0x38] sm:$0xff]
    %v184 = vld [vmem:[#allocation7 + $0x40] sm:$0xff]
    %v185 = vld [vmem:[#allocation7 + $0x48] sm:$0xff]
    %v186 = vld [vmem:[#allocation7 + $0x50] sm:$0xff]
    %v187 = vld [vmem:[#allocation7 + $0x58] sm:$0xff]
    %v188 = vld [vmem:[#allocation7 + $0x60] sm:$0xff]
    %v189 = vld [vmem:[#allocation7 + $0x68] sm:$0xff]
    %v190 = vld [vmem:[#allocation7 + $0x70] sm:$0xff]
    %v191 = vld [vmem:[#allocation7 + $0x78] sm:$0xff]
    %v192 = vld [vmem:[#allocation7 + $0x80] sm:$0xff]
    %v193 = vld [vmem:[#allocation7 + $0x88] sm:$0xff]
    %v194 = vld [vmem:[#allocation7 + $0x90] sm:$0xff]
    %v195 = vld [vmem:[#allocation7 + $0x98] sm:$0xff]
    %v196 = vld [vmem:[#allocation7 + $0xa0] sm:$0xff]
    %v197 = vld [vmem:[#allocation7 + $0xa8] sm:$0xff]
    %v198 = vld [vmem:[#allocation7 + $0xb0] sm:$0xff]
    %v199 = vld [vmem:[#allocation7 + $0xb8] sm:$0xff]
    %v200 = vld [vmem:[#allocation7 + $0xc0] sm:$0xff]
    %v201 = vld [vmem:[#allocation7 + $0xc8] sm:$0xff]
    %v202 = vld [vmem:[#allocation7 + $0xd0] sm:$0xff]
    %v203 = vld [vmem:[#allocation7 + $0xd8] sm:$0xff]
    %v204 = vld [vmem:[#allocation7 + $0xe0] sm:$0xff]
    %v205 = vld [vmem:[#allocation7 + $0xe8] sm:$0xff]
    %v206 = vld [vmem:[#allocation7 + $0xf0] sm:$0xff]
    %v207 = vld [vmem:[#allocation7 + $0xf8] sm:$0xff]
    %v208 = vld [vmem:[%s3] sm:$0x3]
    %v210 = vperm.slane %v208, 0
    %v211 = vperm.slane %v208, 1
    %v246 = vunpack.c.l.b16 %v176
    %v247 = vunpack.c.h.b16 %v176
    %v248 = vunpack.c.l.b16 %v177
    %v249 = vunpack.c.h.b16 %v177
    %v250 = vunpack.c.l.b16 %v178
    %v251 = vunpack.c.h.b16 %v178
    %v252 = vunpack.c.l.b16 %v179
    %v253 = vunpack.c.h.b16 %v179
    %v254 = vunpack.c.l.b16 %v180
    %v255 = vunpack.c.h.b16 %v180
    %v256 = vunpack.c.l.b16 %v181
    %v257 = vunpack.c.h.b16 %v181
    %v258 = vunpack.c.l.b16 %v182
    %v259 = vunpack.c.h.b16 %v182
    %v260 = vunpack.c.l.b16 %v183
    %v261 = vunpack.c.h.b16 %v183
    %v262 = vunpack.c.l.b16 %v184
    %v263 = vunpack.c.h.b16 %v184
    %v264 = vunpack.c.l.b16 %v185
    %v265 = vunpack.c.h.b16 %v185
    %v266 = vunpack.c.l.b16 %v186
    %v267 = vunpack.c.h.b16 %v186
    %v268 = vunpack.c.l.b16 %v187
    %v269 = vunpack.c.h.b16 %v187
    %v270 = vunpack.c.l.b16 %v188
    %v271 = vunpack.c.h.b16 %v188
    %v272 = vunpack.c.l.b16 %v189
    %v273 = vunpack.c.h.b16 %v189
    %v274 = vunpack.c.l.b16 %v190
    %v275 = vunpack.c.h.b16 %v190
    %v276 = vunpack.c.l.b16 %v191
    %v277 = vunpack.c.h.b16 %v191
    %v278 = vunpack.c.l.b16 %v192
    %v279 = vunpack.c.h.b16 %v192
    %v280 = vunpack.c.l.b16 %v193
    %v281 = vunpack.c.h.b16 %v193
    %v282 = vunpack.c.l.b16 %v194
    %v283 = vunpack.c.h.b16 %v194
    %v284 = vunpack.c.l.b16 %v195
    %v285 = vunpack.c.h.b16 %v195
    %v286 = vunpack.c.l.b16 %v196
    %v287 = vunpack.c.h.b16 %v196
    %v288 = vunpack.c.l.b16 %v197
    %v289 = vunpack.c.h.b16 %v197
    %v290 = vunpack.c.l.b16 %v198
    %v291 = vunpack.c.h.b16 %v198
    %v292 = vunpack.c.l.b16 %v199
    %v293 = vunpack.c.h.b16 %v199
    %v294 = vunpack.c.l.b16 %v200
    %v295 = vunpack.c.h.b16 %v200
    %v296 = vunpack.c.l.b16 %v201
    %v297 = vunpack.c.h.b16 %v201
    %v298 = vunpack.c.l.b16 %v202
    %v299 = vunpack.c.h.b16 %v202
    %v300 = vunpack.c.l.b16 %v203
    %v301 = vunpack.c.h.b16 %v203
    %v302 = vunpack.c.l.b16 %v204
    %v303 = vunpack.c.h.b16 %v204
    %v304 = vunpack.c.l.b16 %v205
    %v305 = vunpack.c.h.b16 %v205
    %v306 = vunpack.c.l.b16 %v206
    %v307 = vunpack.c.h.b16 %v206
    %v308 = vunpack.c.l.b16 %v207
    %v309 = vunpack.c.h.b16 %v207
    %v310 = vpack.c.b16 %v248, %v246
    %v311 = vpack.c.b16 %v249, %v247
    %v312 = vpack.c.b16 %v252, %v250
    %v313 = vpack.c.b16 %v253, %v251
    %v314 = vpack.c.b16 %v256, %v254
    %v315 = vpack.c.b16 %v257, %v255
    %v316 = vpack.c.b16 %v260, %v258
    %v317 = vpack.c.b16 %v261, %v259
    %v318 = vpack.c.b16 %v264, %v262
    %v319 = vpack.c.b16 %v265, %v263
    %v320 = vpack.c.b16 %v268, %v266
    %v321 = vpack.c.b16 %v269, %v267
    %v322 = vpack.c.b16 %v272, %v270
    %v323 = vpack.c.b16 %v273, %v271
    %v324 = vpack.c.b16 %v276, %v274
    %v325 = vpack.c.b16 %v277, %v275
    %v326 = vpack.c.b16 %v280, %v278
    %v327 = vpack.c.b16 %v281, %v279
    %v328 = vpack.c.b16 %v284, %v282
    %v329 = vpack.c.b16 %v285, %v283
    %v330 = vpack.c.b16 %v288, %v286
    %v331 = vpack.c.b16 %v289, %v287
    %v332 = vpack.c.b16 %v292, %v290
    %v333 = vpack.c.b16 %v293, %v291
    %v334 = vpack.c.b16 %v296, %v294
    %v335 = vpack.c.b16 %v297, %v295
    %v336 = vpack.c.b16 %v300, %v298
    %v337 = vpack.c.b16 %v301, %v299
    %v338 = vpack.c.b16 %v304, %v302
    %v339 = vpack.c.b16 %v305, %v303
    %v340 = vpack.c.b16 %v308, %v306
    %v341 = vpack.c.b16 %v309, %v307
    %374 = vmatpush.bf16.msra.mxu0 %v324
    %375 = vmatpush.bf16.msra.mxu0 %v322
    %376 = vmatpush.bf16.msra.mxu0 %v320
    %377 = vmatpush.bf16.msra.mxu0 %v318
    %378 = vmatpush.bf16.msra.mxu0 %v316
    %379 = vmatpush.bf16.msra.mxu0 %v314
    %380 = vmatpush.bf16.msra.mxu0 %v312
    %381 = vmatpush.bf16.msra.mxu0 %v310
    %382 = vmatmul.bf16.gmra.mxu0 %v120
    %v383 = vpop.f32.mrf.mxu0
    %v384 = vadd.f32 %v210, %v383
    %v385 = vpop.f32.mrf.mxu0
    %v386 = vadd.f32 %v210, %v385
    %387 = vmatmul.bf16.gmra.mxu0 %v122
    %v388 = vpop.f32.mrf.mxu0
    %v389 = vadd.f32 %v210, %v388
    %v390 = vpop.f32.mrf.mxu0
    %v391 = vadd.f32 %v210, %v390
    %392 = vmatmul.bf16.gmra.mxu0 %v124
    %v393 = vpop.f32.mrf.mxu0
    %v394 = vadd.f32 %v210, %v393
    %v395 = vpop.f32.mrf.mxu0
    %v396 = vadd.f32 %v210, %v395
    %397 = vmatmul.bf16.gmra.mxu0 %v126
    %v398 = vpop.f32.mrf.mxu0
    %v399 = vadd.f32 %v210, %v398
    %v400 = vpop.f32.mrf.mxu0
    %v401 = vadd.f32 %v210, %v400
    %402 = vdwg.mxu0
    %403 = vmatpush.bf16.msra.mxu0 %v340
    %404 = vmatpush.bf16.msra.mxu0 %v338
    %405 = vmatpush.bf16.msra.mxu0 %v336
    %406 = vmatpush.bf16.msra.mxu0 %v334
    %407 = vmatpush.bf16.msra.mxu0 %v332
    %408 = vmatpush.bf16.msra.mxu0 %v330
    %409 = vmatpush.bf16.msra.mxu0 %v328
    %410 = vmatpush.bf16.msra.mxu0 %v326
    %411 = vmatmul.bf16.gmra.mxu0 %v121
    %v412 = vpop.f32.mrf.mxu0
    %v413 = vadd.f32 %v384, %v412
    %v414 = vpop.f32.mrf.mxu0
    %v415 = vadd.f32 %v386, %v414
    %416 = vmatmul.bf16.gmra.mxu0 %v123
    %v417 = vpop.f32.mrf.mxu0
    %v418 = vadd.f32 %v389, %v417
    %v419 = vpop.f32.mrf.mxu0
    %v420 = vadd.f32 %v391, %v419
    %421 = vmatmul.bf16.gmra.mxu0 %v125
    %v422 = vpop.f32.mrf.mxu0
    %v423 = vadd.f32 %v394, %v422
    %v424 = vpop.f32.mrf.mxu0
    %v425 = vadd.f32 %v396, %v424
    %426 = vmatmul.bf16.gmra.mxu0 %v127
    %v427 = vpop.f32.mrf.mxu0
    %v428 = vadd.f32 %v399, %v427
    %v429 = vpop.f32.mrf.mxu0
    %v430 = vadd.f32 %v401, %v429
    %431 = vdwg.mxu0
    %432 = vmatpush.bf16.msra.mxu0 %v325
    %433 = vmatpush.bf16.msra.mxu0 %v323
    %434 = vmatpush.bf16.msra.mxu0 %v321
    %435 = vmatpush.bf16.msra.mxu0 %v319
    %436 = vmatpush.bf16.msra.mxu0 %v317
    %437 = vmatpush.bf16.msra.mxu0 %v315
    %438 = vmatpush.bf16.msra.mxu0 %v313
    %439 = vmatpush.bf16.msra.mxu0 %v311
    %440 = vmatmul.bf16.gmra.mxu0 %v120
    %v441 = vpop.f32.mrf.mxu0
    %v442 = vadd.f32 %v211, %v441
    %v443 = vpop.f32.mrf.mxu0
    %v444 = vadd.f32 %v211, %v443
    %445 = vmatmul.bf16.gmra.mxu0 %v122
    %v446 = vpop.f32.mrf.mxu0
    %v447 = vadd.f32 %v211, %v446
    %v448 = vpop.f32.mrf.mxu0
    %v449 = vadd.f32 %v211, %v448
    %450 = vmatmul.bf16.gmra.mxu0 %v124
    %v451 = vpop.f32.mrf.mxu0
    %v452 = vadd.f32 %v211, %v451
    %v453 = vpop.f32.mrf.mxu0
    %v454 = vadd.f32 %v211, %v453
    %455 = vmatmul.bf16.gmra.mxu0 %v126
    %v456 = vpop.f32.mrf.mxu0
    %v457 = vadd.f32 %v211, %v456
    %v458 = vpop.f32.mrf.mxu0
    %v459 = vadd.f32 %v211, %v458
    %460 = vdwg.mxu0
    %461 = vmatpush.bf16.msra.mxu0 %v341
    %462 = vmatpush.bf16.msra.mxu0 %v339
    %463 = vmatpush.bf16.msra.mxu0 %v337
    %464 = vmatpush.bf16.msra.mxu0 %v335
    %465 = vmatpush.bf16.msra.mxu0 %v333
    %466 = vmatpush.bf16.msra.mxu0 %v331
    %467 = vmatpush.bf16.msra.mxu0 %v329
    %468 = vmatpush.bf16.msra.mxu0 %v327
    %469 = vmatmul.bf16.gmra.mxu0 %v121
    %v470 = vpop.f32.mrf.mxu0
    %v471 = vadd.f32 %v442, %v470
    %v472 = vpop.f32.mrf.mxu0
    %v473 = vadd.f32 %v444, %v472
    %474 = vmatmul.bf16.gmra.mxu0 %v123
    %v475 = vpop.f32.mrf.mxu0
    %v476 = vadd.f32 %v447, %v475
    %v477 = vpop.f32.mrf.mxu0
    %v478 = vadd.f32 %v449, %v477
    %479 = vmatmul.bf16.gmra.mxu0 %v125
    %v480 = vpop.f32.mrf.mxu0
    %v481 = vadd.f32 %v452, %v480
    %v482 = vpop.f32.mrf.mxu0
    %v483 = vadd.f32 %v454, %v482
    %484 = vmatmul.bf16.gmra.mxu0 %v127
    %v485 = vpop.f32.mrf.mxu0
    %v486 = vadd.f32 %v457, %v485
    %v487 = vpop.f32.mrf.mxu0
    %v488 = vadd.f32 %v459, %v487
    %489 = vdwg.mxu0
    %490 = vst [vmem:[#allocation11] sm:$0xff] %v413
    %491 = vst [vmem:[#allocation11 + $0x8] sm:$0xff] %v471
    %492 = vst [vmem:[#allocation11 + $0x10] sm:$0xff] %v415
    %493 = vst [vmem:[#allocation11 + $0x18] sm:$0xff] %v473
    %494 = vst [vmem:[#allocation11 + $0x20] sm:$0xff] %v418
    %495 = vst [vmem:[#allocation11 + $0x28] sm:$0xff] %v476
    %496 = vst [vmem:[#allocation11 + $0x30] sm:$0xff] %v420
    %497 = vst [vmem:[#allocation11 + $0x38] sm:$0xff] %v478
    %498 = vst [vmem:[#allocation11 + $0x40] sm:$0xff] %v423
    %499 = vst [vmem:[#allocation11 + $0x48] sm:$0xff] %v481
    %500 = vst [vmem:[#allocation11 + $0x50] sm:$0xff] %v425
    %501 = vst [vmem:[#allocation11 + $0x58] sm:$0xff] %v483
    %502 = vst [vmem:[#allocation11 + $0x60] sm:$0xff] %v428
    %503 = vst [vmem:[#allocation11 + $0x68] sm:$0xff] %v486
    %504 = vst [vmem:[#allocation11 + $0x70] sm:$0xff] %v430
    %505 = vst [vmem:[#allocation11 + $0x78] sm:$0xff] %v488
    %v506 = vld [vmem:[#allocation8] sm:$0xff]
    %v507 = vld [vmem:[#allocation8 + $0x8] sm:$0xff]
    %v508 = vld [vmem:[#allocation8 + $0x10] sm:$0xff]
    %v509 = vld [vmem:[#allocation8 + $0x18] sm:$0xff]
    %v510 = vld [vmem:[#allocation8 + $0x20] sm:$0xff]
    %v511 = vld [vmem:[#allocation8 + $0x28] sm:$0xff]
    %v512 = vld [vmem:[#allocation8 + $0x30] sm:$0xff]
    %v513 = vld [vmem:[#allocation8 + $0x38] sm:$0xff]
    %v514 = vld [vmem:[#allocation8 + $0x40] sm:$0xff]
    %v515 = vld [vmem:[#allocation8 + $0x48] sm:$0xff]
    %v516 = vld [vmem:[#allocation8 + $0x50] sm:$0xff]
    %v517 = vld [vmem:[#allocation8 + $0x58] sm:$0xff]
    %v518 = vld [vmem:[#allocation8 + $0x60] sm:$0xff]
    %v519 = vld [vmem:[#allocation8 + $0x68] sm:$0xff]
    %v520 = vld [vmem:[#allocation8 + $0x70] sm:$0xff]
    %v521 = vld [vmem:[#allocation8 + $0x78] sm:$0xff]
    %v522 = vld [vmem:[#allocation8 + $0x80] sm:$0xff]
    %v523 = vld [vmem:[#allocation8 + $0x88] sm:$0xff]
    %v524 = vld [vmem:[#allocation8 + $0x90] sm:$0xff]
    %v525 = vld [vmem:[#allocation8 + $0x98] sm:$0xff]
    %v526 = vld [vmem:[#allocation8 + $0xa0] sm:$0xff]
    %v527 = vld [vmem:[#allocation8 + $0xa8] sm:$0xff]
    %v528 = vld [vmem:[#allocation8 + $0xb0] sm:$0xff]
    %v529 = vld [vmem:[#allocation8 + $0xb8] sm:$0xff]
    %v530 = vld [vmem:[#allocation8 + $0xc0] sm:$0xff]
    %v531 = vld [vmem:[#allocation8 + $0xc8] sm:$0xff]
    %v532 = vld [vmem:[#allocation8 + $0xd0] sm:$0xff]
    %v533 = vld [vmem:[#allocation8 + $0xd8] sm:$0xff]
    %v534 = vld [vmem:[#allocation8 + $0xe0] sm:$0xff]
    %v535 = vld [vmem:[#allocation8 + $0xe8] sm:$0xff]
    %v536 = vld [vmem:[#allocation8 + $0xf0] sm:$0xff]
    %v537 = vld [vmem:[#allocation8 + $0xf8] sm:$0xff]
    %v538 = vld [vmem:[#allocation8 + $0x100] sm:$0xff]
    %v539 = vld [vmem:[#allocation8 + $0x108] sm:$0xff]
    %v540 = vld [vmem:[#allocation8 + $0x110] sm:$0xff]
    %v541 = vld [vmem:[#allocation8 + $0x118] sm:$0xff]
    %v542 = vld [vmem:[#allocation8 + $0x120] sm:$0xff]
    %v543 = vld [vmem:[#allocation8 + $0x128] sm:$0xff]
    %v544 = vld [vmem:[#allocation8 + $0x130] sm:$0xff]
    %v545 = vld [vmem:[#allocation8 + $0x138] sm:$0xff]
    %v546 = vld [vmem:[#allocation8 + $0x140] sm:$0xff]
    %v547 = vld [vmem:[#allocation8 + $0x148] sm:$0xff]
    %v548 = vld [vmem:[#allocation8 + $0x150] sm:$0xff]
    %v549 = vld [vmem:[#allocation8 + $0x158] sm:$0xff]
    %v550 = vld [vmem:[#allocation8 + $0x160] sm:$0xff]
    %v551 = vld [vmem:[#allocation8 + $0x168] sm:$0xff]
    %v552 = vld [vmem:[#allocation8 + $0x170] sm:$0xff]
    %v553 = vld [vmem:[#allocation8 + $0x178] sm:$0xff]
    %v554 = vld [vmem:[#allocation8 + $0x180] sm:$0xff]
    %v555 = vld [vmem:[#allocation8 + $0x188] sm:$0xff]
    %v556 = vld [vmem:[#allocation8 + $0x190] sm:$0xff]
    %v557 = vld [vmem:[#allocation8 + $0x198] sm:$0xff]
    %v558 = vld [vmem:[#allocation8 + $0x1a0] sm:$0xff]
    %v559 = vld [vmem:[#allocation8 + $0x1a8] sm:$0xff]
    %v560 = vld [vmem:[#allocation8 + $0x1b0] sm:$0xff]
    %v561 = vld [vmem:[#allocation8 + $0x1b8] sm:$0xff]
    %v562 = vld [vmem:[#allocation8 + $0x1c0] sm:$0xff]
    %v563 = vld [vmem:[#allocation8 + $0x1c8] sm:$0xff]
    %v564 = vld [vmem:[#allocation8 + $0x1d0] sm:$0xff]
    %v565 = vld [vmem:[#allocation8 + $0x1d8] sm:$0xff]
    %v566 = vld [vmem:[#allocation8 + $0x1e0] sm:$0xff]
    %v567 = vld [vmem:[#allocation8 + $0x1e8] sm:$0xff]
    %v568 = vld [vmem:[#allocation8 + $0x1f0] sm:$0xff]
    %v569 = vld [vmem:[#allocation8 + $0x1f8] sm:$0xff]
    %v570 = vld [vmem:[#allocation8 + $0x200] sm:$0xff]
    %v571 = vld [vmem:[#allocation8 + $0x208] sm:$0xff]
    %v572 = vld [vmem:[#allocation8 + $0x210] sm:$0xff]
    %v573 = vld [vmem:[#allocation8 + $0x218] sm:$0xff]
    %v574 = vld [vmem:[#allocation8 + $0x220] sm:$0xff]
    %v575 = vld [vmem:[#allocation8 + $0x228] sm:$0xff]
    %v576 = vld [vmem:[#allocation8 + $0x230] sm:$0xff]
    %v577 = vld [vmem:[#allocation8 + $0x238] sm:$0xff]
    %v578 = vld [vmem:[#allocation8 + $0x240] sm:$0xff]
    %v579 = vld [vmem:[#allocation8 + $0x248] sm:$0xff]
    %v580 = vld [vmem:[#allocation8 + $0x250] sm:$0xff]
    %v581 = vld [vmem:[#allocation8 + $0x258] sm:$0xff]
    %v582 = vld [vmem:[#allocation8 + $0x260] sm:$0xff]
    %v583 = vld [vmem:[#allocation8 + $0x268] sm:$0xff]
    %v584 = vld [vmem:[#allocation8 + $0x270] sm:$0xff]
    %v585 = vld [vmem:[#allocation8 + $0x278] sm:$0xff]
    %v586 = vld [vmem:[#allocation8 + $0x280] sm:$0xff]
    %v587 = vld [vmem:[#allocation8 + $0x288] sm:$0xff]
    %v588 = vld [vmem:[#allocation8 + $0x290] sm:$0xff]
    %v589 = vld [vmem:[#allocation8 + $0x298] sm:$0xff]
    %v590 = vld [vmem:[#allocation8 + $0x2a0] sm:$0xff]
    %v591 = vld [vmem:[#allocation8 + $0x2a8] sm:$0xff]
    %v592 = vld [vmem:[#allocation8 + $0x2b0] sm:$0xff]
    %v593 = vld [vmem:[#allocation8 + $0x2b8] sm:$0xff]
    %v594 = vld [vmem:[#allocation8 + $0x2c0] sm:$0xff]
    %v595 = vld [vmem:[#allocation8 + $0x2c8] sm:$0xff]
    %v596 = vld [vmem:[#allocation8 + $0x2d0] sm:$0xff]
    %v597 = vld [vmem:[#allocation8 + $0x2d8] sm:$0xff]
    %v598 = vld [vmem:[#allocation8 + $0x2e0] sm:$0xff]
    %v599 = vld [vmem:[#allocation8 + $0x2e8] sm:$0xff]
    %v600 = vld [vmem:[#allocation8 + $0x2f0] sm:$0xff]
    %v601 = vld [vmem:[#allocation8 + $0x2f8] sm:$0xff]
    %v602 = vld [vmem:[#allocation10] sm:$0x3f]
    %v604 = vperm.slane %v602, 0
    %v605 = vperm.slane %v602, 1
    %v606 = vperm.slane %v602, 2
    %v607 = vperm.slane %v602, 3
    %v608 = vperm.slane %v602, 4
    %v609 = vperm.slane %v602, 5
    %v712 = vunpack.c.l.b16 %v506
    %v713 = vunpack.c.h.b16 %v506
    %v714 = vunpack.c.l.b16 %v507
    %v715 = vunpack.c.h.b16 %v507
    %v716 = vunpack.c.l.b16 %v508
    %v717 = vunpack.c.h.b16 %v508
    %v718 = vunpack.c.l.b16 %v509
    %v719 = vunpack.c.h.b16 %v509
    %v720 = vunpack.c.l.b16 %v510
    %v721 = vunpack.c.h.b16 %v510
    %v722 = vunpack.c.l.b16 %v511
    %v723 = vunpack.c.h.b16 %v511
    %v724 = vunpack.c.l.b16 %v512
    %v725 = vunpack.c.h.b16 %v512
    %v726 = vunpack.c.l.b16 %v513
    %v727 = vunpack.c.h.b16 %v513
    %v728 = vunpack.c.l.b16 %v514
    %v729 = vunpack.c.h.b16 %v514
    %v730 = vunpack.c.l.b16 %v515
    %v731 = vunpack.c.h.b16 %v515
    %v732 = vunpack.c.l.b16 %v516
    %v733 = vunpack.c.h.b16 %v516
    %v734 = vunpack.c.l.b16 %v517
    %v735 = vunpack.c.h.b16 %v517
    %v736 = vunpack.c.l.b16 %v518
    %v737 = vunpack.c.h.b16 %v518
    %v738 = vunpack.c.l.b16 %v519
    %v739 = vunpack.c.h.b16 %v519
    %v740 = vunpack.c.l.b16 %v520
    %v741 = vunpack.c.h.b16 %v520
    %v742 = vunpack.c.l.b16 %v521
    %v743 = vunpack.c.h.b16 %v521
    %v744 = vunpack.c.l.b16 %v522
    %v745 = vunpack.c.h.b16 %v522
    %v746 = vunpack.c.l.b16 %v523
    %v747 = vunpack.c.h.b16 %v523
    %v748 = vunpack.c.l.b16 %v524
    %v749 = vunpack.c.h.b16 %v524
    %v750 = vunpack.c.l.b16 %v525
    %v751 = vunpack.c.h.b16 %v525
    %v752 = vunpack.c.l.b16 %v526
    %v753 = vunpack.c.h.b16 %v526
    %v754 = vunpack.c.l.b16 %v527
    %v755 = vunpack.c.h.b16 %v527
    %v756 = vunpack.c.l.b16 %v528
    %v757 = vunpack.c.h.b16 %v528
    %v758 = vunpack.c.l.b16 %v529
    %v759 = vunpack.c.h.b16 %v529
    %v760 = vunpack.c.l.b16 %v530
    %v761 = vunpack.c.h.b16 %v530
    %v762 = vunpack.c.l.b16 %v531
    %v763 = vunpack.c.h.b16 %v531
    %v764 = vunpack.c.l.b16 %v532
    %v765 = vunpack.c.h.b16 %v532
    %v766 = vunpack.c.l.b16 %v533
    %v767 = vunpack.c.h.b16 %v533
    %v768 = vunpack.c.l.b16 %v534
    %v769 = vunpack.c.h.b16 %v534
    %v770 = vunpack.c.l.b16 %v535
    %v771 = vunpack.c.h.b16 %v535
    %v772 = vunpack.c.l.b16 %v536
    %v773 = vunpack.c.h.b16 %v536
    %v774 = vunpack.c.l.b16 %v537
    %v775 = vunpack.c.h.b16 %v537
    %v776 = vunpack.c.l.b16 %v538
    %v777 = vunpack.c.h.b16 %v538
    %v778 = vunpack.c.l.b16 %v539
    %v779 = vunpack.c.h.b16 %v539
    %v780 = vunpack.c.l.b16 %v540
    %v781 = vunpack.c.h.b16 %v540
    %v782 = vunpack.c.l.b16 %v541
    %v783 = vunpack.c.h.b16 %v541
    %v784 = vunpack.c.l.b16 %v542
    %v785 = vunpack.c.h.b16 %v542
    %v786 = vunpack.c.l.b16 %v543
    %v787 = vunpack.c.h.b16 %v543
    %v788 = vunpack.c.l.b16 %v544
    %v789 = vunpack.c.h.b16 %v544
    %v790 = vunpack.c.l.b16 %v545
    %v791 = vunpack.c.h.b16 %v545
    %v792 = vunpack.c.l.b16 %v546
    %v793 = vunpack.c.h.b16 %v546
    %v794 = vunpack.c.l.b16 %v547
    %v795 = vunpack.c.h.b16 %v547
    %v796 = vunpack.c.l.b16 %v548
    %v797 = vunpack.c.h.b16 %v548
    %v798 = vunpack.c.l.b16 %v549
    %v799 = vunpack.c.h.b16 %v549
    %v800 = vunpack.c.l.b16 %v550
    %v801 = vunpack.c.h.b16 %v550
    %v802 = vunpack.c.l.b16 %v551
    %v803 = vunpack.c.h.b16 %v551
    %v804 = vunpack.c.l.b16 %v552
    %v805 = vunpack.c.h.b16 %v552
    %v806 = vunpack.c.l.b16 %v553
    %v807 = vunpack.c.h.b16 %v553
    %v808 = vunpack.c.l.b16 %v554
    %v809 = vunpack.c.h.b16 %v554
    %v810 = vunpack.c.l.b16 %v555
    %v811 = vunpack.c.h.b16 %v555
    %v812 = vunpack.c.l.b16 %v556
    %v813 = vunpack.c.h.b16 %v556
    %v814 = vunpack.c.l.b16 %v557
    %v815 = vunpack.c.h.b16 %v557
    %v816 = vunpack.c.l.b16 %v558
    %v817 = vunpack.c.h.b16 %v558
    %v818 = vunpack.c.l.b16 %v559
    %v819 = vunpack.c.h.b16 %v559
    %v820 = vunpack.c.l.b16 %v560
    %v821 = vunpack.c.h.b16 %v560
    %v822 = vunpack.c.l.b16 %v561
    %v823 = vunpack.c.h.b16 %v561
    %v824 = vunpack.c.l.b16 %v562
    %v825 = vunpack.c.h.b16 %v562
    %v826 = vunpack.c.l.b16 %v563
    %v827 = vunpack.c.h.b16 %v563
    %v828 = vunpack.c.l.b16 %v564
    %v829 = vunpack.c.h.b16 %v564
    %v830 = vunpack.c.l.b16 %v565
    %v831 = vunpack.c.h.b16 %v565
    %v832 = vunpack.c.l.b16 %v566
    %v833 = vunpack.c.h.b16 %v566
    %v834 = vunpack.c.l.b16 %v567
    %v835 = vunpack.c.h.b16 %v567
    %v836 = vunpack.c.l.b16 %v568
    %v837 = vunpack.c.h.b16 %v568
    %v838 = vunpack.c.l.b16 %v569
    %v839 = vunpack.c.h.b16 %v569
    %v840 = vunpack.c.l.b16 %v570
    %v841 = vunpack.c.h.b16 %v570
    %v842 = vunpack.c.l.b16 %v571
    %v843 = vunpack.c.h.b16 %v571
    %v844 = vunpack.c.l.b16 %v572
    %v845 = vunpack.c.h.b16 %v572
    %v846 = vunpack.c.l.b16 %v573
    %v847 = vunpack.c.h.b16 %v573
    %v848 = vunpack.c.l.b16 %v574
    %v849 = vunpack.c.h.b16 %v574
    %v850 = vunpack.c.l.b16 %v575
    %v851 = vunpack.c.h.b16 %v575
    %v852 = vunpack.c.l.b16 %v576
    %v853 = vunpack.c.h.b16 %v576
    %v854 = vunpack.c.l.b16 %v577
    %v855 = vunpack.c.h.b16 %v577
    %v856 = vunpack.c.l.b16 %v578
    %v857 = vunpack.c.h.b16 %v578
    %v858 = vunpack.c.l.b16 %v579
    %v859 = vunpack.c.h.b16 %v579
    %v860 = vunpack.c.l.b16 %v580
    %v861 = vunpack.c.h.b16 %v580
    %v862 = vunpack.c.l.b16 %v581
    %v863 = vunpack.c.h.b16 %v581
    %v864 = vunpack.c.l.b16 %v582
    %v865 = vunpack.c.h.b16 %v582
    %v866 = vunpack.c.l.b16 %v583
    %v867 = vunpack.c.h.b16 %v583
    %v868 = vunpack.c.l.b16 %v584
    %v869 = vunpack.c.h.b16 %v584
    %v870 = vunpack.c.l.b16 %v585
    %v871 = vunpack.c.h.b16 %v585
    %v872 = vunpack.c.l.b16 %v586
    %v873 = vunpack.c.h.b16 %v586
    %v874 = vunpack.c.l.b16 %v587
    %v875 = vunpack.c.h.b16 %v587
    %v876 = vunpack.c.l.b16 %v588
    %v877 = vunpack.c.h.b16 %v588
    %v878 = vunpack.c.l.b16 %v589
    %v879 = vunpack.c.h.b16 %v589
    %v880 = vunpack.c.l.b16 %v590
    %v881 = vunpack.c.h.b16 %v590
    %v882 = vunpack.c.l.b16 %v591
    %v883 = vunpack.c.h.b16 %v591
    %v884 = vunpack.c.l.b16 %v592
    %v885 = vunpack.c.h.b16 %v592
    %v886 = vunpack.c.l.b16 %v593
    %v887 = vunpack.c.h.b16 %v593
    %v888 = vunpack.c.l.b16 %v594
    %v889 = vunpack.c.h.b16 %v594
    %v890 = vunpack.c.l.b16 %v595
    %v891 = vunpack.c.h.b16 %v595
    %v892 = vunpack.c.l.b16 %v596
    %v893 = vunpack.c.h.b16 %v596
    %v894 = vunpack.c.l.b16 %v597
    %v895 = vunpack.c.h.b16 %v597
    %v896 = vunpack.c.l.b16 %v598
    %v897 = vunpack.c.h.b16 %v598
    %v898 = vunpack.c.l.b16 %v599
    %v899 = vunpack.c.h.b16 %v599
    %v900 = vunpack.c.l.b16 %v600
    %v901 = vunpack.c.h.b16 %v600
    %v902 = vunpack.c.l.b16 %v601
    %v903 = vunpack.c.h.b16 %v601
    %v904 = vpack.c.b16 %v718, %v712
    %v905 = vpack.c.b16 %v719, %v713
    %v906 = vpack.c.b16 %v720, %v714
    %v907 = vpack.c.b16 %v721, %v715
    %v908 = vpack.c.b16 %v722, %v716
    %v909 = vpack.c.b16 %v723, %v717
    %v910 = vpack.c.b16 %v730, %v724
    %v911 = vpack.c.b16 %v731, %v725
    %v912 = vpack.c.b16 %v732, %v726
    %v913 = vpack.c.b16 %v733, %v727
    %v914 = vpack.c.b16 %v734, %v728
    %v915 = vpack.c.b16 %v735, %v729
    %v916 = vpack.c.b16 %v742, %v736
    %v917 = vpack.c.b16 %v743, %v737
    %v918 = vpack.c.b16 %v744, %v738
    %v919 = vpack.c.b16 %v745, %v739
    %v920 = vpack.c.b16 %v746, %v740
    %v921 = vpack.c.b16 %v747, %v741
    %v922 = vpack.c.b16 %v754, %v748
    %v923 = vpack.c.b16 %v755, %v749
    %v924 = vpack.c.b16 %v756, %v750
    %v925 = vpack.c.b16 %v757, %v751
    %v926 = vpack.c.b16 %v758, %v752
    %v927 = vpack.c.b16 %v759, %v753
    %v928 = vpack.c.b16 %v766, %v760
    %v929 = vpack.c.b16 %v767, %v761
    %v930 = vpack.c.b16 %v768, %v762
    %v931 = vpack.c.b16 %v769, %v763
    %v932 = vpack.c.b16 %v770, %v764
    %v933 = vpack.c.b16 %v771, %v765
    %v934 = vpack.c.b16 %v778, %v772
    %v935 = vpack.c.b16 %v779, %v773
    %v936 = vpack.c.b16 %v780, %v774
    %v937 = vpack.c.b16 %v781, %v775
    %v938 = vpack.c.b16 %v782, %v776
    %v939 = vpack.c.b16 %v783, %v777
    %v940 = vpack.c.b16 %v790, %v784
    %v941 = vpack.c.b16 %v791, %v785
    %v942 = vpack.c.b16 %v792, %v786
    %v943 = vpack.c.b16 %v793, %v787
    %v944 = vpack.c.b16 %v794, %v788
    %v945 = vpack.c.b16 %v795, %v789
    %v946 = vpack.c.b16 %v802, %v796
    %v947 = vpack.c.b16 %v803, %v797
    %v948 = vpack.c.b16 %v804, %v798
    %v949 = vpack.c.b16 %v805, %v799
    %v950 = vpack.c.b16 %v806, %v800
    %v951 = vpack.c.b16 %v807, %v801
    %v952 = vpack.c.b16 %v814, %v808
    %v953 = vpack.c.b16 %v815, %v809
    %v954 = vpack.c.b16 %v816, %v810
    %v955 = vpack.c.b16 %v817, %v811
    %v956 = vpack.c.b16 %v818, %v812
    %v957 = vpack.c.b16 %v819, %v813
    %v958 = vpack.c.b16 %v826, %v820
    %v959 = vpack.c.b16 %v827, %v821
    %v960 = vpack.c.b16 %v828, %v822
    %v961 = vpack.c.b16 %v829, %v823
    %v962 = vpack.c.b16 %v830, %v824
    %v963 = vpack.c.b16 %v831, %v825
    %v964 = vpack.c.b16 %v838, %v832
    %v965 = vpack.c.b16 %v839, %v833
    %v966 = vpack.c.b16 %v840, %v834
    %v967 = vpack.c.b16 %v841, %v835
    %v968 = vpack.c.b16 %v842, %v836
    %v969 = vpack.c.b16 %v843, %v837
    %v970 = vpack.c.b16 %v850, %v844
    %v971 = vpack.c.b16 %v851, %v845
    %v972 = vpack.c.b16 %v852, %v846
    %v973 = vpack.c.b16 %v853, %v847
    %v974 = vpack.c.b16 %v854, %v848
    %v975 = vpack.c.b16 %v855, %v849
    %v976 = vpack.c.b16 %v862, %v856
    %v977 = vpack.c.b16 %v863, %v857
    %v978 = vpack.c.b16 %v864, %v858
    %v979 = vpack.c.b16 %v865, %v859
    %v980 = vpack.c.b16 %v866, %v860
    %v981 = vpack.c.b16 %v867, %v861
    %v982 = vpack.c.b16 %v874, %v868
    %v983 = vpack.c.b16 %v875, %v869
    %v984 = vpack.c.b16 %v876, %v870
    %v985 = vpack.c.b16 %v877, %v871
    %v986 = vpack.c.b16 %v878, %v872
    %v987 = vpack.c.b16 %v879, %v873
    %v988 = vpack.c.b16 %v886, %v880
    %v989 = vpack.c.b16 %v887, %v881
    %v990 = vpack.c.b16 %v888, %v882
    %v991 = vpack.c.b16 %v889, %v883
    %v992 = vpack.c.b16 %v890, %v884
    %v993 = vpack.c.b16 %v891, %v885
    %v994 = vpack.c.b16 %v898, %v892
    %v995 = vpack.c.b16 %v899, %v893
    %v996 = vpack.c.b16 %v900, %v894
    %v997 = vpack.c.b16 %v901, %v895
    %v998 = vpack.c.b16 %v902, %v896
    %v999 = vpack.c.b16 %v903, %v897
    %1096 = vmatpush.bf16.msra.mxu0 %v946
    %1097 = vmatpush.bf16.msra.mxu0 %v940
    %1098 = vmatpush.bf16.msra.mxu0 %v934
    %1099 = vmatpush.bf16.msra.mxu0 %v928
    %1100 = vmatpush.bf16.msra.mxu0 %v922
    %1101 = vmatpush.bf16.msra.mxu0 %v916
    %1102 = vmatpush.bf16.msra.mxu0 %v910
    %1103 = vmatpush.bf16.msra.mxu0 %v904
    %1104 = vmatmul.bf16.gmra.mxu0 %v160
    %v1105 = vpop.f32.mrf.mxu0
    %v1106 = vadd.f32 %v604, %v1105
    %v1107 = vpop.f32.mrf.mxu0
    %v1108 = vadd.f32 %v604, %v1107
    %1109 = vmatmul.bf16.gmra.mxu0 %v162
    %v1110 = vpop.f32.mrf.mxu0
    %v1111 = vadd.f32 %v604, %v1110
    %v1112 = vpop.f32.mrf.mxu0
    %v1113 = vadd.f32 %v604, %v1112
    %1114 = vmatmul.bf16.gmra.mxu0 %v164
    %v1115 = vpop.f32.mrf.mxu0
    %v1116 = vadd.f32 %v604, %v1115
    %v1117 = vpop.f32.mrf.mxu0
    %v1118 = vadd.f32 %v604, %v1117
    %1119 = vmatmul.bf16.gmra.mxu0 %v166
    %v1120 = vpop.f32.mrf.mxu0
    %v1121 = vadd.f32 %v604, %v1120
    %v1122 = vpop.f32.mrf.mxu0
    %v1123 = vadd.f32 %v604, %v1122
    %1124 = vmatmul.bf16.gmra.mxu0 %v168
    %v1125 = vpop.f32.mrf.mxu0
    %v1126 = vadd.f32 %v604, %v1125
    %v1127 = vpop.f32.mrf.mxu0
    %v1128 = vadd.f32 %v604, %v1127
    %1129 = vmatmul.bf16.gmra.mxu0 %v170
    %v1130 = vpop.f32.mrf.mxu0
    %v1131 = vadd.f32 %v604, %v1130
    %v1132 = vpop.f32.mrf.mxu0
    %v1133 = vadd.f32 %v604, %v1132
    %1134 = vmatmul.bf16.gmra.mxu0 %v172
    %v1135 = vpop.f32.mrf.mxu0
    %v1136 = vadd.f32 %v604, %v1135
    %v1137 = vpop.f32.mrf.mxu0
    %v1138 = vadd.f32 %v604, %v1137
    %1139 = vmatmul.bf16.gmra.mxu0 %v174
    %v1140 = vpop.f32.mrf.mxu0
    %v1141 = vadd.f32 %v604, %v1140
    %v1142 = vpop.f32.mrf.mxu0
    %v1143 = vadd.f32 %v604, %v1142
    %1144 = vdwg.mxu0
    %1145 = vmatpush.bf16.msra.mxu0 %v994
    %1146 = vmatpush.bf16.msra.mxu0 %v988
    %1147 = vmatpush.bf16.msra.mxu0 %v982
    %1148 = vmatpush.bf16.msra.mxu0 %v976
    %1149 = vmatpush.bf16.msra.mxu0 %v970
    %1150 = vmatpush.bf16.msra.mxu0 %v964
    %1151 = vmatpush.bf16.msra.mxu0 %v958
    %1152 = vmatpush.bf16.msra.mxu0 %v952
    %1153 = vmatmul.bf16.gmra.mxu0 %v161
    %v1154 = vpop.f32.mrf.mxu0
    %v1155 = vadd.f32 %v1106, %v1154
    %v1156 = vpop.f32.mrf.mxu0
    %v1157 = vadd.f32 %v1108, %v1156
    %1158 = vmatmul.bf16.gmra.mxu0 %v163
    %v1159 = vpop.f32.mrf.mxu0
    %v1160 = vadd.f32 %v1111, %v1159
    %v1161 = vpop.f32.mrf.mxu0
    %v1162 = vadd.f32 %v1113, %v1161
    %1163 = vmatmul.bf16.gmra.mxu0 %v165
    %v1164 = vpop.f32.mrf.mxu0
    %v1165 = vadd.f32 %v1116, %v1164
    %v1166 = vpop.f32.mrf.mxu0
    %v1167 = vadd.f32 %v1118, %v1166
    %1168 = vmatmul.bf16.gmra.mxu0 %v167
    %v1169 = vpop.f32.mrf.mxu0
    %v1170 = vadd.f32 %v1121, %v1169
    %v1171 = vpop.f32.mrf.mxu0
    %v1172 = vadd.f32 %v1123, %v1171
    %1173 = vmatmul.bf16.gmra.mxu0 %v169
    %v1174 = vpop.f32.mrf.mxu0
    %v1175 = vadd.f32 %v1126, %v1174
    %v1176 = vpop.f32.mrf.mxu0
    %v1177 = vadd.f32 %v1128, %v1176
    %1178 = vmatmul.bf16.gmra.mxu0 %v171
    %v1179 = vpop.f32.mrf.mxu0
    %v1180 = vadd.f32 %v1131, %v1179
    %v1181 = vpop.f32.mrf.mxu0
    %v1182 = vadd.f32 %v1133, %v1181
    %1183 = vmatmul.bf16.gmra.mxu0 %v173
    %v1184 = vpop.f32.mrf.mxu0
    %v1185 = vadd.f32 %v1136, %v1184
    %v1186 = vpop.f32.mrf.mxu0
    %v1187 = vadd.f32 %v1138, %v1186
    %1188 = vmatmul.bf16.gmra.mxu0 %v175
    %v1189 = vpop.f32.mrf.mxu0
    %v1190 = vadd.f32 %v1141, %v1189
    %v1191 = vpop.f32.mrf.mxu0
    %v1192 = vadd.f32 %v1143, %v1191
    %1193 = vdwg.mxu0
    %1194 = vmatpush.bf16.msra.mxu0 %v947
    %1195 = vmatpush.bf16.msra.mxu0 %v941
    %1196 = vmatpush.bf16.msra.mxu0 %v935
    %1197 = vmatpush.bf16.msra.mxu0 %v929
    %1198 = vmatpush.bf16.msra.mxu0 %v923
    %1199 = vmatpush.bf16.msra.mxu0 %v917
    %1200 = vmatpush.bf16.msra.mxu0 %v911
    %1201 = vmatpush.bf16.msra.mxu0 %v905
    %1202 = vmatmul.bf16.gmra.mxu0 %v160
    %v1203 = vpop.f32.mrf.mxu0
    %v1204 = vadd.f32 %v605, %v1203
    %v1205 = vpop.f32.mrf.mxu0
    %v1206 = vadd.f32 %v605, %v1205
    %1207 = vmatmul.bf16.gmra.mxu0 %v162
    %v1208 = vpop.f32.mrf.mxu0
    %v1209 = vadd.f32 %v605, %v1208
    %v1210 = vpop.f32.mrf.mxu0
    %v1211 = vadd.f32 %v605, %v1210
    %1212 = vmatmul.bf16.gmra.mxu0 %v164
    %v1213 = vpop.f32.mrf.mxu0
    %v1214 = vadd.f32 %v605, %v1213
    %v1215 = vpop.f32.mrf.mxu0
    %v1216 = vadd.f32 %v605, %v1215
    %1217 = vmatmul.bf16.gmra.mxu0 %v166
    %v1218 = vpop.f32.mrf.mxu0
    %v1219 = vadd.f32 %v605, %v1218
    %v1220 = vpop.f32.mrf.mxu0
    %v1221 = vadd.f32 %v605, %v1220
    %1222 = vmatmul.bf16.gmra.mxu0 %v168
    %v1223 = vpop.f32.mrf.mxu0
    %v1224 = vadd.f32 %v605, %v1223
    %v1225 = vpop.f32.mrf.mxu0
    %v1226 = vadd.f32 %v605, %v1225
    %1227 = vmatmul.bf16.gmra.mxu0 %v170
    %v1228 = vpop.f32.mrf.mxu0
    %v1229 = vadd.f32 %v605, %v1228
    %v1230 = vpop.f32.mrf.mxu0
    %v1231 = vadd.f32 %v605, %v1230
    %1232 = vmatmul.bf16.gmra.mxu0 %v172
    %v1233 = vpop.f32.mrf.mxu0
    %v1234 = vadd.f32 %v605, %v1233
    %v1235 = vpop.f32.mrf.mxu0
    %v1236 = vadd.f32 %v605, %v1235
    %1237 = vmatmul.bf16.gmra.mxu0 %v174
    %v1238 = vpop.f32.mrf.mxu0
    %v1239 = vadd.f32 %v605, %v1238
    %v1240 = vpop.f32.mrf.mxu0
    %v1241 = vadd.f32 %v605, %v1240
    %1242 = vdwg.mxu0
    %1243 = vmatpush.bf16.msra.mxu0 %v995
    %1244 = vmatpush.bf16.msra.mxu0 %v989
    %1245 = vmatpush.bf16.msra.mxu0 %v983
    %1246 = vmatpush.bf16.msra.mxu0 %v977
    %1247 = vmatpush.bf16.msra.mxu0 %v971
    %1248 = vmatpush.bf16.msra.mxu0 %v965
    %1249 = vmatpush.bf16.msra.mxu0 %v959
    %1250 = vmatpush.bf16.msra.mxu0 %v953
    %1251 = vmatmul.bf16.gmra.mxu0 %v161
    %v1252 = vpop.f32.mrf.mxu0
    %v1253 = vadd.f32 %v1204, %v1252
    %v1254 = vpop.f32.mrf.mxu0
    %v1255 = vadd.f32 %v1206, %v1254
    %1256 = vmatmul.bf16.gmra.mxu0 %v163
    %v1257 = vpop.f32.mrf.mxu0
    %v1258 = vadd.f32 %v1209, %v1257
    %v1259 = vpop.f32.mrf.mxu0
    %v1260 = vadd.f32 %v1211, %v1259
    %1261 = vmatmul.bf16.gmra.mxu0 %v165
    %v1262 = vpop.f32.mrf.mxu0
    %v1263 = vadd.f32 %v1214, %v1262
    %v1264 = vpop.f32.mrf.mxu0
    %v1265 = vadd.f32 %v1216, %v1264
    %1266 = vmatmul.bf16.gmra.mxu0 %v167
    %v1267 = vpop.f32.mrf.mxu0
    %v1268 = vadd.f32 %v1219, %v1267
    %v1269 = vpop.f32.mrf.mxu0
    %v1270 = vadd.f32 %v1221, %v1269
    %1271 = vmatmul.bf16.gmra.mxu0 %v169
    %v1272 = vpop.f32.mrf.mxu0
    %v1273 = vadd.f32 %v1224, %v1272
    %v1274 = vpop.f32.mrf.mxu0
    %v1275 = vadd.f32 %v1226, %v1274
    %1276 = vmatmul.bf16.gmra.mxu0 %v171
    %v1277 = vpop.f32.mrf.mxu0
    %v1278 = vadd.f32 %v1229, %v1277
    %v1279 = vpop.f32.mrf.mxu0
    %v1280 = vadd.f32 %v1231, %v1279
    %1281 = vmatmul.bf16.gmra.mxu0 %v173
    %v1282 = vpop.f32.mrf.mxu0
    %v1283 = vadd.f32 %v1234, %v1282
    %v1284 = vpop.f32.mrf.mxu0
    %v1285 = vadd.f32 %v1236, %v1284
    %1286 = vmatmul.bf16.gmra.mxu0 %v175
    %v1287 = vpop.f32.mrf.mxu0
    %v1288 = vadd.f32 %v1239, %v1287
    %v1289 = vpop.f32.mrf.mxu0
    %v1290 = vadd.f32 %v1241, %v1289
    %1291 = vdwg.mxu0
    %1292 = vmatpush.bf16.msra.mxu0 %v948
    %1293 = vmatpush.bf16.msra.mxu0 %v942
    %1294 = vmatpush.bf16.msra.mxu0 %v936
    %1295 = vmatpush.bf16.msra.mxu0 %v930
    %1296 = vmatpush.bf16.msra.mxu0 %v924
    %1297 = vmatpush.bf16.msra.mxu0 %v918
    %1298 = vmatpush.bf16.msra.mxu0 %v912
    %1299 = vmatpush.bf16.msra.mxu0 %v906
    %1300 = vmatmul.bf16.gmra.mxu0 %v160
    %v1301 = vpop.f32.mrf.mxu0
    %v1302 = vadd.f32 %v606, %v1301
    %v1303 = vpop.f32.mrf.mxu0
    %v1304 = vadd.f32 %v606, %v1303
    %1305 = vmatmul.bf16.gmra.mxu0 %v162
    %v1306 = vpop.f32.mrf.mxu0
    %v1307 = vadd.f32 %v606, %v1306
    %v1308 = vpop.f32.mrf.mxu0
    %v1309 = vadd.f32 %v606, %v1308
    %1310 = vmatmul.bf16.gmra.mxu0 %v164
    %v1311 = vpop.f32.mrf.mxu0
    %v1312 = vadd.f32 %v606, %v1311
    %v1313 = vpop.f32.mrf.mxu0
    %v1314 = vadd.f32 %v606, %v1313
    %1315 = vmatmul.bf16.gmra.mxu0 %v166
    %v1316 = vpop.f32.mrf.mxu0
    %v1317 = vadd.f32 %v606, %v1316
    %v1318 = vpop.f32.mrf.mxu0
    %v1319 = vadd.f32 %v606, %v1318
    %1320 = vmatmul.bf16.gmra.mxu0 %v168
    %v1321 = vpop.f32.mrf.mxu0
    %v1322 = vadd.f32 %v606, %v1321
    %v1323 = vpop.f32.mrf.mxu0
    %v1324 = vadd.f32 %v606, %v1323
    %1325 = vmatmul.bf16.gmra.mxu0 %v170
    %v1326 = vpop.f32.mrf.mxu0
    %v1327 = vadd.f32 %v606, %v1326
    %v1328 = vpop.f32.mrf.mxu0
    %v1329 = vadd.f32 %v606, %v1328
    %1330 = vmatmul.bf16.gmra.mxu0 %v172
    %v1331 = vpop.f32.mrf.mxu0
    %v1332 = vadd.f32 %v606, %v1331
    %v1333 = vpop.f32.mrf.mxu0
    %v1334 = vadd.f32 %v606, %v1333
    %1335 = vmatmul.bf16.gmra.mxu0 %v174
    %v1336 = vpop.f32.mrf.mxu0
    %v1337 = vadd.f32 %v606, %v1336
    %v1338 = vpop.f32.mrf.mxu0
    %v1339 = vadd.f32 %v606, %v1338
    %1340 = vdwg.mxu0
    %1341 = vmatpush.bf16.msra.mxu0 %v996
    %1342 = vmatpush.bf16.msra.mxu0 %v990
    %1343 = vmatpush.bf16.msra.mxu0 %v984
    %1344 = vmatpush.bf16.msra.mxu0 %v978
    %1345 = vmatpush.bf16.msra.mxu0 %v972
    %1346 = vmatpush.bf16.msra.mxu0 %v966
    %1347 = vmatpush.bf16.msra.mxu0 %v960
    %1348 = vmatpush.bf16.msra.mxu0 %v954
    %1349 = vmatmul.bf16.gmra.mxu0 %v161
    %v1350 = vpop.f32.mrf.mxu0
    %v1351 = vadd.f32 %v1302, %v1350
    %v1352 = vpop.f32.mrf.mxu0
    %v1353 = vadd.f32 %v1304, %v1352
    %1354 = vmatmul.bf16.gmra.mxu0 %v163
    %v1355 = vpop.f32.mrf.mxu0
    %v1356 = vadd.f32 %v1307, %v1355
    %v1357 = vpop.f32.mrf.mxu0
    %v1358 = vadd.f32 %v1309, %v1357
    %1359 = vmatmul.bf16.gmra.mxu0 %v165
    %v1360 = vpop.f32.mrf.mxu0
    %v1361 = vadd.f32 %v1312, %v1360
    %v1362 = vpop.f32.mrf.mxu0
    %v1363 = vadd.f32 %v1314, %v1362
    %1364 = vmatmul.bf16.gmra.mxu0 %v167
    %v1365 = vpop.f32.mrf.mxu0
    %v1366 = vadd.f32 %v1317, %v1365
    %v1367 = vpop.f32.mrf.mxu0
    %v1368 = vadd.f32 %v1319, %v1367
    %1369 = vmatmul.bf16.gmra.mxu0 %v169
    %v1370 = vpop.f32.mrf.mxu0
    %v1371 = vadd.f32 %v1322, %v1370
    %v1372 = vpop.f32.mrf.mxu0
    %v1373 = vadd.f32 %v1324, %v1372
    %1374 = vmatmul.bf16.gmra.mxu0 %v171
    %v1375 = vpop.f32.mrf.mxu0
    %v1376 = vadd.f32 %v1327, %v1375
    %v1377 = vpop.f32.mrf.mxu0
    %v1378 = vadd.f32 %v1329, %v1377
    %1379 = vmatmul.bf16.gmra.mxu0 %v173
    %v1380 = vpop.f32.mrf.mxu0
    %v1381 = vadd.f32 %v1332, %v1380
    %v1382 = vpop.f32.mrf.mxu0
    %v1383 = vadd.f32 %v1334, %v1382
    %1384 = vmatmul.bf16.gmra.mxu0 %v175
    %v1385 = vpop.f32.mrf.mxu0
    %v1386 = vadd.f32 %v1337, %v1385
    %v1387 = vpop.f32.mrf.mxu0
    %v1388 = vadd.f32 %v1339, %v1387
    %1389 = vdwg.mxu0
    %1390 = vmatpush.bf16.msra.mxu0 %v949
    %1391 = vmatpush.bf16.msra.mxu0 %v943
    %1392 = vmatpush.bf16.msra.mxu0 %v937
    %1393 = vmatpush.bf16.msra.mxu0 %v931
    %1394 = vmatpush.bf16.msra.mxu0 %v925
    %1395 = vmatpush.bf16.msra.mxu0 %v919
    %1396 = vmatpush.bf16.msra.mxu0 %v913
    %1397 = vmatpush.bf16.msra.mxu0 %v907
    %1398 = vmatmul.bf16.gmra.mxu0 %v160
    %v1399 = vpop.f32.mrf.mxu0
    %v1400 = vadd.f32 %v607, %v1399
    %v1401 = vpop.f32.mrf.mxu0
    %v1402 = vadd.f32 %v607, %v1401
    %1403 = vmatmul.bf16.gmra.mxu0 %v162
    %v1404 = vpop.f32.mrf.mxu0
    %v1405 = vadd.f32 %v607, %v1404
    %v1406 = vpop.f32.mrf.mxu0
    %v1407 = vadd.f32 %v607, %v1406
    %1408 = vmatmul.bf16.gmra.mxu0 %v164
    %v1409 = vpop.f32.mrf.mxu0
    %v1410 = vadd.f32 %v607, %v1409
    %v1411 = vpop.f32.mrf.mxu0
    %v1412 = vadd.f32 %v607, %v1411
    %1413 = vmatmul.bf16.gmra.mxu0 %v166
    %v1414 = vpop.f32.mrf.mxu0
    %v1415 = vadd.f32 %v607, %v1414
    %v1416 = vpop.f32.mrf.mxu0
    %v1417 = vadd.f32 %v607, %v1416
    %1418 = vmatmul.bf16.gmra.mxu0 %v168
    %v1419 = vpop.f32.mrf.mxu0
    %v1420 = vadd.f32 %v607, %v1419
    %v1421 = vpop.f32.mrf.mxu0
    %v1422 = vadd.f32 %v607, %v1421
    %1423 = vmatmul.bf16.gmra.mxu0 %v170
    %v1424 = vpop.f32.mrf.mxu0
    %v1425 = vadd.f32 %v607, %v1424
    %v1426 = vpop.f32.mrf.mxu0
    %v1427 = vadd.f32 %v607, %v1426
    %1428 = vmatmul.bf16.gmra.mxu0 %v172
    %v1429 = vpop.f32.mrf.mxu0
    %v1430 = vadd.f32 %v607, %v1429
    %v1431 = vpop.f32.mrf.mxu0
    %v1432 = vadd.f32 %v607, %v1431
    %1433 = vmatmul.bf16.gmra.mxu0 %v174
    %v1434 = vpop.f32.mrf.mxu0
    %v1435 = vadd.f32 %v607, %v1434
    %v1436 = vpop.f32.mrf.mxu0
    %v1437 = vadd.f32 %v607, %v1436
    %1438 = vdwg.mxu0
    %1439 = vmatpush.bf16.msra.mxu0 %v997
    %1440 = vmatpush.bf16.msra.mxu0 %v991
    %1441 = vmatpush.bf16.msra.mxu0 %v985
    %1442 = vmatpush.bf16.msra.mxu0 %v979
    %1443 = vmatpush.bf16.msra.mxu0 %v973
    %1444 = vmatpush.bf16.msra.mxu0 %v967
    %1445 = vmatpush.bf16.msra.mxu0 %v961
    %1446 = vmatpush.bf16.msra.mxu0 %v955
    %1447 = vmatmul.bf16.gmra.mxu0 %v161
    %v1448 = vpop.f32.mrf.mxu0
    %v1449 = vadd.f32 %v1400, %v1448
    %v1450 = vpop.f32.mrf.mxu0
    %v1451 = vadd.f32 %v1402, %v1450
    %1452 = vmatmul.bf16.gmra.mxu0 %v163
    %v1453 = vpop.f32.mrf.mxu0
    %v1454 = vadd.f32 %v1405, %v1453
    %v1455 = vpop.f32.mrf.mxu0
    %v1456 = vadd.f32 %v1407, %v1455
    %1457 = vmatmul.bf16.gmra.mxu0 %v165
    %v1458 = vpop.f32.mrf.mxu0
    %v1459 = vadd.f32 %v1410, %v1458
    %v1460 = vpop.f32.mrf.mxu0
    %v1461 = vadd.f32 %v1412, %v1460
    %1462 = vmatmul.bf16.gmra.mxu0 %v167
    %v1463 = vpop.f32.mrf.mxu0
    %v1464 = vadd.f32 %v1415, %v1463
    %v1465 = vpop.f32.mrf.mxu0
    %v1466 = vadd.f32 %v1417, %v1465
    %1467 = vmatmul.bf16.gmra.mxu0 %v169
    %v1468 = vpop.f32.mrf.mxu0
    %v1469 = vadd.f32 %v1420, %v1468
    %v1470 = vpop.f32.mrf.mxu0
    %v1471 = vadd.f32 %v1422, %v1470
    %1472 = vmatmul.bf16.gmra.mxu0 %v171
    %v1473 = vpop.f32.mrf.mxu0
    %v1474 = vadd.f32 %v1425, %v1473
    %v1475 = vpop.f32.mrf.mxu0
    %v1476 = vadd.f32 %v1427, %v1475
    %1477 = vmatmul.bf16.gmra.mxu0 %v173
    %v1478 = vpop.f32.mrf.mxu0
    %v1479 = vadd.f32 %v1430, %v1478
    %v1480 = vpop.f32.mrf.mxu0
    %v1481 = vadd.f32 %v1432, %v1480
    %1482 = vmatmul.bf16.gmra.mxu0 %v175
    %v1483 = vpop.f32.mrf.mxu0
    %v1484 = vadd.f32 %v1435, %v1483
    %v1485 = vpop.f32.mrf.mxu0
    %v1486 = vadd.f32 %v1437, %v1485
    %1487 = vdwg.mxu0
    %1488 = vmatpush.bf16.msra.mxu0 %v950
    %1489 = vmatpush.bf16.msra.mxu0 %v944
    %1490 = vmatpush.bf16.msra.mxu0 %v938
    %1491 = vmatpush.bf16.msra.mxu0 %v932
    %1492 = vmatpush.bf16.msra.mxu0 %v926
    %1493 = vmatpush.bf16.msra.mxu0 %v920
    %1494 = vmatpush.bf16.msra.mxu0 %v914
    %1495 = vmatpush.bf16.msra.mxu0 %v908
    %1496 = vmatmul.bf16.gmra.mxu0 %v160
    %v1497 = vpop.f32.mrf.mxu0
    %v1498 = vadd.f32 %v608, %v1497
    %v1499 = vpop.f32.mrf.mxu0
    %v1500 = vadd.f32 %v608, %v1499
    %1501 = vmatmul.bf16.gmra.mxu0 %v162
    %v1502 = vpop.f32.mrf.mxu0
    %v1503 = vadd.f32 %v608, %v1502
    %v1504 = vpop.f32.mrf.mxu0
    %v1505 = vadd.f32 %v608, %v1504
    %1506 = vmatmul.bf16.gmra.mxu0 %v164
    %v1507 = vpop.f32.mrf.mxu0
    %v1508 = vadd.f32 %v608, %v1507
    %v1509 = vpop.f32.mrf.mxu0
    %v1510 = vadd.f32 %v608, %v1509
    %1511 = vmatmul.bf16.gmra.mxu0 %v166
    %v1512 = vpop.f32.mrf.mxu0
    %v1513 = vadd.f32 %v608, %v1512
    %v1514 = vpop.f32.mrf.mxu0
    %v1515 = vadd.f32 %v608, %v1514
    %1516 = vmatmul.bf16.gmra.mxu0 %v168
    %v1517 = vpop.f32.mrf.mxu0
    %v1518 = vadd.f32 %v608, %v1517
    %v1519 = vpop.f32.mrf.mxu0
    %v1520 = vadd.f32 %v608, %v1519
    %1521 = vmatmul.bf16.gmra.mxu0 %v170
    %v1522 = vpop.f32.mrf.mxu0
    %v1523 = vadd.f32 %v608, %v1522
    %v1524 = vpop.f32.mrf.mxu0
    %v1525 = vadd.f32 %v608, %v1524
    %1526 = vmatmul.bf16.gmra.mxu0 %v172
    %v1527 = vpop.f32.mrf.mxu0
    %v1528 = vadd.f32 %v608, %v1527
    %v1529 = vpop.f32.mrf.mxu0
    %v1530 = vadd.f32 %v608, %v1529
    %1531 = vmatmul.bf16.gmra.mxu0 %v174
    %v1532 = vpop.f32.mrf.mxu0
    %v1533 = vadd.f32 %v608, %v1532
    %v1534 = vpop.f32.mrf.mxu0
    %v1535 = vadd.f32 %v608, %v1534
    %1536 = vdwg.mxu0
    %1537 = vmatpush.bf16.msra.mxu0 %v998
    %1538 = vmatpush.bf16.msra.mxu0 %v992
    %1539 = vmatpush.bf16.msra.mxu0 %v986
    %1540 = vmatpush.bf16.msra.mxu0 %v980
    %1541 = vmatpush.bf16.msra.mxu0 %v974
    %1542 = vmatpush.bf16.msra.mxu0 %v968
    %1543 = vmatpush.bf16.msra.mxu0 %v962
    %1544 = vmatpush.bf16.msra.mxu0 %v956
    %1545 = vmatmul.bf16.gmra.mxu0 %v161
    %v1546 = vpop.f32.mrf.mxu0
    %v1547 = vadd.f32 %v1498, %v1546
    %v1548 = vpop.f32.mrf.mxu0
    %v1549 = vadd.f32 %v1500, %v1548
    %1550 = vmatmul.bf16.gmra.mxu0 %v163
    %v1551 = vpop.f32.mrf.mxu0
    %v1552 = vadd.f32 %v1503, %v1551
    %v1553 = vpop.f32.mrf.mxu0
    %v1554 = vadd.f32 %v1505, %v1553
    %1555 = vmatmul.bf16.gmra.mxu0 %v165
    %v1556 = vpop.f32.mrf.mxu0
    %v1557 = vadd.f32 %v1508, %v1556
    %v1558 = vpop.f32.mrf.mxu0
    %v1559 = vadd.f32 %v1510, %v1558
    %1560 = vmatmul.bf16.gmra.mxu0 %v167
    %v1561 = vpop.f32.mrf.mxu0
    %v1562 = vadd.f32 %v1513, %v1561
    %v1563 = vpop.f32.mrf.mxu0
    %v1564 = vadd.f32 %v1515, %v1563
    %1565 = vmatmul.bf16.gmra.mxu0 %v169
    %v1566 = vpop.f32.mrf.mxu0
    %v1567 = vadd.f32 %v1518, %v1566
    %v1568 = vpop.f32.mrf.mxu0
    %v1569 = vadd.f32 %v1520, %v1568
    %1570 = vmatmul.bf16.gmra.mxu0 %v171
    %v1571 = vpop.f32.mrf.mxu0
    %v1572 = vadd.f32 %v1523, %v1571
    %v1573 = vpop.f32.mrf.mxu0
    %v1574 = vadd.f32 %v1525, %v1573
    %1575 = vmatmul.bf16.gmra.mxu0 %v173
    %v1576 = vpop.f32.mrf.mxu0
    %v1577 = vadd.f32 %v1528, %v1576
    %v1578 = vpop.f32.mrf.mxu0
    %v1579 = vadd.f32 %v1530, %v1578
    %1580 = vmatmul.bf16.gmra.mxu0 %v175
    %v1581 = vpop.f32.mrf.mxu0
    %v1582 = vadd.f32 %v1533, %v1581
    %v1583 = vpop.f32.mrf.mxu0
    %v1584 = vadd.f32 %v1535, %v1583
    %1585 = vdwg.mxu0
    %1586 = vmatpush.bf16.msra.mxu0 %v951
    %1587 = vmatpush.bf16.msra.mxu0 %v945
    %1588 = vmatpush.bf16.msra.mxu0 %v939
    %1589 = vmatpush.bf16.msra.mxu0 %v933
    %1590 = vmatpush.bf16.msra.mxu0 %v927
    %1591 = vmatpush.bf16.msra.mxu0 %v921
    %1592 = vmatpush.bf16.msra.mxu0 %v915
    %1593 = vmatpush.bf16.msra.mxu0 %v909
    %1594 = vmatmul.bf16.gmra.mxu0 %v160
    %v1595 = vpop.f32.mrf.mxu0
    %v1596 = vadd.f32 %v609, %v1595
    %v1597 = vpop.f32.mrf.mxu0
    %v1598 = vadd.f32 %v609, %v1597
    %1599 = vmatmul.bf16.gmra.mxu0 %v162
    %v1600 = vpop.f32.mrf.mxu0
    %v1601 = vadd.f32 %v609, %v1600
    %v1602 = vpop.f32.mrf.mxu0
    %v1603 = vadd.f32 %v609, %v1602
    %1604 = vmatmul.bf16.gmra.mxu0 %v164
    %v1605 = vpop.f32.mrf.mxu0
    %v1606 = vadd.f32 %v609, %v1605
    %v1607 = vpop.f32.mrf.mxu0
    %v1608 = vadd.f32 %v609, %v1607
    %1609 = vmatmul.bf16.gmra.mxu0 %v166
    %v1610 = vpop.f32.mrf.mxu0
    %v1611 = vadd.f32 %v609, %v1610
    %v1612 = vpop.f32.mrf.mxu0
    %v1613 = vadd.f32 %v609, %v1612
    %1614 = vmatmul.bf16.gmra.mxu0 %v168
    %v1615 = vpop.f32.mrf.mxu0
    %v1616 = vadd.f32 %v609, %v1615
    %v1617 = vpop.f32.mrf.mxu0
    %v1618 = vadd.f32 %v609, %v1617
    %1619 = vmatmul.bf16.gmra.mxu0 %v170
    %v1620 = vpop.f32.mrf.mxu0
    %v1621 = vadd.f32 %v609, %v1620
    %v1622 = vpop.f32.mrf.mxu0
    %v1623 = vadd.f32 %v609, %v1622
    %1624 = vmatmul.bf16.gmra.mxu0 %v172
    %v1625 = vpop.f32.mrf.mxu0
    %v1626 = vadd.f32 %v609, %v1625
    %v1627 = vpop.f32.mrf.mxu0
    %v1628 = vadd.f32 %v609, %v1627
    %1629 = vmatmul.bf16.gmra.mxu0 %v174
    %v1630 = vpop.f32.mrf.mxu0
    %v1631 = vadd.f32 %v609, %v1630
    %v1632 = vpop.f32.mrf.mxu0
    %v1633 = vadd.f32 %v609, %v1632
    %1634 = vdwg.mxu0
    %1635 = vmatpush.bf16.msra.mxu0 %v999
    %1636 = vmatpush.bf16.msra.mxu0 %v993
    %1637 = vmatpush.bf16.msra.mxu0 %v987
    %1638 = vmatpush.bf16.msra.mxu0 %v981
    %1639 = vmatpush.bf16.msra.mxu0 %v975
    %1640 = vmatpush.bf16.msra.mxu0 %v969
    %1641 = vmatpush.bf16.msra.mxu0 %v963
    %1642 = vmatpush.bf16.msra.mxu0 %v957
    %1643 = vmatmul.bf16.gmra.mxu0 %v161
    %v1644 = vpop.f32.mrf.mxu0
    %v1645 = vadd.f32 %v1596, %v1644
    %v1646 = vpop.f32.mrf.mxu0
    %v1647 = vadd.f32 %v1598, %v1646
    %1648 = vmatmul.bf16.gmra.mxu0 %v163
    %v1649 = vpop.f32.mrf.mxu0
    %v1650 = vadd.f32 %v1601, %v1649
    %v1651 = vpop.f32.mrf.mxu0
    %v1652 = vadd.f32 %v1603, %v1651
    %1653 = vmatmul.bf16.gmra.mxu0 %v165
    %v1654 = vpop.f32.mrf.mxu0
    %v1655 = vadd.f32 %v1606, %v1654
    %v1656 = vpop.f32.mrf.mxu0
    %v1657 = vadd.f32 %v1608, %v1656
    %1658 = vmatmul.bf16.gmra.mxu0 %v167
    %v1659 = vpop.f32.mrf.mxu0
    %v1660 = vadd.f32 %v1611, %v1659
    %v1661 = vpop.f32.mrf.mxu0
    %v1662 = vadd.f32 %v1613, %v1661
    %1663 = vmatmul.bf16.gmra.mxu0 %v169
    %v1664 = vpop.f32.mrf.mxu0
    %v1665 = vadd.f32 %v1616, %v1664
    %v1666 = vpop.f32.mrf.mxu0
    %v1667 = vadd.f32 %v1618, %v1666
    %1668 = vmatmul.bf16.gmra.mxu0 %v171
    %v1669 = vpop.f32.mrf.mxu0
    %v1670 = vadd.f32 %v1621, %v1669
    %v1671 = vpop.f32.mrf.mxu0
    %v1672 = vadd.f32 %v1623, %v1671
    %1673 = vmatmul.bf16.gmra.mxu0 %v173
    %v1674 = vpop.f32.mrf.mxu0
    %v1675 = vadd.f32 %v1626, %v1674
    %v1676 = vpop.f32.mrf.mxu0
    %v1677 = vadd.f32 %v1628, %v1676
    %1678 = vmatmul.bf16.gmra.mxu0 %v175
    %v1679 = vpop.f32.mrf.mxu0
    %v1680 = vadd.f32 %v1631, %v1679
    %v1681 = vpop.f32.mrf.mxu0
    %v1682 = vadd.f32 %v1633, %v1681
    %1683 = vdwg.mxu0
    %1684 = vst [vmem:[#allocation12] sm:$0xff] %v1155
    %1685 = vst [vmem:[#allocation12 + $0x8] sm:$0xff] %v1253
    %1686 = vst [vmem:[#allocation12 + $0x10] sm:$0xff] %v1351
    %1687 = vst [vmem:[#allocation12 + $0x18] sm:$0xff] %v1449
    %1688 = vst [vmem:[#allocation12 + $0x20] sm:$0xff] %v1157
    %1689 = vst [vmem:[#allocation12 + $0x28] sm:$0xff] %v1255
    %1690 = vst [vmem:[#allocation12 + $0x30] sm:$0xff] %v1353
    %1691 = vst [vmem:[#allocation12 + $0x38] sm:$0xff] %v1451
    %1692 = vst [vmem:[#allocation12 + $0x40] sm:$0xff] %v1160
    %1693 = vst [vmem:[#allocation12 + $0x48] sm:$0xff] %v1258
    %1694 = vst [vmem:[#allocation12 + $0x50] sm:$0xff] %v1356
    %1695 = vst [vmem:[#allocation12 + $0x58] sm:$0xff] %v1454
    %1696 = vst [vmem:[#allocation12 + $0x60] sm:$0xff] %v1162
    %1697 = vst [vmem:[#allocation12 + $0x68] sm:$0xff] %v1260
    %1698 = vst [vmem:[#allocation12 + $0x70] sm:$0xff] %v1358
    %1699 = vst [vmem:[#allocation12 + $0x78] sm:$0xff] %v1456
    %1700 = vst [vmem:[#allocation12 + $0x80] sm:$0xff] %v1165
    %1701 = vst [vmem:[#allocation12 + $0x88] sm:$0xff] %v1263
    %1702 = vst [vmem:[#allocation12 + $0x90] sm:$0xff] %v1361
    %1703 = vst [vmem:[#allocation12 + $0x98] sm:$0xff] %v1459
    %1704 = vst [vmem:[#allocation12 + $0xa0] sm:$0xff] %v1167
    %1705 = vst [vmem:[#allocation12 + $0xa8] sm:$0xff] %v1265
    %1706 = vst [vmem:[#allocation12 + $0xb0] sm:$0xff] %v1363
    %1707 = vst [vmem:[#allocation12 + $0xb8] sm:$0xff] %v1461
    %1708 = vst [vmem:[#allocation12 + $0xc0] sm:$0xff] %v1170
    %1709 = vst [vmem:[#allocation12 + $0xc8] sm:$0xff] %v1268
    %1710 = vst [vmem:[#allocation12 + $0xd0] sm:$0xff] %v1366
    %1711 = vst [vmem:[#allocation12 + $0xd8] sm:$0xff] %v1464
    %1712 = vst [vmem:[#allocation12 + $0xe0] sm:$0xff] %v1172
    %1713 = vst [vmem:[#allocation12 + $0xe8] sm:$0xff] %v1270
    %1714 = vst [vmem:[#allocation12 + $0xf0] sm:$0xff] %v1368
    %1715 = vst [vmem:[#allocation12 + $0xf8] sm:$0xff] %v1466
    %1716 = vst [vmem:[#allocation12 + $0x100] sm:$0xff] %v1175
    %1717 = vst [vmem:[#allocation12 + $0x108] sm:$0xff] %v1273
    %1718 = vst [vmem:[#allocation12 + $0x110] sm:$0xff] %v1371
    %1719 = vst [vmem:[#allocation12 + $0x118] sm:$0xff] %v1469
    %1720 = vst [vmem:[#allocation12 + $0x120] sm:$0xff] %v1177
    %1721 = vst [vmem:[#allocation12 + $0x128] sm:$0xff] %v1275
    %1722 = vst [vmem:[#allocation12 + $0x130] sm:$0xff] %v1373
    %1723 = vst [vmem:[#allocation12 + $0x138] sm:$0xff] %v1471
    %1724 = vst [vmem:[#allocation12 + $0x140] sm:$0xff] %v1180
    %1725 = vst [vmem:[#allocation12 + $0x148] sm:$0xff] %v1278
    %1726 = vst [vmem:[#allocation12 + $0x150] sm:$0xff] %v1376
    %1727 = vst [vmem:[#allocation12 + $0x158] sm:$0xff] %v1474
    %1728 = vst [vmem:[#allocation12 + $0x160] sm:$0xff] %v1182
    %1729 = vst [vmem:[#allocation12 + $0x168] sm:$0xff] %v1280
    %1730 = vst [vmem:[#allocation12 + $0x170] sm:$0xff] %v1378
    %1731 = vst [vmem:[#allocation12 + $0x178] sm:$0xff] %v1476
    %1732 = vst [vmem:[#allocation12 + $0x180] sm:$0xff] %v1185
    %1733 = vst [vmem:[#allocation12 + $0x188] sm:$0xff] %v1283
    %1734 = vst [vmem:[#allocation12 + $0x190] sm:$0xff] %v1381
    %1735 = vst [vmem:[#allocation12 + $0x198] sm:$0xff] %v1479
    %1736 = vst [vmem:[#allocation12 + $0x1a0] sm:$0xff] %v1187
    %1737 = vst [vmem:[#allocation12 + $0x1a8] sm:$0xff] %v1285
    %1738 = vst [vmem:[#allocation12 + $0x1b0] sm:$0xff] %v1383
    %1739 = vst [vmem:[#allocation12 + $0x1b8] sm:$0xff] %v1481
    %1740 = vst [vmem:[#allocation12 + $0x1c0] sm:$0xff] %v1190
    %1741 = vst [vmem:[#allocation12 + $0x1c8] sm:$0xff] %v1288
    %1742 = vst [vmem:[#allocation12 + $0x1d0] sm:$0xff] %v1386
    %1743 = vst [vmem:[#allocation12 + $0x1d8] sm:$0xff] %v1484
    %1744 = vst [vmem:[#allocation12 + $0x1e0] sm:$0xff] %v1192
    %1745 = vst [vmem:[#allocation12 + $0x1e8] sm:$0xff] %v1290
    %1746 = vst [vmem:[#allocation12 + $0x1f0] sm:$0xff] %v1388
    %1747 = vst [vmem:[#allocation12 + $0x1f8] sm:$0xff] %v1486
    %v1748 = vlaneseq
    %v1749 = vand.u32 %v1748, 127
    %v1750 = vadd.s32 %v1749, 128
    %v1751 = vshra.s32 %v1749, 5
    %v1752 = vshra.s32 %v1750, 5
    %vm1753 = vcmp.eq.s32.totalorder %v1751, 0
    %vm1754 = vcmp.eq.s32.totalorder %v1752, 0
    %v1755 = vsel %vm1753, 1, 0
    %v1756 = vsel %vm1754, 1, 0
    %vm1757 = vcmp.eq.s32.totalorder %v1755, 1
    %vm1758 = vcmp.eq.s32.totalorder %v1756, 1
    %v1759 = vsel %vm1757, %v1547, -inf
    %v1760 = vsel %vm1758, %v1645, -inf
    %v1761 = vsel %vm1757, %v1549, -inf
    %v1762 = vsel %vm1758, %v1647, -inf
    %v1763 = vsel %vm1757, %v1552, -inf
    %v1764 = vsel %vm1758, %v1650, -inf
    %v1765 = vsel %vm1757, %v1554, -inf
    %v1766 = vsel %vm1758, %v1652, -inf
    %v1767 = vsel %vm1757, %v1557, -inf
    %v1768 = vsel %vm1758, %v1655, -inf
    %v1769 = vsel %vm1757, %v1559, -inf
    %v1770 = vsel %vm1758, %v1657, -inf
    %v1771 = vsel %vm1757, %v1562, -inf
    %v1772 = vsel %vm1758, %v1660, -inf
    %v1773 = vsel %vm1757, %v1564, -inf
    %v1774 = vsel %vm1758, %v1662, -inf
    %v1775 = vsel %vm1757, %v1567, -inf
    %v1776 = vsel %vm1758, %v1665, -inf
    %v1777 = vsel %vm1757, %v1569, -inf
    %v1778 = vsel %vm1758, %v1667, -inf
    %v1779 = vsel %vm1757, %v1572, -inf
    %v1780 = vsel %vm1758, %v1670, -inf
    %v1781 = vsel %vm1757, %v1574, -inf
    %v1782 = vsel %vm1758, %v1672, -inf
    %v1783 = vsel %vm1757, %v1577, -inf
    %v1784 = vsel %vm1758, %v1675, -inf
    %v1785 = vsel %vm1757, %v1579, -inf
    %v1786 = vsel %vm1758, %v1677, -inf
    %v1787 = vsel %vm1757, %v1582, -inf
    %v1788 = vsel %vm1758, %v1680, -inf
    %v1789 = vsel %vm1757, %v1584, -inf
    %v1790 = vsel %vm1758, %v1682, -inf
    %v1791 = vmax.f32 %v1759, %v1760
    %1792 = vmax.xlane.f32.xlu0 %v1791
    %v1793 = vpop.xlane.xlu0 %1792
    %v1794 = vmax.f32 %v1761, %v1762
    %1795 = vmax.xlane.f32.xlu0 %v1794
    %v1796 = vpop.xlane.xlu0 %1795
    %v1797 = vmax.f32 %v1763, %v1764
    %1798 = vmax.xlane.f32.xlu0 %v1797
    %v1799 = vpop.xlane.xlu0 %1798
    %v1800 = vmax.f32 %v1765, %v1766
    %1801 = vmax.xlane.f32.xlu0 %v1800
    %v1802 = vpop.xlane.xlu0 %1801
    %v1803 = vmax.f32 %v1767, %v1768
    %1804 = vmax.xlane.f32.xlu0 %v1803
    %v1805 = vpop.xlane.xlu0 %1804
    %v1806 = vmax.f32 %v1769, %v1770
    %1807 = vmax.xlane.f32.xlu0 %v1806
    %v1808 = vpop.xlane.xlu0 %1807
    %v1809 = vmax.f32 %v1771, %v1772
    %1810 = vmax.xlane.f32.xlu0 %v1809
    %v1811 = vpop.xlane.xlu0 %1810
    %v1812 = vmax.f32 %v1773, %v1774
    %1813 = vmax.xlane.f32.xlu0 %v1812
    %v1814 = vpop.xlane.xlu0 %1813
    %v1815 = vmax.f32 %v1775, %v1776
    %1816 = vmax.xlane.f32.xlu0 %v1815
    %v1817 = vpop.xlane.xlu0 %1816
    %v1818 = vmax.f32 %v1777, %v1778
    %1819 = vmax.xlane.f32.xlu0 %v1818
    %v1820 = vpop.xlane.xlu0 %1819
    %v1821 = vmax.f32 %v1779, %v1780
    %1822 = vmax.xlane.f32.xlu0 %v1821
    %v1823 = vpop.xlane.xlu0 %1822
    %v1824 = vmax.f32 %v1781, %v1782
    %1825 = vmax.xlane.f32.xlu0 %v1824
    %v1826 = vpop.xlane.xlu0 %1825
    %v1827 = vmax.f32 %v1783, %v1784
    %1828 = vmax.xlane.f32.xlu0 %v1827
    %v1829 = vpop.xlane.xlu0 %1828
    %v1830 = vmax.f32 %v1785, %v1786
    %1831 = vmax.xlane.f32.xlu0 %v1830
    %v1832 = vpop.xlane.xlu0 %1831
    %v1833 = vmax.f32 %v1787, %v1788
    %1834 = vmax.xlane.f32.xlu0 %v1833
    %v1835 = vpop.xlane.xlu0 %1834
    %v1836 = vmax.f32 %v1789, %v1790
    %1837 = vmax.xlane.f32.xlu0 %v1836
    %v1838 = vpop.xlane.xlu0 %1837
    %v1839 = vsel %vm1757, %v1793, -inf
    %v1840 = vsel %vm1758, %v1793, -inf
    %v1841 = vsel %vm1757, %v1796, -inf
    %v1842 = vsel %vm1758, %v1796, -inf
    %v1843 = vsel %vm1757, %v1799, -inf
    %v1844 = vsel %vm1758, %v1799, -inf
    %v1845 = vsel %vm1757, %v1802, -inf
    %v1846 = vsel %vm1758, %v1802, -inf
    %v1847 = vsel %vm1757, %v1805, -inf
    %v1848 = vsel %vm1758, %v1805, -inf
    %v1849 = vsel %vm1757, %v1808, -inf
    %v1850 = vsel %vm1758, %v1808, -inf
    %v1851 = vsel %vm1757, %v1811, -inf
    %v1852 = vsel %vm1758, %v1811, -inf
    %v1853 = vsel %vm1757, %v1814, -inf
    %v1854 = vsel %vm1758, %v1814, -inf
    %v1855 = vsel %vm1757, %v1817, -inf
    %v1856 = vsel %vm1758, %v1817, -inf
    %v1857 = vsel %vm1757, %v1820, -inf
    %v1858 = vsel %vm1758, %v1820, -inf
    %v1859 = vsel %vm1757, %v1823, -inf
    %v1860 = vsel %vm1758, %v1823, -inf
    %v1861 = vsel %vm1757, %v1826, -inf
    %v1862 = vsel %vm1758, %v1826, -inf
    %v1863 = vsel %vm1757, %v1829, -inf
    %v1864 = vsel %vm1758, %v1829, -inf
    %v1865 = vsel %vm1757, %v1832, -inf
    %v1866 = vsel %vm1758, %v1832, -inf
    %v1867 = vsel %vm1757, %v1835, -inf
    %v1868 = vsel %vm1758, %v1835, -inf
    %v1869 = vsel %vm1757, %v1838, -inf
    %v1870 = vsel %vm1758, %v1838, -inf
    %vm1871 = vcmp.eq.s32.totalorder %v1751, 1
    %vm1872 = vcmp.eq.s32.totalorder %v1752, 1
    %v1873 = vsel %vm1871, 1, 0
    %v1874 = vsel %vm1872, 1, 0
    %vm1875 = vcmp.eq.s32.totalorder %v1873, 1
    %vm1876 = vcmp.eq.s32.totalorder %v1874, 1
    %v1877 = vsel %vm1875, %v1547, -inf
    %v1878 = vsel %vm1876, %v1645, -inf
    %v1879 = vsel %vm1875, %v1549, -inf
    %v1880 = vsel %vm1876, %v1647, -inf
    %v1881 = vsel %vm1875, %v1552, -inf
    %v1882 = vsel %vm1876, %v1650, -inf
    %v1883 = vsel %vm1875, %v1554, -inf
    %v1884 = vsel %vm1876, %v1652, -inf
    %v1885 = vsel %vm1875, %v1557, -inf
    %v1886 = vsel %vm1876, %v1655, -inf
    %v1887 = vsel %vm1875, %v1559, -inf
    %v1888 = vsel %vm1876, %v1657, -inf
    %v1889 = vsel %vm1875, %v1562, -inf
    %v1890 = vsel %vm1876, %v1660, -inf
    %v1891 = vsel %vm1875, %v1564, -inf
    %v1892 = vsel %vm1876, %v1662, -inf
    %v1893 = vsel %vm1875, %v1567, -inf
    %v1894 = vsel %vm1876, %v1665, -inf
    %v1895 = vsel %vm1875, %v1569, -inf
    %v1896 = vsel %vm1876, %v1667, -inf
    %v1897 = vsel %vm1875, %v1572, -inf
    %v1898 = vsel %vm1876, %v1670, -inf
    %v1899 = vsel %vm1875, %v1574, -inf
    %v1900 = vsel %vm1876, %v1672, -inf
    %v1901 = vsel %vm1875, %v1577, -inf
    %v1902 = vsel %vm1876, %v1675, -inf
    %v1903 = vsel %vm1875, %v1579, -inf
    %v1904 = vsel %vm1876, %v1677, -inf
    %v1905 = vsel %vm1875, %v1582, -inf
    %v1906 = vsel %vm1876, %v1680, -inf
    %v1907 = vsel %vm1875, %v1584, -inf
    %v1908 = vsel %vm1876, %v1682, -inf
    %v1909 = vmax.f32 %v1877, %v1878
    %1910 = vmax.xlane.f32.xlu0 %v1909
    %v1911 = vpop.xlane.xlu0 %1910
    %v1912 = vmax.f32 %v1879, %v1880
    %1913 = vmax.xlane.f32.xlu0 %v1912
    %v1914 = vpop.xlane.xlu0 %1913
    %v1915 = vmax.f32 %v1881, %v1882
    %1916 = vmax.xlane.f32.xlu0 %v1915
    %v1917 = vpop.xlane.xlu0 %1916
    %v1918 = vmax.f32 %v1883, %v1884
    %1919 = vmax.xlane.f32.xlu0 %v1918
    %v1920 = vpop.xlane.xlu0 %1919
    %v1921 = vmax.f32 %v1885, %v1886
    %1922 = vmax.xlane.f32.xlu0 %v1921
    %v1923 = vpop.xlane.xlu0 %1922
    %v1924 = vmax.f32 %v1887, %v1888
    %1925 = vmax.xlane.f32.xlu0 %v1924
    %v1926 = vpop.xlane.xlu0 %1925
    %v1927 = vmax.f32 %v1889, %v1890
    %1928 = vmax.xlane.f32.xlu0 %v1927
    %v1929 = vpop.xlane.xlu0 %1928
    %v1930 = vmax.f32 %v1891, %v1892
    %1931 = vmax.xlane.f32.xlu0 %v1930
    %v1932 = vpop.xlane.xlu0 %1931
    %v1933 = vmax.f32 %v1893, %v1894
    %1934 = vmax.xlane.f32.xlu0 %v1933
    %v1935 = vpop.xlane.xlu0 %1934
    %v1936 = vmax.f32 %v1895, %v1896
    %1937 = vmax.xlane.f32.xlu0 %v1936
    %v1938 = vpop.xlane.xlu0 %1937
    %v1939 = vmax.f32 %v1897, %v1898
    %1940 = vmax.xlane.f32.xlu0 %v1939
    %v1941 = vpop.xlane.xlu0 %1940
    %v1942 = vmax.f32 %v1899, %v1900
    %1943 = vmax.xlane.f32.xlu0 %v1942
    %v1944 = vpop.xlane.xlu0 %1943
    %v1945 = vmax.f32 %v1901, %v1902
    %1946 = vmax.xlane.f32.xlu0 %v1945
    %v1947 = vpop.xlane.xlu0 %1946
    %v1948 = vmax.f32 %v1903, %v1904
    %1949 = vmax.xlane.f32.xlu0 %v1948
    %v1950 = vpop.xlane.xlu0 %1949
    %v1951 = vmax.f32 %v1905, %v1906
    %1952 = vmax.xlane.f32.xlu0 %v1951
    %v1953 = vpop.xlane.xlu0 %1952
    %v1954 = vmax.f32 %v1907, %v1908
    %1955 = vmax.xlane.f32.xlu0 %v1954
    %v1956 = vpop.xlane.xlu0 %1955
    %v1957 = vsel %vm1875, %v1911, %v1839
    %v1958 = vsel %vm1876, %v1911, %v1840
    %v1959 = vsel %vm1875, %v1914, %v1841
    %v1960 = vsel %vm1876, %v1914, %v1842
    %v1961 = vsel %vm1875, %v1917, %v1843
    %v1962 = vsel %vm1876, %v1917, %v1844
    %v1963 = vsel %vm1875, %v1920, %v1845
    %v1964 = vsel %vm1876, %v1920, %v1846
    %v1965 = vsel %vm1875, %v1923, %v1847
    %v1966 = vsel %vm1876, %v1923, %v1848
    %v1967 = vsel %vm1875, %v1926, %v1849
    %v1968 = vsel %vm1876, %v1926, %v1850
    %v1969 = vsel %vm1875, %v1929, %v1851
    %v1970 = vsel %vm1876, %v1929, %v1852
    %v1971 = vsel %vm1875, %v1932, %v1853
    %v1972 = vsel %vm1876, %v1932, %v1854
    %v1973 = vsel %vm1875, %v1935, %v1855
    %v1974 = vsel %vm1876, %v1935, %v1856
    %v1975 = vsel %vm1875, %v1938, %v1857
    %v1976 = vsel %vm1876, %v1938, %v1858
    %v1977 = vsel %vm1875, %v1941, %v1859
    %v1978 = vsel %vm1876, %v1941, %v1860
    %v1979 = vsel %vm1875, %v1944, %v1861
    %v1980 = vsel %vm1876, %v1944, %v1862
    %v1981 = vsel %vm1875, %v1947, %v1863
    %v1982 = vsel %vm1876, %v1947, %v1864
    %v1983 = vsel %vm1875, %v1950, %v1865
    %v1984 = vsel %vm1876, %v1950, %v1866
    %v1985 = vsel %vm1875, %v1953, %v1867
    %v1986 = vsel %vm1876, %v1953, %v1868
    %v1987 = vsel %vm1875, %v1956, %v1869
    %v1988 = vsel %vm1876, %v1956, %v1870
    %vm1989 = vcmp.eq.s32.totalorder %v1751, 2
    %vm1990 = vcmp.eq.s32.totalorder %v1752, 2
    %v1991 = vsel %vm1989, 1, 0
    %v1992 = vsel %vm1990, 1, 0
    %vm1993 = vcmp.eq.s32.totalorder %v1991, 1
    %vm1994 = vcmp.eq.s32.totalorder %v1992, 1
    %v1995 = vsel %vm1993, %v1547, -inf
    %v1996 = vsel %vm1994, %v1645, -inf
    %v1997 = vsel %vm1993, %v1549, -inf
    %v1998 = vsel %vm1994, %v1647, -inf
    %v1999 = vsel %vm1993, %v1552, -inf
    %v2000 = vsel %vm1994, %v1650, -inf
    %v2001 = vsel %vm1993, %v1554, -inf
    %v2002 = vsel %vm1994, %v1652, -inf
    %v2003 = vsel %vm1993, %v1557, -inf
    %v2004 = vsel %vm1994, %v1655, -inf
    %v2005 = vsel %vm1993, %v1559, -inf
    %v2006 = vsel %vm1994, %v1657, -inf
    %v2007 = vsel %vm1993, %v1562, -inf
    %v2008 = vsel %vm1994, %v1660, -inf
    %v2009 = vsel %vm1993, %v1564, -inf
    %v2010 = vsel %vm1994, %v1662, -inf
    %v2011 = vsel %vm1993, %v1567, -inf
    %v2012 = vsel %vm1994, %v1665, -inf
    %v2013 = vsel %vm1993, %v1569, -inf
    %v2014 = vsel %vm1994, %v1667, -inf
    %v2015 = vsel %vm1993, %v1572, -inf
    %v2016 = vsel %vm1994, %v1670, -inf
    %v2017 = vsel %vm1993, %v1574, -inf
    %v2018 = vsel %vm1994, %v1672, -inf
    %v2019 = vsel %vm1993, %v1577, -inf
    %v2020 = vsel %vm1994, %v1675, -inf
    %v2021 = vsel %vm1993, %v1579, -inf
    %v2022 = vsel %vm1994, %v1677, -inf
    %v2023 = vsel %vm1993, %v1582, -inf
    %v2024 = vsel %vm1994, %v1680, -inf
    %v2025 = vsel %vm1993, %v1584, -inf
    %v2026 = vsel %vm1994, %v1682, -inf
    %v2027 = vmax.f32 %v1995, %v1996
    %2028 = vmax.xlane.f32.xlu0 %v2027
    %v2029 = vpop.xlane.xlu0 %2028
    %v2030 = vmax.f32 %v1997, %v1998
    %2031 = vmax.xlane.f32.xlu0 %v2030
    %v2032 = vpop.xlane.xlu0 %2031
    %v2033 = vmax.f32 %v1999, %v2000
    %2034 = vmax.xlane.f32.xlu0 %v2033
    %v2035 = vpop.xlane.xlu0 %2034
    %v2036 = vmax.f32 %v2001, %v2002
    %2037 = vmax.xlane.f32.xlu0 %v2036
    %v2038 = vpop.xlane.xlu0 %2037
    %v2039 = vmax.f32 %v2003, %v2004
    %2040 = vmax.xlane.f32.xlu0 %v2039
    %v2041 = vpop.xlane.xlu0 %2040
    %v2042 = vmax.f32 %v2005, %v2006
    %2043 = vmax.xlane.f32.xlu0 %v2042
    %v2044 = vpop.xlane.xlu0 %2043
    %v2045 = vmax.f32 %v2007, %v2008
    %2046 = vmax.xlane.f32.xlu0 %v2045
    %v2047 = vpop.xlane.xlu0 %2046
    %v2048 = vmax.f32 %v2009, %v2010
    %2049 = vmax.xlane.f32.xlu0 %v2048
    %v2050 = vpop.xlane.xlu0 %2049
    %v2051 = vmax.f32 %v2011, %v2012
    %2052 = vmax.xlane.f32.xlu0 %v2051
    %v2053 = vpop.xlane.xlu0 %2052
    %v2054 = vmax.f32 %v2013, %v2014
    %2055 = vmax.xlane.f32.xlu0 %v2054
    %v2056 = vpop.xlane.xlu0 %2055
    %v2057 = vmax.f32 %v2015, %v2016
    %2058 = vmax.xlane.f32.xlu0 %v2057
    %v2059 = vpop.xlane.xlu0 %2058
    %v2060 = vmax.f32 %v2017, %v2018
    %2061 = vmax.xlane.f32.xlu0 %v2060
    %v2062 = vpop.xlane.xlu0 %2061
    %v2063 = vmax.f32 %v2019, %v2020
    %2064 = vmax.xlane.f32.xlu0 %v2063
    %v2065 = vpop.xlane.xlu0 %2064
    %v2066 = vmax.f32 %v2021, %v2022
    %2067 = vmax.xlane.f32.xlu0 %v2066
    %v2068 = vpop.xlane.xlu0 %2067
    %v2069 = vmax.f32 %v2023, %v2024
    %2070 = vmax.xlane.f32.xlu0 %v2069
    %v2071 = vpop.xlane.xlu0 %2070
    %v2072 = vmax.f32 %v2025, %v2026
    %2073 = vmax.xlane.f32.xlu0 %v2072
    %v2074 = vpop.xlane.xlu0 %2073
    %v2075 = vsel %vm1993, %v2029, %v1957
    %v2076 = vsel %vm1994, %v2029, %v1958
    %v2077 = vsel %vm1993, %v2032, %v1959
    %v2078 = vsel %vm1994, %v2032, %v1960
    %v2079 = vsel %vm1993, %v2035, %v1961
    %v2080 = vsel %vm1994, %v2035, %v1962
    %v2081 = vsel %vm1993, %v2038, %v1963
    %v2082 = vsel %vm1994, %v2038, %v1964
    %v2083 = vsel %vm1993, %v2041, %v1965
    %v2084 = vsel %vm1994, %v2041, %v1966
    %v2085 = vsel %vm1993, %v2044, %v1967
    %v2086 = vsel %vm1994, %v2044, %v1968
    %v2087 = vsel %vm1993, %v2047, %v1969
    %v2088 = vsel %vm1994, %v2047, %v1970
    %v2089 = vsel %vm1993, %v2050, %v1971
    %v2090 = vsel %vm1994, %v2050, %v1972
    %v2091 = vsel %vm1993, %v2053, %v1973
    %v2092 = vsel %vm1994, %v2053, %v1974
    %v2093 = vsel %vm1993, %v2056, %v1975
    %v2094 = vsel %vm1994, %v2056, %v1976
    %v2095 = vsel %vm1993, %v2059, %v1977
    %v2096 = vsel %vm1994, %v2059, %v1978
    %v2097 = vsel %vm1993, %v2062, %v1979
    %v2098 = vsel %vm1994, %v2062, %v1980
    %v2099 = vsel %vm1993, %v2065, %v1981
    %v2100 = vsel %vm1994, %v2065, %v1982
    %v2101 = vsel %vm1993, %v2068, %v1983
    %v2102 = vsel %vm1994, %v2068, %v1984
    %v2103 = vsel %vm1993, %v2071, %v1985
    %v2104 = vsel %vm1994, %v2071, %v1986
    %v2105 = vsel %vm1993, %v2074, %v1987
    %v2106 = vsel %vm1994, %v2074, %v1988
    %vm2107 = vcmp.eq.s32.totalorder %v1751, 3
    %vm2108 = vcmp.eq.s32.totalorder %v1752, 3
    %v2109 = vsel %vm2107, 1, 0
    %v2110 = vsel %vm2108, 1, 0
    %vm2111 = vcmp.eq.s32.totalorder %v2109, 1
    %vm2112 = vcmp.eq.s32.totalorder %v2110, 1
    %v2113 = vsel %vm2111, %v1547, -inf
    %v2114 = vsel %vm2112, %v1645, -inf
    %v2115 = vsel %vm2111, %v1549, -inf
    %v2116 = vsel %vm2112, %v1647, -inf
    %v2117 = vsel %vm2111, %v1552, -inf
    %v2118 = vsel %vm2112, %v1650, -inf
    %v2119 = vsel %vm2111, %v1554, -inf
    %v2120 = vsel %vm2112, %v1652, -inf
    %v2121 = vsel %vm2111, %v1557, -inf
    %v2122 = vsel %vm2112, %v1655, -inf
    %v2123 = vsel %vm2111, %v1559, -inf
    %v2124 = vsel %vm2112, %v1657, -inf
    %v2125 = vsel %vm2111, %v1562, -inf
    %v2126 = vsel %vm2112, %v1660, -inf
    %v2127 = vsel %vm2111, %v1564, -inf
    %v2128 = vsel %vm2112, %v1662, -inf
    %v2129 = vsel %vm2111, %v1567, -inf
    %v2130 = vsel %vm2112, %v1665, -inf
    %v2131 = vsel %vm2111, %v1569, -inf
    %v2132 = vsel %vm2112, %v1667, -inf
    %v2133 = vsel %vm2111, %v1572, -inf
    %v2134 = vsel %vm2112, %v1670, -inf
    %v2135 = vsel %vm2111, %v1574, -inf
    %v2136 = vsel %vm2112, %v1672, -inf
    %v2137 = vsel %vm2111, %v1577, -inf
    %v2138 = vsel %vm2112, %v1675, -inf
    %v2139 = vsel %vm2111, %v1579, -inf
    %v2140 = vsel %vm2112, %v1677, -inf
    %v2141 = vsel %vm2111, %v1582, -inf
    %v2142 = vsel %vm2112, %v1680, -inf
    %v2143 = vsel %vm2111, %v1584, -inf
    %v2144 = vsel %vm2112, %v1682, -inf
    %v2145 = vmax.f32 %v2113, %v2114
    %2146 = vmax.xlane.f32.xlu0 %v2145
    %v2147 = vpop.xlane.xlu0 %2146
    %v2148 = vmax.f32 %v2115, %v2116
    %2149 = vmax.xlane.f32.xlu0 %v2148
    %v2150 = vpop.xlane.xlu0 %2149
    %v2151 = vmax.f32 %v2117, %v2118
    %2152 = vmax.xlane.f32.xlu0 %v2151
    %v2153 = vpop.xlane.xlu0 %2152
    %v2154 = vmax.f32 %v2119, %v2120
    %2155 = vmax.xlane.f32.xlu0 %v2154
    %v2156 = vpop.xlane.xlu0 %2155
    %v2157 = vmax.f32 %v2121, %v2122
    %2158 = vmax.xlane.f32.xlu0 %v2157
    %v2159 = vpop.xlane.xlu0 %2158
    %v2160 = vmax.f32 %v2123, %v2124
    %2161 = vmax.xlane.f32.xlu0 %v2160
    %v2162 = vpop.xlane.xlu0 %2161
    %v2163 = vmax.f32 %v2125, %v2126
    %2164 = vmax.xlane.f32.xlu0 %v2163
    %v2165 = vpop.xlane.xlu0 %2164
    %v2166 = vmax.f32 %v2127, %v2128
    %2167 = vmax.xlane.f32.xlu0 %v2166
    %v2168 = vpop.xlane.xlu0 %2167
    %v2169 = vmax.f32 %v2129, %v2130
    %2170 = vmax.xlane.f32.xlu0 %v2169
    %v2171 = vpop.xlane.xlu0 %2170
    %v2172 = vmax.f32 %v2131, %v2132
    %2173 = vmax.xlane.f32.xlu0 %v2172
    %v2174 = vpop.xlane.xlu0 %2173
    %v2175 = vmax.f32 %v2133, %v2134
    %2176 = vmax.xlane.f32.xlu0 %v2175
    %v2177 = vpop.xlane.xlu0 %2176
    %v2178 = vmax.f32 %v2135, %v2136
    %2179 = vmax.xlane.f32.xlu0 %v2178
    %v2180 = vpop.xlane.xlu0 %2179
    %v2181 = vmax.f32 %v2137, %v2138
    %2182 = vmax.xlane.f32.xlu0 %v2181
    %v2183 = vpop.xlane.xlu0 %2182
    %v2184 = vmax.f32 %v2139, %v2140
    %2185 = vmax.xlane.f32.xlu0 %v2184
    %v2186 = vpop.xlane.xlu0 %2185
    %v2187 = vmax.f32 %v2141, %v2142
    %2188 = vmax.xlane.f32.xlu0 %v2187
    %v2189 = vpop.xlane.xlu0 %2188
    %v2190 = vmax.f32 %v2143, %v2144
    %2191 = vmax.xlane.f32.xlu0 %v2190
    %v2192 = vpop.xlane.xlu0 %2191
    %v2193 = vsel %vm2111, %v2147, %v2075
    %v2194 = vsel %vm2112, %v2147, %v2076
    %v2195 = vsel %vm2111, %v2150, %v2077
    %v2196 = vsel %vm2112, %v2150, %v2078
    %v2197 = vsel %vm2111, %v2153, %v2079
    %v2198 = vsel %vm2112, %v2153, %v2080
    %v2199 = vsel %vm2111, %v2156, %v2081
    %v2200 = vsel %vm2112, %v2156, %v2082
    %v2201 = vsel %vm2111, %v2159, %v2083
    %v2202 = vsel %vm2112, %v2159, %v2084
    %v2203 = vsel %vm2111, %v2162, %v2085
    %v2204 = vsel %vm2112, %v2162, %v2086
    %v2205 = vsel %vm2111, %v2165, %v2087
    %v2206 = vsel %vm2112, %v2165, %v2088
    %v2207 = vsel %vm2111, %v2168, %v2089
    %v2208 = vsel %vm2112, %v2168, %v2090
    %v2209 = vsel %vm2111, %v2171, %v2091
    %v2210 = vsel %vm2112, %v2171, %v2092
    %v2211 = vsel %vm2111, %v2174, %v2093
    %v2212 = vsel %vm2112, %v2174, %v2094
    %v2213 = vsel %vm2111, %v2177, %v2095
    %v2214 = vsel %vm2112, %v2177, %v2096
    %v2215 = vsel %vm2111, %v2180, %v2097
    %v2216 = vsel %vm2112, %v2180, %v2098
    %v2217 = vsel %vm2111, %v2183, %v2099
    %v2218 = vsel %vm2112, %v2183, %v2100
    %v2219 = vsel %vm2111, %v2186, %v2101
    %v2220 = vsel %vm2112, %v2186, %v2102
    %v2221 = vsel %vm2111, %v2189, %v2103
    %v2222 = vsel %vm2112, %v2189, %v2104
    %v2223 = vsel %vm2111, %v2192, %v2105
    %v2224 = vsel %vm2112, %v2192, %v2106
    %vm2225 = vcmp.eq.s32.totalorder %v1751, 4
    %vm2226 = vcmp.eq.s32.totalorder %v1752, 4
    %v2227 = vsel %vm2225, 1, 0
    %v2228 = vsel %vm2226, 1, 0
    %vm2229 = vcmp.eq.s32.totalorder %v2227, 1
    %vm2230 = vcmp.eq.s32.totalorder %v2228, 1
    %v2231 = vsel %vm2229, %v1547, -inf
    %v2232 = vsel %vm2230, %v1645, -inf
    %v2233 = vsel %vm2229, %v1549, -inf
    %v2234 = vsel %vm2230, %v1647, -inf
    %v2235 = vsel %vm2229, %v1552, -inf
    %v2236 = vsel %vm2230, %v1650, -inf
    %v2237 = vsel %vm2229, %v1554, -inf
    %v2238 = vsel %vm2230, %v1652, -inf
    %v2239 = vsel %vm2229, %v1557, -inf
    %v2240 = vsel %vm2230, %v1655, -inf
    %v2241 = vsel %vm2229, %v1559, -inf
    %v2242 = vsel %vm2230, %v1657, -inf
    %v2243 = vsel %vm2229, %v1562, -inf
    %v2244 = vsel %vm2230, %v1660, -inf
    %v2245 = vsel %vm2229, %v1564, -inf
    %v2246 = vsel %vm2230, %v1662, -inf
    %v2247 = vsel %vm2229, %v1567, -inf
    %v2248 = vsel %vm2230, %v1665, -inf
    %v2249 = vsel %vm2229, %v1569, -inf
    %v2250 = vsel %vm2230, %v1667, -inf
    %v2251 = vsel %vm2229, %v1572, -inf
    %v2252 = vsel %vm2230, %v1670, -inf
    %v2253 = vsel %vm2229, %v1574, -inf
    %v2254 = vsel %vm2230, %v1672, -inf
    %v2255 = vsel %vm2229, %v1577, -inf
    %v2256 = vsel %vm2230, %v1675, -inf
    %v2257 = vsel %vm2229, %v1579, -inf
    %v2258 = vsel %vm2230, %v1677, -inf
    %v2259 = vsel %vm2229, %v1582, -inf
    %v2260 = vsel %vm2230, %v1680, -inf
    %v2261 = vsel %vm2229, %v1584, -inf
    %v2262 = vsel %vm2230, %v1682, -inf
    %v2263 = vmax.f32 %v2231, %v2232
    %2264 = vmax.xlane.f32.xlu0 %v2263
    %v2265 = vpop.xlane.xlu0 %2264
    %v2266 = vmax.f32 %v2233, %v2234
    %2267 = vmax.xlane.f32.xlu0 %v2266
    %v2268 = vpop.xlane.xlu0 %2267
    %v2269 = vmax.f32 %v2235, %v2236
    %2270 = vmax.xlane.f32.xlu0 %v2269
    %v2271 = vpop.xlane.xlu0 %2270
    %v2272 = vmax.f32 %v2237, %v2238
    %2273 = vmax.xlane.f32.xlu0 %v2272
    %v2274 = vpop.xlane.xlu0 %2273
    %v2275 = vmax.f32 %v2239, %v2240
    %2276 = vmax.xlane.f32.xlu0 %v2275
    %v2277 = vpop.xlane.xlu0 %2276
    %v2278 = vmax.f32 %v2241, %v2242
    %2279 = vmax.xlane.f32.xlu0 %v2278
    %v2280 = vpop.xlane.xlu0 %2279
    %v2281 = vmax.f32 %v2243, %v2244
    %2282 = vmax.xlane.f32.xlu0 %v2281
    %v2283 = vpop.xlane.xlu0 %2282
    %v2284 = vmax.f32 %v2245, %v2246
    %2285 = vmax.xlane.f32.xlu0 %v2284
    %v2286 = vpop.xlane.xlu0 %2285
    %v2287 = vmax.f32 %v2247, %v2248
    %2288 = vmax.xlane.f32.xlu0 %v2287
    %v2289 = vpop.xlane.xlu0 %2288
    %v2290 = vmax.f32 %v2249, %v2250
    %2291 = vmax.xlane.f32.xlu0 %v2290
    %v2292 = vpop.xlane.xlu0 %2291
    %v2293 = vmax.f32 %v2251, %v2252
    %2294 = vmax.xlane.f32.xlu0 %v2293
    %v2295 = vpop.xlane.xlu0 %2294
    %v2296 = vmax.f32 %v2253, %v2254
    %2297 = vmax.xlane.f32.xlu0 %v2296
    %v2298 = vpop.xlane.xlu0 %2297
    %v2299 = vmax.f32 %v2255, %v2256
    %2300 = vmax.xlane.f32.xlu0 %v2299
    %v2301 = vpop.xlane.xlu0 %2300
    %v2302 = vmax.f32 %v2257, %v2258
    %2303 = vmax.xlane.f32.xlu0 %v2302
    %v2304 = vpop.xlane.xlu0 %2303
    %v2305 = vmax.f32 %v2259, %v2260
    %2306 = vmax.xlane.f32.xlu0 %v2305
    %v2307 = vpop.xlane.xlu0 %2306
    %v2308 = vmax.f32 %v2261, %v2262
    %2309 = vmax.xlane.f32.xlu0 %v2308
    %v2310 = vpop.xlane.xlu0 %2309
    %v2311 = vsel %vm2229, %v2265, %v2193
    %v2312 = vsel %vm2230, %v2265, %v2194
    %v2313 = vsel %vm2229, %v2268, %v2195
    %v2314 = vsel %vm2230, %v2268, %v2196
    %v2315 = vsel %vm2229, %v2271, %v2197
    %v2316 = vsel %vm2230, %v2271, %v2198
    %v2317 = vsel %vm2229, %v2274, %v2199
    %v2318 = vsel %vm2230, %v2274, %v2200
    %v2319 = vsel %vm2229, %v2277, %v2201
    %v2320 = vsel %vm2230, %v2277, %v2202
    %v2321 = vsel %vm2229, %v2280, %v2203
    %v2322 = vsel %vm2230, %v2280, %v2204
    %v2323 = vsel %vm2229, %v2283, %v2205
    %v2324 = vsel %vm2230, %v2283, %v2206
    %v2325 = vsel %vm2229, %v2286, %v2207
    %v2326 = vsel %vm2230, %v2286, %v2208
    %v2327 = vsel %vm2229, %v2289, %v2209
    %v2328 = vsel %vm2230, %v2289, %v2210
    %v2329 = vsel %vm2229, %v2292, %v2211
    %v2330 = vsel %vm2230, %v2292, %v2212
    %v2331 = vsel %vm2229, %v2295, %v2213
    %v2332 = vsel %vm2230, %v2295, %v2214
    %v2333 = vsel %vm2229, %v2298, %v2215
    %v2334 = vsel %vm2230, %v2298, %v2216
    %v2335 = vsel %vm2229, %v2301, %v2217
    %v2336 = vsel %vm2230, %v2301, %v2218
    %v2337 = vsel %vm2229, %v2304, %v2219
    %v2338 = vsel %vm2230, %v2304, %v2220
    %v2339 = vsel %vm2229, %v2307, %v2221
    %v2340 = vsel %vm2230, %v2307, %v2222
    %v2341 = vsel %vm2229, %v2310, %v2223
    %v2342 = vsel %vm2230, %v2310, %v2224
    %vm2343 = vcmp.eq.s32.totalorder %v1751, 5
    %vm2344 = vcmp.eq.s32.totalorder %v1752, 5
    %v2345 = vsel %vm2343, 1, 0
    %v2346 = vsel %vm2344, 1, 0
    %vm2347 = vcmp.eq.s32.totalorder %v2345, 1
    %vm2348 = vcmp.eq.s32.totalorder %v2346, 1
    %v2349 = vsel %vm2347, %v1547, -inf
    %v2350 = vsel %vm2348, %v1645, -inf
    %v2351 = vsel %vm2347, %v1549, -inf
    %v2352 = vsel %vm2348, %v1647, -inf
    %v2353 = vsel %vm2347, %v1552, -inf
    %v2354 = vsel %vm2348, %v1650, -inf
    %v2355 = vsel %vm2347, %v1554, -inf
    %v2356 = vsel %vm2348, %v1652, -inf
    %v2357 = vsel %vm2347, %v1557, -inf
    %v2358 = vsel %vm2348, %v1655, -inf
    %v2359 = vsel %vm2347, %v1559, -inf
    %v2360 = vsel %vm2348, %v1657, -inf
    %v2361 = vsel %vm2347, %v1562, -inf
    %v2362 = vsel %vm2348, %v1660, -inf
    %v2363 = vsel %vm2347, %v1564, -inf
    %v2364 = vsel %vm2348, %v1662, -inf
    %v2365 = vsel %vm2347, %v1567, -inf
    %v2366 = vsel %vm2348, %v1665, -inf
    %v2367 = vsel %vm2347, %v1569, -inf
    %v2368 = vsel %vm2348, %v1667, -inf
    %v2369 = vsel %vm2347, %v1572, -inf
    %v2370 = vsel %vm2348, %v1670, -inf
    %v2371 = vsel %vm2347, %v1574, -inf
    %v2372 = vsel %vm2348, %v1672, -inf
    %v2373 = vsel %vm2347, %v1577, -inf
    %v2374 = vsel %vm2348, %v1675, -inf
    %v2375 = vsel %vm2347, %v1579, -inf
    %v2376 = vsel %vm2348, %v1677, -inf
    %v2377 = vsel %vm2347, %v1582, -inf
    %v2378 = vsel %vm2348, %v1680, -inf
    %v2379 = vsel %vm2347, %v1584, -inf
    %v2380 = vsel %vm2348, %v1682, -inf
    %v2381 = vmax.f32 %v2349, %v2350
    %2382 = vmax.xlane.f32.xlu0 %v2381
    %v2383 = vpop.xlane.xlu0 %2382
    %v2384 = vmax.f32 %v2351, %v2352
    %2385 = vmax.xlane.f32.xlu0 %v2384
    %v2386 = vpop.xlane.xlu0 %2385
    %v2387 = vmax.f32 %v2353, %v2354
    %2388 = vmax.xlane.f32.xlu0 %v2387
    %v2389 = vpop.xlane.xlu0 %2388
    %v2390 = vmax.f32 %v2355, %v2356
    %2391 = vmax.xlane.f32.xlu0 %v2390
    %v2392 = vpop.xlane.xlu0 %2391
    %v2393 = vmax.f32 %v2357, %v2358
    %2394 = vmax.xlane.f32.xlu0 %v2393
    %v2395 = vpop.xlane.xlu0 %2394
    %v2396 = vmax.f32 %v2359, %v2360
    %2397 = vmax.xlane.f32.xlu0 %v2396
    %v2398 = vpop.xlane.xlu0 %2397
    %v2399 = vmax.f32 %v2361, %v2362
    %2400 = vmax.xlane.f32.xlu0 %v2399
    %v2401 = vpop.xlane.xlu0 %2400
    %v2402 = vmax.f32 %v2363, %v2364
    %2403 = vmax.xlane.f32.xlu0 %v2402
    %v2404 = vpop.xlane.xlu0 %2403
    %v2405 = vmax.f32 %v2365, %v2366
    %2406 = vmax.xlane.f32.xlu0 %v2405
    %v2407 = vpop.xlane.xlu0 %2406
    %v2408 = vmax.f32 %v2367, %v2368
    %2409 = vmax.xlane.f32.xlu0 %v2408
    %v2410 = vpop.xlane.xlu0 %2409
    %v2411 = vmax.f32 %v2369, %v2370
    %2412 = vmax.xlane.f32.xlu0 %v2411
    %v2413 = vpop.xlane.xlu0 %2412
    %v2414 = vmax.f32 %v2371, %v2372
    %2415 = vmax.xlane.f32.xlu0 %v2414
    %v2416 = vpop.xlane.xlu0 %2415
    %v2417 = vmax.f32 %v2373, %v2374
    %2418 = vmax.xlane.f32.xlu0 %v2417
    %v2419 = vpop.xlane.xlu0 %2418
    %v2420 = vmax.f32 %v2375, %v2376
    %2421 = vmax.xlane.f32.xlu0 %v2420
    %v2422 = vpop.xlane.xlu0 %2421
    %v2423 = vmax.f32 %v2377, %v2378
    %2424 = vmax.xlane.f32.xlu0 %v2423
    %v2425 = vpop.xlane.xlu0 %2424
    %v2426 = vmax.f32 %v2379, %v2380
    %2427 = vmax.xlane.f32.xlu0 %v2426
    %v2428 = vpop.xlane.xlu0 %2427
    %v2429 = vsel %vm2347, %v2383, %v2311
    %v2430 = vsel %vm2348, %v2383, %v2312
    %v2431 = vsel %vm2347, %v2386, %v2313
    %v2432 = vsel %vm2348, %v2386, %v2314
    %v2433 = vsel %vm2347, %v2389, %v2315
    %v2434 = vsel %vm2348, %v2389, %v2316
    %v2435 = vsel %vm2347, %v2392, %v2317
    %v2436 = vsel %vm2348, %v2392, %v2318
    %v2437 = vsel %vm2347, %v2395, %v2319
    %v2438 = vsel %vm2348, %v2395, %v2320
    %v2439 = vsel %vm2347, %v2398, %v2321
    %v2440 = vsel %vm2348, %v2398, %v2322
    %v2441 = vsel %vm2347, %v2401, %v2323
    %v2442 = vsel %vm2348, %v2401, %v2324
    %v2443 = vsel %vm2347, %v2404, %v2325
    %v2444 = vsel %vm2348, %v2404, %v2326
    %v2445 = vsel %vm2347, %v2407, %v2327
    %v2446 = vsel %vm2348, %v2407, %v2328
    %v2447 = vsel %vm2347, %v2410, %v2329
    %v2448 = vsel %vm2348, %v2410, %v2330
    %v2449 = vsel %vm2347, %v2413, %v2331
    %v2450 = vsel %vm2348, %v2413, %v2332
    %v2451 = vsel %vm2347, %v2416, %v2333
    %v2452 = vsel %vm2348, %v2416, %v2334
    %v2453 = vsel %vm2347, %v2419, %v2335
    %v2454 = vsel %vm2348, %v2419, %v2336
    %v2455 = vsel %vm2347, %v2422, %v2337
    %v2456 = vsel %vm2348, %v2422, %v2338
    %v2457 = vsel %vm2347, %v2425, %v2339
    %v2458 = vsel %vm2348, %v2425, %v2340
    %v2459 = vsel %vm2347, %v2428, %v2341
    %v2460 = vsel %vm2348, %v2428, %v2342
    %vm2461 = vcmp.eq.s32.totalorder %v1751, 6
    %vm2462 = vcmp.eq.s32.totalorder %v1752, 6
    %v2463 = vsel %vm2461, 1, 0
    %v2464 = vsel %vm2462, 1, 0
    %vm2465 = vcmp.eq.s32.totalorder %v2463, 1
    %vm2466 = vcmp.eq.s32.totalorder %v2464, 1
    %v2467 = vsel %vm2465, %v1547, -inf
    %v2468 = vsel %vm2466, %v1645, -inf
    %v2469 = vsel %vm2465, %v1549, -inf
    %v2470 = vsel %vm2466, %v1647, -inf
    %v2471 = vsel %vm2465, %v1552, -inf
    %v2472 = vsel %vm2466, %v1650, -inf
    %v2473 = vsel %vm2465, %v1554, -inf
    %v2474 = vsel %vm2466, %v1652, -inf
    %v2475 = vsel %vm2465, %v1557, -inf
    %v2476 = vsel %vm2466, %v1655, -inf
    %v2477 = vsel %vm2465, %v1559, -inf
    %v2478 = vsel %vm2466, %v1657, -inf
    %v2479 = vsel %vm2465, %v1562, -inf
    %v2480 = vsel %vm2466, %v1660, -inf
    %v2481 = vsel %vm2465, %v1564, -inf
    %v2482 = vsel %vm2466, %v1662, -inf
    %v2483 = vsel %vm2465, %v1567, -inf
    %v2484 = vsel %vm2466, %v1665, -inf
    %v2485 = vsel %vm2465, %v1569, -inf
    %v2486 = vsel %vm2466, %v1667, -inf
    %v2487 = vsel %vm2465, %v1572, -inf
    %v2488 = vsel %vm2466, %v1670, -inf
    %v2489 = vsel %vm2465, %v1574, -inf
    %v2490 = vsel %vm2466, %v1672, -inf
    %v2491 = vsel %vm2465, %v1577, -inf
    %v2492 = vsel %vm2466, %v1675, -inf
    %v2493 = vsel %vm2465, %v1579, -inf
    %v2494 = vsel %vm2466, %v1677, -inf
    %v2495 = vsel %vm2465, %v1582, -inf
    %v2496 = vsel %vm2466, %v1680, -inf
    %v2497 = vsel %vm2465, %v1584, -inf
    %v2498 = vsel %vm2466, %v1682, -inf
    %v2499 = vmax.f32 %v2467, %v2468
    %2500 = vmax.xlane.f32.xlu0 %v2499
    %v2501 = vpop.xlane.xlu0 %2500
    %v2502 = vmax.f32 %v2469, %v2470
    %2503 = vmax.xlane.f32.xlu0 %v2502
    %v2504 = vpop.xlane.xlu0 %2503
    %v2505 = vmax.f32 %v2471, %v2472
    %2506 = vmax.xlane.f32.xlu0 %v2505
    %v2507 = vpop.xlane.xlu0 %2506
    %v2508 = vmax.f32 %v2473, %v2474
    %2509 = vmax.xlane.f32.xlu0 %v2508
    %v2510 = vpop.xlane.xlu0 %2509
    %v2511 = vmax.f32 %v2475, %v2476
    %2512 = vmax.xlane.f32.xlu0 %v2511
    %v2513 = vpop.xlane.xlu0 %2512
    %v2514 = vmax.f32 %v2477, %v2478
    %2515 = vmax.xlane.f32.xlu0 %v2514
    %v2516 = vpop.xlane.xlu0 %2515
    %v2517 = vmax.f32 %v2479, %v2480
    %2518 = vmax.xlane.f32.xlu0 %v2517
    %v2519 = vpop.xlane.xlu0 %2518
    %v2520 = vmax.f32 %v2481, %v2482
    %2521 = vmax.xlane.f32.xlu0 %v2520
    %v2522 = vpop.xlane.xlu0 %2521
    %v2523 = vmax.f32 %v2483, %v2484
    %2524 = vmax.xlane.f32.xlu0 %v2523
    %v2525 = vpop.xlane.xlu0 %2524
    %v2526 = vmax.f32 %v2485, %v2486
    %2527 = vmax.xlane.f32.xlu0 %v2526
    %v2528 = vpop.xlane.xlu0 %2527
    %v2529 = vmax.f32 %v2487, %v2488
    %2530 = vmax.xlane.f32.xlu0 %v2529
    %v2531 = vpop.xlane.xlu0 %2530
    %v2532 = vmax.f32 %v2489, %v2490
    %2533 = vmax.xlane.f32.xlu0 %v2532
    %v2534 = vpop.xlane.xlu0 %2533
    %v2535 = vmax.f32 %v2491, %v2492
    %2536 = vmax.xlane.f32.xlu0 %v2535
    %v2537 = vpop.xlane.xlu0 %2536
    %v2538 = vmax.f32 %v2493, %v2494
    %2539 = vmax.xlane.f32.xlu0 %v2538
    %v2540 = vpop.xlane.xlu0 %2539
    %v2541 = vmax.f32 %v2495, %v2496
    %2542 = vmax.xlane.f32.xlu0 %v2541
    %v2543 = vpop.xlane.xlu0 %2542
    %v2544 = vmax.f32 %v2497, %v2498
    %2545 = vmax.xlane.f32.xlu0 %v2544
    %v2546 = vpop.xlane.xlu0 %2545
    %v2547 = vsel %vm2465, %v2501, %v2429
    %v2548 = vsel %vm2466, %v2501, %v2430
    %v2549 = vsel %vm2465, %v2504, %v2431
    %v2550 = vsel %vm2466, %v2504, %v2432
    %v2551 = vsel %vm2465, %v2507, %v2433
    %v2552 = vsel %vm2466, %v2507, %v2434
    %v2553 = vsel %vm2465, %v2510, %v2435
    %v2554 = vsel %vm2466, %v2510, %v2436
    %v2555 = vsel %vm2465, %v2513, %v2437
    %v2556 = vsel %vm2466, %v2513, %v2438
    %v2557 = vsel %vm2465, %v2516, %v2439
    %v2558 = vsel %vm2466, %v2516, %v2440
    %v2559 = vsel %vm2465, %v2519, %v2441
    %v2560 = vsel %vm2466, %v2519, %v2442
    %v2561 = vsel %vm2465, %v2522, %v2443
    %v2562 = vsel %vm2466, %v2522, %v2444
    %v2563 = vsel %vm2465, %v2525, %v2445
    %v2564 = vsel %vm2466, %v2525, %v2446
    %v2565 = vsel %vm2465, %v2528, %v2447
    %v2566 = vsel %vm2466, %v2528, %v2448
    %v2567 = vsel %vm2465, %v2531, %v2449
    %v2568 = vsel %vm2466, %v2531, %v2450
    %v2569 = vsel %vm2465, %v2534, %v2451
    %v2570 = vsel %vm2466, %v2534, %v2452
    %v2571 = vsel %vm2465, %v2537, %v2453
    %v2572 = vsel %vm2466, %v2537, %v2454
    %v2573 = vsel %vm2465, %v2540, %v2455
    %v2574 = vsel %vm2466, %v2540, %v2456
    %v2575 = vsel %vm2465, %v2543, %v2457
    %v2576 = vsel %vm2466, %v2543, %v2458
    %v2577 = vsel %vm2465, %v2546, %v2459
    %v2578 = vsel %vm2466, %v2546, %v2460
    %vm2579 = vcmp.eq.s32.totalorder %v1751, 7
    %vm2580 = vcmp.eq.s32.totalorder %v1752, 7
    %v2581 = vsel %vm2579, 1, 0
    %v2582 = vsel %vm2580, 1, 0
    %vm2583 = vcmp.eq.s32.totalorder %v2581, 1
    %vm2584 = vcmp.eq.s32.totalorder %v2582, 1
    %v2585 = vsel %vm2583, %v1547, -inf
    %v2586 = vsel %vm2584, %v1645, -inf
    %v2587 = vsel %vm2583, %v1549, -inf
    %v2588 = vsel %vm2584, %v1647, -inf
    %v2589 = vsel %vm2583, %v1552, -inf
    %v2590 = vsel %vm2584, %v1650, -inf
    %v2591 = vsel %vm2583, %v1554, -inf
    %v2592 = vsel %vm2584, %v1652, -inf
    %v2593 = vsel %vm2583, %v1557, -inf
    %v2594 = vsel %vm2584, %v1655, -inf
    %v2595 = vsel %vm2583, %v1559, -inf
    %v2596 = vsel %vm2584, %v1657, -inf
    %v2597 = vsel %vm2583, %v1562, -inf
    %v2598 = vsel %vm2584, %v1660, -inf
    %v2599 = vsel %vm2583, %v1564, -inf
    %v2600 = vsel %vm2584, %v1662, -inf
    %v2601 = vsel %vm2583, %v1567, -inf
    %v2602 = vsel %vm2584, %v1665, -inf
    %v2603 = vsel %vm2583, %v1569, -inf
    %v2604 = vsel %vm2584, %v1667, -inf
    %v2605 = vsel %vm2583, %v1572, -inf
    %v2606 = vsel %vm2584, %v1670, -inf
    %v2607 = vsel %vm2583, %v1574, -inf
    %v2608 = vsel %vm2584, %v1672, -inf
    %v2609 = vsel %vm2583, %v1577, -inf
    %v2610 = vsel %vm2584, %v1675, -inf
    %v2611 = vsel %vm2583, %v1579, -inf
    %v2612 = vsel %vm2584, %v1677, -inf
    %v2613 = vsel %vm2583, %v1582, -inf
    %v2614 = vsel %vm2584, %v1680, -inf
    %v2615 = vsel %vm2583, %v1584, -inf
    %v2616 = vsel %vm2584, %v1682, -inf
    %v2617 = vmax.f32 %v2585, %v2586
    %2618 = vmax.xlane.f32.xlu0 %v2617
    %v2619 = vpop.xlane.xlu0 %2618
    %v2620 = vmax.f32 %v2587, %v2588
    %2621 = vmax.xlane.f32.xlu0 %v2620
    %v2622 = vpop.xlane.xlu0 %2621
    %v2623 = vmax.f32 %v2589, %v2590
    %2624 = vmax.xlane.f32.xlu0 %v2623
    %v2625 = vpop.xlane.xlu0 %2624
    %v2626 = vmax.f32 %v2591, %v2592
    %2627 = vmax.xlane.f32.xlu0 %v2626
    %v2628 = vpop.xlane.xlu0 %2627
    %v2629 = vmax.f32 %v2593, %v2594
    %2630 = vmax.xlane.f32.xlu0 %v2629
    %v2631 = vpop.xlane.xlu0 %2630
    %v2632 = vmax.f32 %v2595, %v2596
    %2633 = vmax.xlane.f32.xlu0 %v2632
    %v2634 = vpop.xlane.xlu0 %2633
    %v2635 = vmax.f32 %v2597, %v2598
    %2636 = vmax.xlane.f32.xlu0 %v2635
    %v2637 = vpop.xlane.xlu0 %2636
    %v2638 = vmax.f32 %v2599, %v2600
    %2639 = vmax.xlane.f32.xlu0 %v2638
    %v2640 = vpop.xlane.xlu0 %2639
    %v2641 = vmax.f32 %v2601, %v2602
    %2642 = vmax.xlane.f32.xlu0 %v2641
    %v2643 = vpop.xlane.xlu0 %2642
    %v2644 = vmax.f32 %v2603, %v2604
    %2645 = vmax.xlane.f32.xlu0 %v2644
    %v2646 = vpop.xlane.xlu0 %2645
    %v2647 = vmax.f32 %v2605, %v2606
    %2648 = vmax.xlane.f32.xlu0 %v2647
    %v2649 = vpop.xlane.xlu0 %2648
    %v2650 = vmax.f32 %v2607, %v2608
    %2651 = vmax.xlane.f32.xlu0 %v2650
    %v2652 = vpop.xlane.xlu0 %2651
    %v2653 = vmax.f32 %v2609, %v2610
    %2654 = vmax.xlane.f32.xlu0 %v2653
    %v2655 = vpop.xlane.xlu0 %2654
    %v2656 = vmax.f32 %v2611, %v2612
    %2657 = vmax.xlane.f32.xlu0 %v2656
    %v2658 = vpop.xlane.xlu0 %2657
    %v2659 = vmax.f32 %v2613, %v2614
    %2660 = vmax.xlane.f32.xlu0 %v2659
    %v2661 = vpop.xlane.xlu0 %2660
    %v2662 = vmax.f32 %v2615, %v2616
    %2663 = vmax.xlane.f32.xlu0 %v2662
    %v2664 = vpop.xlane.xlu0 %2663
    %v2665 = vsel %vm2583, %v2619, %v2547
    %v2666 = vsel %vm2584, %v2619, %v2548
    %v2667 = vsel %vm2583, %v2622, %v2549
    %v2668 = vsel %vm2584, %v2622, %v2550
    %v2669 = vsel %vm2583, %v2625, %v2551
    %v2670 = vsel %vm2584, %v2625, %v2552
    %v2671 = vsel %vm2583, %v2628, %v2553
    %v2672 = vsel %vm2584, %v2628, %v2554
    %v2673 = vsel %vm2583, %v2631, %v2555
    %v2674 = vsel %vm2584, %v2631, %v2556
    %v2675 = vsel %vm2583, %v2634, %v2557
    %v2676 = vsel %vm2584, %v2634, %v2558
    %v2677 = vsel %vm2583, %v2637, %v2559
    %v2678 = vsel %vm2584, %v2637, %v2560
    %v2679 = vsel %vm2583, %v2640, %v2561
    %v2680 = vsel %vm2584, %v2640, %v2562
    %v2681 = vsel %vm2583, %v2643, %v2563
    %v2682 = vsel %vm2584, %v2643, %v2564
    %v2683 = vsel %vm2583, %v2646, %v2565
    %v2684 = vsel %vm2584, %v2646, %v2566
    %v2685 = vsel %vm2583, %v2649, %v2567
    %v2686 = vsel %vm2584, %v2649, %v2568
    %v2687 = vsel %vm2583, %v2652, %v2569
    %v2688 = vsel %vm2584, %v2652, %v2570
    %v2689 = vsel %vm2583, %v2655, %v2571
    %v2690 = vsel %vm2584, %v2655, %v2572
    %v2691 = vsel %vm2583, %v2658, %v2573
    %v2692 = vsel %vm2584, %v2658, %v2574
    %v2693 = vsel %vm2583, %v2661, %v2575
    %v2694 = vsel %vm2584, %v2661, %v2576
    %v2695 = vsel %vm2583, %v2664, %v2577
    %v2696 = vsel %vm2584, %v2664, %v2578
    %v2697 = vsub.f32 %v1547, %v2665
    %v2698 = vsub.f32 %v1645, %v2666
    %v2699 = vsub.f32 %v1549, %v2667
    %v2700 = vsub.f32 %v1647, %v2668
    %v2701 = vsub.f32 %v1552, %v2669
    %v2702 = vsub.f32 %v1650, %v2670
    %v2703 = vsub.f32 %v1554, %v2671
    %v2704 = vsub.f32 %v1652, %v2672
    %v2705 = vsub.f32 %v1557, %v2673
    %v2706 = vsub.f32 %v1655, %v2674
    %v2707 = vsub.f32 %v1559, %v2675
    %v2708 = vsub.f32 %v1657, %v2676
    %v2709 = vsub.f32 %v1562, %v2677
    %v2710 = vsub.f32 %v1660, %v2678
    %v2711 = vsub.f32 %v1564, %v2679
    %v2712 = vsub.f32 %v1662, %v2680
    %v2713 = vsub.f32 %v1567, %v2681
    %v2714 = vsub.f32 %v1665, %v2682
    %v2715 = vsub.f32 %v1569, %v2683
    %v2716 = vsub.f32 %v1667, %v2684
    %v2717 = vsub.f32 %v1572, %v2685
    %v2718 = vsub.f32 %v1670, %v2686
    %v2719 = vsub.f32 %v1574, %v2687
    %v2720 = vsub.f32 %v1672, %v2688
    %v2721 = vsub.f32 %v1577, %v2689
    %v2722 = vsub.f32 %v1675, %v2690
    %v2723 = vsub.f32 %v1579, %v2691
    %v2724 = vsub.f32 %v1677, %v2692
    %v2725 = vsub.f32 %v1582, %v2693
    %v2726 = vsub.f32 %v1680, %v2694
    %v2727 = vsub.f32 %v1584, %v2695
    %v2728 = vsub.f32 %v1682, %v2696
    %v2729 = vmul.f32 %v2697, 1.442695
    %v2730 = vpow.pop %v2729
    %v2731 = vmul.f32 %v2698, 1.442695
    %v2732 = vpow.pop %v2731
    %v2733 = vmul.f32 %v2699, 1.442695
    %v2734 = vpow.pop %v2733
    %v2735 = vmul.f32 %v2700, 1.442695
    %v2736 = vpow.pop %v2735
    %v2737 = vmul.f32 %v2701, 1.442695
    %v2738 = vpow.pop %v2737
    %v2739 = vmul.f32 %v2702, 1.442695
    %v2740 = vpow.pop %v2739
    %v2741 = vmul.f32 %v2703, 1.442695
    %v2742 = vpow.pop %v2741
    %v2743 = vmul.f32 %v2704, 1.442695
    %v2744 = vpow.pop %v2743
    %v2745 = vmul.f32 %v2705, 1.442695
    %v2746 = vpow.pop %v2745
    %v2747 = vmul.f32 %v2706, 1.442695
    %v2748 = vpow.pop %v2747
    %v2749 = vmul.f32 %v2707, 1.442695
    %v2750 = vpow.pop %v2749
    %v2751 = vmul.f32 %v2708, 1.442695
    %v2752 = vpow.pop %v2751
    %v2753 = vmul.f32 %v2709, 1.442695
    %v2754 = vpow.pop %v2753
    %v2755 = vmul.f32 %v2710, 1.442695
    %v2756 = vpow.pop %v2755
    %v2757 = vmul.f32 %v2711, 1.442695
    %v2758 = vpow.pop %v2757
    %v2759 = vmul.f32 %v2712, 1.442695
    %v2760 = vpow.pop %v2759
    %v2761 = vmul.f32 %v2713, 1.442695
    %v2762 = vpow.pop %v2761
    %v2763 = vmul.f32 %v2714, 1.442695
    %v2764 = vpow.pop %v2763
    %v2765 = vmul.f32 %v2715, 1.442695
    %v2766 = vpow.pop %v2765
    %v2767 = vmul.f32 %v2716, 1.442695
    %v2768 = vpow.pop %v2767
    %v2769 = vmul.f32 %v2717, 1.442695
    %v2770 = vpow.pop %v2769
    %v2771 = vmul.f32 %v2718, 1.442695
    %v2772 = vpow.pop %v2771
    %v2773 = vmul.f32 %v2719, 1.442695
    %v2774 = vpow.pop %v2773
    %v2775 = vmul.f32 %v2720, 1.442695
    %v2776 = vpow.pop %v2775
    %v2777 = vmul.f32 %v2721, 1.442695
    %v2778 = vpow.pop %v2777
    %v2779 = vmul.f32 %v2722, 1.442695
    %v2780 = vpow.pop %v2779
    %v2781 = vmul.f32 %v2723, 1.442695
    %v2782 = vpow.pop %v2781
    %v2783 = vmul.f32 %v2724, 1.442695
    %v2784 = vpow.pop %v2783
    %v2785 = vmul.f32 %v2725, 1.442695
    %v2786 = vpow.pop %v2785
    %v2787 = vmul.f32 %v2726, 1.442695
    %v2788 = vpow.pop %v2787
    %v2789 = vmul.f32 %v2727, 1.442695
    %v2790 = vpow.pop %v2789
    %v2791 = vmul.f32 %v2728, 1.442695
    %v2792 = vpow.pop %v2791
    %v2793 = vlaneseq
    %v2794 = vshrl.u32 %v2793, 7
    %v2795 = vadd.s32 %v2794, 8
    %v2796 = vadd.s32 %v2794, 16
    %v2797 = vadd.s32 %v2794, 24
    %v2798 = vadd.s32 %v2794, 32
    %v2799 = vadd.s32 %v2794, 40
    %v2800 = vadd.s32 %v2794, 48
    %v2801 = vadd.s32 %v2794, 56
    %v2802 = vadd.s32 %v2794, 64
    %v2803 = vadd.s32 %v2794, 72
    %v2804 = vadd.s32 %v2794, 80
    %v2805 = vadd.s32 %v2794, 88
    %v2806 = vadd.s32 %v2794, 96
    %v2807 = vadd.s32 %v2794, 104
    %v2808 = vadd.s32 %v2794, 112
    %v2809 = vadd.s32 %v2794, 120
    %v2810 = vadd.s32 %v2794, 128
    %v2811 = vadd.s32 %v2794, 136
    %v2812 = vadd.s32 %v2794, 144
    %v2813 = vadd.s32 %v2794, 152
    %v2814 = vadd.s32 %v2794, 160
    %v2815 = vadd.s32 %v2794, 168
    %v2816 = vadd.s32 %v2794, 176
    %v2817 = vadd.s32 %v2794, 184
    %v2818 = vadd.s32 %v2794, 192
    %v2819 = vadd.s32 %v2794, 200
    %v2820 = vadd.s32 %v2794, 208
    %v2821 = vadd.s32 %v2794, 216
    %v2822 = vadd.s32 %v2794, 224
    %v2823 = vadd.s32 %v2794, 232
    %v2824 = vadd.s32 %v2794, 240
    %v2825 = vadd.s32 %v2794, 248
    %v2826 = vshra.s32 %v2794, 5
    %v2827 = vshra.s32 %v2795, 5
    %v2828 = vshra.s32 %v2796, 5
    %v2829 = vshra.s32 %v2797, 5
    %v2830 = vshra.s32 %v2798, 5
    %v2831 = vshra.s32 %v2799, 5
    %v2832 = vshra.s32 %v2800, 5
    %v2833 = vshra.s32 %v2801, 5
    %v2834 = vshra.s32 %v2802, 5
    %v2835 = vshra.s32 %v2803, 5
    %v2836 = vshra.s32 %v2804, 5
    %v2837 = vshra.s32 %v2805, 5
    %v2838 = vshra.s32 %v2806, 5
    %v2839 = vshra.s32 %v2807, 5
    %v2840 = vshra.s32 %v2808, 5
    %v2841 = vshra.s32 %v2809, 5
    %v2842 = vshra.s32 %v2810, 5
    %v2843 = vshra.s32 %v2811, 5
    %v2844 = vshra.s32 %v2812, 5
    %v2845 = vshra.s32 %v2813, 5
    %v2846 = vshra.s32 %v2814, 5
    %v2847 = vshra.s32 %v2815, 5
    %v2848 = vshra.s32 %v2816, 5
    %v2849 = vshra.s32 %v2817, 5
    %v2850 = vshra.s32 %v2818, 5
    %v2851 = vshra.s32 %v2819, 5
    %v2852 = vshra.s32 %v2820, 5
    %v2853 = vshra.s32 %v2821, 5
    %v2854 = vshra.s32 %v2822, 5
    %v2855 = vshra.s32 %v2823, 5
    %v2856 = vshra.s32 %v2824, 5
    %v2857 = vshra.s32 %v2825, 5
    %vm2858 = vcmp.eq.s32.totalorder %v2826, %v1751
    %vm2859 = vcmp.eq.s32.totalorder %v2826, %v1752
    %vm2860 = vcmp.eq.s32.totalorder %v2827, %v1751
    %vm2861 = vcmp.eq.s32.totalorder %v2827, %v1752
    %vm2862 = vcmp.eq.s32.totalorder %v2828, %v1751
    %vm2863 = vcmp.eq.s32.totalorder %v2828, %v1752
    %vm2864 = vcmp.eq.s32.totalorder %v2829, %v1751
    %vm2865 = vcmp.eq.s32.totalorder %v2829, %v1752
    %vm2866 = vcmp.eq.s32.totalorder %v2830, %v1751
    %vm2867 = vcmp.eq.s32.totalorder %v2830, %v1752
    %vm2868 = vcmp.eq.s32.totalorder %v2831, %v1751
    %vm2869 = vcmp.eq.s32.totalorder %v2831, %v1752
    %vm2870 = vcmp.eq.s32.totalorder %v2832, %v1751
    %vm2871 = vcmp.eq.s32.totalorder %v2832, %v1752
    %vm2872 = vcmp.eq.s32.totalorder %v2833, %v1751
    %vm2873 = vcmp.eq.s32.totalorder %v2833, %v1752
    %vm2874 = vcmp.eq.s32.totalorder %v2834, %v1751
    %vm2875 = vcmp.eq.s32.totalorder %v2834, %v1752
    %vm2876 = vcmp.eq.s32.totalorder %v2835, %v1751
    %vm2877 = vcmp.eq.s32.totalorder %v2835, %v1752
    %vm2878 = vcmp.eq.s32.totalorder %v2836, %v1751
    %vm2879 = vcmp.eq.s32.totalorder %v2836, %v1752
    %vm2880 = vcmp.eq.s32.totalorder %v2837, %v1751
    %vm2881 = vcmp.eq.s32.totalorder %v2837, %v1752
    %vm2882 = vcmp.eq.s32.totalorder %v2838, %v1751
    %vm2883 = vcmp.eq.s32.totalorder %v2838, %v1752
    %vm2884 = vcmp.eq.s32.totalorder %v2839, %v1751
    %vm2885 = vcmp.eq.s32.totalorder %v2839, %v1752
    %vm2886 = vcmp.eq.s32.totalorder %v2840, %v1751
    %vm2887 = vcmp.eq.s32.totalorder %v2840, %v1752
    %vm2888 = vcmp.eq.s32.totalorder %v2841, %v1751
    %vm2889 = vcmp.eq.s32.totalorder %v2841, %v1752
    %vm2890 = vcmp.eq.s32.totalorder %v2842, %v1751
    %vm2891 = vcmp.eq.s32.totalorder %v2842, %v1752
    %vm2892 = vcmp.eq.s32.totalorder %v2843, %v1751
    %vm2893 = vcmp.eq.s32.totalorder %v2843, %v1752
    %vm2894 = vcmp.eq.s32.totalorder %v2844, %v1751
    %vm2895 = vcmp.eq.s32.totalorder %v2844, %v1752
    %vm2896 = vcmp.eq.s32.totalorder %v2845, %v1751
    %vm2897 = vcmp.eq.s32.totalorder %v2845, %v1752
    %vm2898 = vcmp.eq.s32.totalorder %v2846, %v1751
    %vm2899 = vcmp.eq.s32.totalorder %v2846, %v1752
    %vm2900 = vcmp.eq.s32.totalorder %v2847, %v1751
    %vm2901 = vcmp.eq.s32.totalorder %v2847, %v1752
    %vm2902 = vcmp.eq.s32.totalorder %v2848, %v1751
    %vm2903 = vcmp.eq.s32.totalorder %v2848, %v1752
    %vm2904 = vcmp.eq.s32.totalorder %v2849, %v1751
    %vm2905 = vcmp.eq.s32.totalorder %v2849, %v1752
    %vm2906 = vcmp.eq.s32.totalorder %v2850, %v1751
    %vm2907 = vcmp.eq.s32.totalorder %v2850, %v1752
    %vm2908 = vcmp.eq.s32.totalorder %v2851, %v1751
    %vm2909 = vcmp.eq.s32.totalorder %v2851, %v1752
    %vm2910 = vcmp.eq.s32.totalorder %v2852, %v1751
    %vm2911 = vcmp.eq.s32.totalorder %v2852, %v1752
    %vm2912 = vcmp.eq.s32.totalorder %v2853, %v1751
    %vm2913 = vcmp.eq.s32.totalorder %v2853, %v1752
    %vm2914 = vcmp.eq.s32.totalorder %v2854, %v1751
    %vm2915 = vcmp.eq.s32.totalorder %v2854, %v1752
    %vm2916 = vcmp.eq.s32.totalorder %v2855, %v1751
    %vm2917 = vcmp.eq.s32.totalorder %v2855, %v1752
    %vm2918 = vcmp.eq.s32.totalorder %v2856, %v1751
    %vm2919 = vcmp.eq.s32.totalorder %v2856, %v1752
    %vm2920 = vcmp.eq.s32.totalorder %v2857, %v1751
    %vm2921 = vcmp.eq.s32.totalorder %v2857, %v1752
    %v2922 = vsel %vm2858, 1, 0
    %v2923 = vsel %vm2859, 1, 0
    %v2924 = vsel %vm2860, 1, 0
    %v2925 = vsel %vm2861, 1, 0
    %v2926 = vsel %vm2862, 1, 0
    %v2927 = vsel %vm2863, 1, 0
    %v2928 = vsel %vm2864, 1, 0
    %v2929 = vsel %vm2865, 1, 0
    %v2930 = vsel %vm2866, 1, 0
    %v2931 = vsel %vm2867, 1, 0
    %v2932 = vsel %vm2868, 1, 0
    %v2933 = vsel %vm2869, 1, 0
    %v2934 = vsel %vm2870, 1, 0
    %v2935 = vsel %vm2871, 1, 0
    %v2936 = vsel %vm2872, 1, 0
    %v2937 = vsel %vm2873, 1, 0
    %v2938 = vsel %vm2874, 1, 0
    %v2939 = vsel %vm2875, 1, 0
    %v2940 = vsel %vm2876, 1, 0
    %v2941 = vsel %vm2877, 1, 0
    %v2942 = vsel %vm2878, 1, 0
    %v2943 = vsel %vm2879, 1, 0
    %v2944 = vsel %vm2880, 1, 0
    %v2945 = vsel %vm2881, 1, 0
    %v2946 = vsel %vm2882, 1, 0
    %v2947 = vsel %vm2883, 1, 0
    %v2948 = vsel %vm2884, 1, 0
    %v2949 = vsel %vm2885, 1, 0
    %v2950 = vsel %vm2886, 1, 0
    %v2951 = vsel %vm2887, 1, 0
    %v2952 = vsel %vm2888, 1, 0
    %v2953 = vsel %vm2889, 1, 0
    %v2954 = vsel %vm2890, 1, 0
    %v2955 = vsel %vm2891, 1, 0
    %v2956 = vsel %vm2892, 1, 0
    %v2957 = vsel %vm2893, 1, 0
    %v2958 = vsel %vm2894, 1, 0
    %v2959 = vsel %vm2895, 1, 0
    %v2960 = vsel %vm2896, 1, 0
    %v2961 = vsel %vm2897, 1, 0
    %v2962 = vsel %vm2898, 1, 0
    %v2963 = vsel %vm2899, 1, 0
    %v2964 = vsel %vm2900, 1, 0
    %v2965 = vsel %vm2901, 1, 0
    %v2966 = vsel %vm2902, 1, 0
    %v2967 = vsel %vm2903, 1, 0
    %v2968 = vsel %vm2904, 1, 0
    %v2969 = vsel %vm2905, 1, 0
    %v2970 = vsel %vm2906, 1, 0
    %v2971 = vsel %vm2907, 1, 0
    %v2972 = vsel %vm2908, 1, 0
    %v2973 = vsel %vm2909, 1, 0
    %v2974 = vsel %vm2910, 1, 0
    %v2975 = vsel %vm2911, 1, 0
    %v2976 = vsel %vm2912, 1, 0
    %v2977 = vsel %vm2913, 1, 0
    %v2978 = vsel %vm2914, 1, 0
    %v2979 = vsel %vm2915, 1, 0
    %v2980 = vsel %vm2916, 1, 0
    %v2981 = vsel %vm2917, 1, 0
    %v2982 = vsel %vm2918, 1, 0
    %v2983 = vsel %vm2919, 1, 0
    %v2984 = vsel %vm2920, 1, 0
    %v2985 = vsel %vm2921, 1, 0
    %v2986 = vcvt.s32.f32 %v2922
    %v2987 = vcvt.s32.f32 %v2923
    %v2988 = vcvt.s32.f32 %v2924
    %v2989 = vcvt.s32.f32 %v2925
    %v2990 = vcvt.s32.f32 %v2926
    %v2991 = vcvt.s32.f32 %v2927
    %v2992 = vcvt.s32.f32 %v2928
    %v2993 = vcvt.s32.f32 %v2929
    %v2994 = vcvt.s32.f32 %v2930
    %v2995 = vcvt.s32.f32 %v2931
    %v2996 = vcvt.s32.f32 %v2932
    %v2997 = vcvt.s32.f32 %v2933
    %v2998 = vcvt.s32.f32 %v2934
    %v2999 = vcvt.s32.f32 %v2935
    %v3000 = vcvt.s32.f32 %v2936
    %v3001 = vcvt.s32.f32 %v2937
    %v3002 = vcvt.s32.f32 %v2938
    %v3003 = vcvt.s32.f32 %v2939
    %v3004 = vcvt.s32.f32 %v2940
    %v3005 = vcvt.s32.f32 %v2941
    %v3006 = vcvt.s32.f32 %v2942
    %v3007 = vcvt.s32.f32 %v2943
    %v3008 = vcvt.s32.f32 %v2944
    %v3009 = vcvt.s32.f32 %v2945
    %v3010 = vcvt.s32.f32 %v2946
    %v3011 = vcvt.s32.f32 %v2947
    %v3012 = vcvt.s32.f32 %v2948
    %v3013 = vcvt.s32.f32 %v2949
    %v3014 = vcvt.s32.f32 %v2950
    %v3015 = vcvt.s32.f32 %v2951
    %v3016 = vcvt.s32.f32 %v2952
    %v3017 = vcvt.s32.f32 %v2953
    %v3018 = vcvt.s32.f32 %v2954
    %v3019 = vcvt.s32.f32 %v2955
    %v3020 = vcvt.s32.f32 %v2956
    %v3021 = vcvt.s32.f32 %v2957
    %v3022 = vcvt.s32.f32 %v2958
    %v3023 = vcvt.s32.f32 %v2959
    %v3024 = vcvt.s32.f32 %v2960
    %v3025 = vcvt.s32.f32 %v2961
    %v3026 = vcvt.s32.f32 %v2962
    %v3027 = vcvt.s32.f32 %v2963
    %v3028 = vcvt.s32.f32 %v2964
    %v3029 = vcvt.s32.f32 %v2965
    %v3030 = vcvt.s32.f32 %v2966
    %v3031 = vcvt.s32.f32 %v2967
    %v3032 = vcvt.s32.f32 %v2968
    %v3033 = vcvt.s32.f32 %v2969
    %v3034 = vcvt.s32.f32 %v2970
    %v3035 = vcvt.s32.f32 %v2971
    %v3036 = vcvt.s32.f32 %v2972
    %v3037 = vcvt.s32.f32 %v2973
    %v3038 = vcvt.s32.f32 %v2974
    %v3039 = vcvt.s32.f32 %v2975
    %v3040 = vcvt.s32.f32 %v2976
    %v3041 = vcvt.s32.f32 %v2977
    %v3042 = vcvt.s32.f32 %v2978
    %v3043 = vcvt.s32.f32 %v2979
    %v3044 = vcvt.s32.f32 %v2980
    %v3045 = vcvt.s32.f32 %v2981
    %v3046 = vcvt.s32.f32 %v2982
    %v3047 = vcvt.s32.f32 %v2983
    %v3048 = vcvt.s32.f32 %v2984
    %v3049 = vcvt.s32.f32 %v2985
    %v3050 = vpack.c.bf16 %v2988, %v2986
    %v3051 = vpack.c.bf16 %v2989, %v2987
    %v3052 = vpack.c.bf16 %v2992, %v2990
    %v3053 = vpack.c.bf16 %v2993, %v2991
    %v3054 = vpack.c.bf16 %v2996, %v2994
    %v3055 = vpack.c.bf16 %v2997, %v2995
    %v3056 = vpack.c.bf16 %v3000, %v2998
    %v3057 = vpack.c.bf16 %v3001, %v2999
    %v3058 = vpack.c.bf16 %v3004, %v3002
    %v3059 = vpack.c.bf16 %v3005, %v3003
    %v3060 = vpack.c.bf16 %v3008, %v3006
    %v3061 = vpack.c.bf16 %v3009, %v3007
    %v3062 = vpack.c.bf16 %v3012, %v3010
    %v3063 = vpack.c.bf16 %v3013, %v3011
    %v3064 = vpack.c.bf16 %v3016, %v3014
    %v3065 = vpack.c.bf16 %v3017, %v3015
    %v3066 = vpack.c.bf16 %v3020, %v3018
    %v3067 = vpack.c.bf16 %v3021, %v3019
    %v3068 = vpack.c.bf16 %v3024, %v3022
    %v3069 = vpack.c.bf16 %v3025, %v3023
    %v3070 = vpack.c.bf16 %v3028, %v3026
    %v3071 = vpack.c.bf16 %v3029, %v3027
    %v3072 = vpack.c.bf16 %v3032, %v3030
    %v3073 = vpack.c.bf16 %v3033, %v3031
    %v3074 = vpack.c.bf16 %v3036, %v3034
    %v3075 = vpack.c.bf16 %v3037, %v3035
    %v3076 = vpack.c.bf16 %v3040, %v3038
    %v3077 = vpack.c.bf16 %v3041, %v3039
    %v3078 = vpack.c.bf16 %v3044, %v3042
    %v3079 = vpack.c.bf16 %v3045, %v3043
    %v3080 = vpack.c.bf16 %v3048, %v3046
    %v3081 = vpack.c.bf16 %v3049, %v3047
    %v3082 = vpack.c.bf16 %v2734, %v2730
    %v3083 = vpack.c.bf16 %v2736, %v2732
    %v3084 = vpack.c.bf16 %v2742, %v2738
    %v3085 = vpack.c.bf16 %v2744, %v2740
    %v3086 = vpack.c.bf16 %v2750, %v2746
    %v3087 = vpack.c.bf16 %v2752, %v2748
    %v3088 = vpack.c.bf16 %v2758, %v2754
    %v3089 = vpack.c.bf16 %v2760, %v2756
    %v3090 = vpack.c.bf16 %v2766, %v2762
    %v3091 = vpack.c.bf16 %v2768, %v2764
    %v3092 = vpack.c.bf16 %v2774, %v2770
    %v3093 = vpack.c.bf16 %v2776, %v2772
    %v3094 = vpack.c.bf16 %v2782, %v2778
    %v3095 = vpack.c.bf16 %v2784, %v2780
    %v3096 = vpack.c.bf16 %v2790, %v2786
    %v3097 = vpack.c.bf16 %v2792, %v2788
    %3098 = vmatpush.bf16.msra.mxu0 %v3064
    %3099 = vmatpush.bf16.msra.mxu0 %v3062
    %3100 = vmatpush.bf16.msra.mxu0 %v3060
    %3101 = vmatpush.bf16.msra.mxu0 %v3058
    %3102 = vmatpush.bf16.msra.mxu0 %v3056
    %3103 = vmatpush.bf16.msra.mxu0 %v3054
    %3104 = vmatpush.bf16.msra.mxu0 %v3052
    %3105 = vmatpush.bf16.msra.mxu0 %v3050
    %3106 = vmatmul.bf16.gmra.mxu0 %v3082
    %v3107 = vpop.f32.mrf.mxu0
    %v3108 = vadd.f32 0.0, %v3107
    %v3109 = vpop.f32.mrf.mxu0
    %v3110 = vadd.f32 0.0, %v3109
    %3111 = vmatmul.bf16.gmra.mxu0 %v3084
    %v3112 = vpop.f32.mrf.mxu0
    %v3113 = vadd.f32 0.0, %v3112
    %v3114 = vpop.f32.mrf.mxu0
    %v3115 = vadd.f32 0.0, %v3114
    %3116 = vmatmul.bf16.gmra.mxu0 %v3086
    %v3117 = vpop.f32.mrf.mxu0
    %v3118 = vadd.f32 0.0, %v3117
    %v3119 = vpop.f32.mrf.mxu0
    %v3120 = vadd.f32 0.0, %v3119
    %3121 = vmatmul.bf16.gmra.mxu0 %v3088
    %v3122 = vpop.f32.mrf.mxu0
    %v3123 = vadd.f32 0.0, %v3122
    %v3124 = vpop.f32.mrf.mxu0
    %v3125 = vadd.f32 0.0, %v3124
    %3126 = vmatmul.bf16.gmra.mxu0 %v3090
    %v3127 = vpop.f32.mrf.mxu0
    %v3128 = vadd.f32 0.0, %v3127
    %v3129 = vpop.f32.mrf.mxu0
    %v3130 = vadd.f32 0.0, %v3129
    %3131 = vmatmul.bf16.gmra.mxu0 %v3092
    %v3132 = vpop.f32.mrf.mxu0
    %v3133 = vadd.f32 0.0, %v3132
    %v3134 = vpop.f32.mrf.mxu0
    %v3135 = vadd.f32 0.0, %v3134
    %3136 = vmatmul.bf16.gmra.mxu0 %v3094
    %v3137 = vpop.f32.mrf.mxu0
    %v3138 = vadd.f32 0.0, %v3137
    %v3139 = vpop.f32.mrf.mxu0
    %v3140 = vadd.f32 0.0, %v3139
    %3141 = vmatmul.bf16.gmra.mxu0 %v3096
    %v3142 = vpop.f32.mrf.mxu0
    %v3143 = vadd.f32 0.0, %v3142
    %v3144 = vpop.f32.mrf.mxu0
    %v3145 = vadd.f32 0.0, %v3144
    %3146 = vdwg.mxu0
    %3147 = vmatpush.bf16.msra.mxu0 %v3080
    %3148 = vmatpush.bf16.msra.mxu0 %v3078
    %3149 = vmatpush.bf16.msra.mxu0 %v3076
    %3150 = vmatpush.bf16.msra.mxu0 %v3074
    %3151 = vmatpush.bf16.msra.mxu0 %v3072
    %3152 = vmatpush.bf16.msra.mxu0 %v3070
    %3153 = vmatpush.bf16.msra.mxu0 %v3068
    %3154 = vmatpush.bf16.msra.mxu0 %v3066
    %3155 = vmatmul.bf16.gmra.mxu0 %v3083
    %v3156 = vpop.f32.mrf.mxu0
    %v3157 = vadd.f32 %v3108, %v3156
    %v3158 = vpop.f32.mrf.mxu0
    %v3159 = vadd.f32 %v3110, %v3158
    %3160 = vmatmul.bf16.gmra.mxu0 %v3085
    %v3161 = vpop.f32.mrf.mxu0
    %v3162 = vadd.f32 %v3113, %v3161
    %v3163 = vpop.f32.mrf.mxu0
    %v3164 = vadd.f32 %v3115, %v3163
    %3165 = vmatmul.bf16.gmra.mxu0 %v3087
    %v3166 = vpop.f32.mrf.mxu0
    %v3167 = vadd.f32 %v3118, %v3166
    %v3168 = vpop.f32.mrf.mxu0
    %v3169 = vadd.f32 %v3120, %v3168
    %3170 = vmatmul.bf16.gmra.mxu0 %v3089
    %v3171 = vpop.f32.mrf.mxu0
    %v3172 = vadd.f32 %v3123, %v3171
    %v3173 = vpop.f32.mrf.mxu0
    %v3174 = vadd.f32 %v3125, %v3173
    %3175 = vmatmul.bf16.gmra.mxu0 %v3091
    %v3176 = vpop.f32.mrf.mxu0
    %v3177 = vadd.f32 %v3128, %v3176
    %v3178 = vpop.f32.mrf.mxu0
    %v3179 = vadd.f32 %v3130, %v3178
    %3180 = vmatmul.bf16.gmra.mxu0 %v3093
    %v3181 = vpop.f32.mrf.mxu0
    %v3182 = vadd.f32 %v3133, %v3181
    %v3183 = vpop.f32.mrf.mxu0
    %v3184 = vadd.f32 %v3135, %v3183
    %3185 = vmatmul.bf16.gmra.mxu0 %v3095
    %v3186 = vpop.f32.mrf.mxu0
    %v3187 = vadd.f32 %v3138, %v3186
    %v3188 = vpop.f32.mrf.mxu0
    %v3189 = vadd.f32 %v3140, %v3188
    %3190 = vmatmul.bf16.gmra.mxu0 %v3097
    %v3191 = vpop.f32.mrf.mxu0
    %v3192 = vadd.f32 %v3143, %v3191
    %v3193 = vpop.f32.mrf.mxu0
    %v3194 = vadd.f32 %v3145, %v3193
    %3195 = vdwg.mxu0
    %3196 = vmatpush.bf16.msra.mxu0 %v3065
    %3197 = vmatpush.bf16.msra.mxu0 %v3063
    %3198 = vmatpush.bf16.msra.mxu0 %v3061
    %3199 = vmatpush.bf16.msra.mxu0 %v3059
    %3200 = vmatpush.bf16.msra.mxu0 %v3057
    %3201 = vmatpush.bf16.msra.mxu0 %v3055
    %3202 = vmatpush.bf16.msra.mxu0 %v3053
    %3203 = vmatpush.bf16.msra.mxu0 %v3051
    %3204 = vmatmul.bf16.gmra.mxu0 %v3082
    %v3205 = vpop.f32.mrf.mxu0
    %v3206 = vadd.f32 0.0, %v3205
    %v3207 = vpop.f32.mrf.mxu0
    %v3208 = vadd.f32 0.0, %v3207
    %3209 = vmatmul.bf16.gmra.mxu0 %v3084
    %v3210 = vpop.f32.mrf.mxu0
    %v3211 = vadd.f32 0.0, %v3210
    %v3212 = vpop.f32.mrf.mxu0
    %v3213 = vadd.f32 0.0, %v3212
    %3214 = vmatmul.bf16.gmra.mxu0 %v3086
    %v3215 = vpop.f32.mrf.mxu0
    %v3216 = vadd.f32 0.0, %v3215
    %v3217 = vpop.f32.mrf.mxu0
    %v3218 = vadd.f32 0.0, %v3217
    %3219 = vmatmul.bf16.gmra.mxu0 %v3088
    %v3220 = vpop.f32.mrf.mxu0
    %v3221 = vadd.f32 0.0, %v3220
    %v3222 = vpop.f32.mrf.mxu0
    %v3223 = vadd.f32 0.0, %v3222
    %3224 = vmatmul.bf16.gmra.mxu0 %v3090
    %v3225 = vpop.f32.mrf.mxu0
    %v3226 = vadd.f32 0.0, %v3225
    %v3227 = vpop.f32.mrf.mxu0
    %v3228 = vadd.f32 0.0, %v3227
    %3229 = vmatmul.bf16.gmra.mxu0 %v3092
    %v3230 = vpop.f32.mrf.mxu0
    %v3231 = vadd.f32 0.0, %v3230
    %v3232 = vpop.f32.mrf.mxu0
    %v3233 = vadd.f32 0.0, %v3232
    %3234 = vmatmul.bf16.gmra.mxu0 %v3094
    %v3235 = vpop.f32.mrf.mxu0
    %v3236 = vadd.f32 0.0, %v3235
    %v3237 = vpop.f32.mrf.mxu0
    %v3238 = vadd.f32 0.0, %v3237
    %3239 = vmatmul.bf16.gmra.mxu0 %v3096
    %v3240 = vpop.f32.mrf.mxu0
    %v3241 = vadd.f32 0.0, %v3240
    %v3242 = vpop.f32.mrf.mxu0
    %v3243 = vadd.f32 0.0, %v3242
    %3244 = vdwg.mxu0
    %3245 = vmatpush.bf16.msra.mxu0 %v3081
    %3246 = vmatpush.bf16.msra.mxu0 %v3079
    %3247 = vmatpush.bf16.msra.mxu0 %v3077
    %3248 = vmatpush.bf16.msra.mxu0 %v3075
    %3249 = vmatpush.bf16.msra.mxu0 %v3073
    %3250 = vmatpush.bf16.msra.mxu0 %v3071
    %3251 = vmatpush.bf16.msra.mxu0 %v3069
    %3252 = vmatpush.bf16.msra.mxu0 %v3067
    %3253 = vmatmul.bf16.gmra.mxu0 %v3083
    %v3254 = vpop.f32.mrf.mxu0
    %v3255 = vadd.f32 %v3206, %v3254
    %v3256 = vpop.f32.mrf.mxu0
    %v3257 = vadd.f32 %v3208, %v3256
    %3258 = vmatmul.bf16.gmra.mxu0 %v3085
    %v3259 = vpop.f32.mrf.mxu0
    %v3260 = vadd.f32 %v3211, %v3259
    %v3261 = vpop.f32.mrf.mxu0
    %v3262 = vadd.f32 %v3213, %v3261
    %3263 = vmatmul.bf16.gmra.mxu0 %v3087
    %v3264 = vpop.f32.mrf.mxu0
    %v3265 = vadd.f32 %v3216, %v3264
    %v3266 = vpop.f32.mrf.mxu0
    %v3267 = vadd.f32 %v3218, %v3266
    %3268 = vmatmul.bf16.gmra.mxu0 %v3089
    %v3269 = vpop.f32.mrf.mxu0
    %v3270 = vadd.f32 %v3221, %v3269
    %v3271 = vpop.f32.mrf.mxu0
    %v3272 = vadd.f32 %v3223, %v3271
    %3273 = vmatmul.bf16.gmra.mxu0 %v3091
    %v3274 = vpop.f32.mrf.mxu0
    %v3275 = vadd.f32 %v3226, %v3274
    %v3276 = vpop.f32.mrf.mxu0
    %v3277 = vadd.f32 %v3228, %v3276
    %3278 = vmatmul.bf16.gmra.mxu0 %v3093
    %v3279 = vpop.f32.mrf.mxu0
    %v3280 = vadd.f32 %v3231, %v3279
    %v3281 = vpop.f32.mrf.mxu0
    %v3282 = vadd.f32 %v3233, %v3281
    %3283 = vmatmul.bf16.gmra.mxu0 %v3095
    %v3284 = vpop.f32.mrf.mxu0
    %v3285 = vadd.f32 %v3236, %v3284
    %v3286 = vpop.f32.mrf.mxu0
    %v3287 = vadd.f32 %v3238, %v3286
    %3288 = vmatmul.bf16.gmra.mxu0 %v3097
    %v3289 = vpop.f32.mrf.mxu0
    %v3290 = vadd.f32 %v3241, %v3289
    %v3291 = vpop.f32.mrf.mxu0
    %v3292 = vadd.f32 %v3243, %v3291
    %3293 = vdwg.mxu0
    %v3294 = vrcp.pop %v3157
    %v3295 = vmul.f32 %v3157, %v3294
    %v3296 = vsub.f32 1.0, %v3295
    %v3297 = vmul.f32 %v3294, %v3296
    %v3298 = vadd.f32 %v3294, %v3297
    %vm3299 = vweird.f32 %v3157
    %vm3300 = vweird.f32 %v3294
    %vm3301 = vmor %vm3299, %vm3300
    %v3302 = vsel %vm3301, %v3294, %v3298
    %v3303 = vand.u32 2147483647, %v3157
    %vm3304 = vcmp.eq.f32.partialorder %v3303, 8.507059e+37
    %v3305 = vand.u32 %v3157, 2147483648
    %v3306 = vor.u32 1.1754944e-38, %v3305
    %v3307 = vsel %vm3304, %v3306, %v3302
    %v3308 = vrcp.pop %v3255
    %v3309 = vmul.f32 %v3255, %v3308
    %v3310 = vsub.f32 1.0, %v3309
    %v3311 = vmul.f32 %v3308, %v3310
    %v3312 = vadd.f32 %v3308, %v3311
    %vm3313 = vweird.f32 %v3255
    %vm3314 = vweird.f32 %v3308
    %vm3315 = vmor %vm3313, %vm3314
    %v3316 = vsel %vm3315, %v3308, %v3312
    %v3317 = vand.u32 2147483647, %v3255
    %vm3318 = vcmp.eq.f32.partialorder %v3317, 8.507059e+37
    %v3319 = vand.u32 %v3255, 2147483648
    %v3320 = vor.u32 1.1754944e-38, %v3319
    %v3321 = vsel %vm3318, %v3320, %v3316
    %v3322 = vrcp.pop %v3159
    %v3323 = vmul.f32 %v3159, %v3322
    %v3324 = vsub.f32 1.0, %v3323
    %v3325 = vmul.f32 %v3322, %v3324
    %v3326 = vadd.f32 %v3322, %v3325
    %vm3327 = vweird.f32 %v3159
    %vm3328 = vweird.f32 %v3322
    %vm3329 = vmor %vm3327, %vm3328
    %v3330 = vsel %vm3329, %v3322, %v3326
    %v3331 = vand.u32 2147483647, %v3159
    %vm3332 = vcmp.eq.f32.partialorder %v3331, 8.507059e+37
    %v3333 = vand.u32 %v3159, 2147483648
    %v3334 = vor.u32 1.1754944e-38, %v3333
    %v3335 = vsel %vm3332, %v3334, %v3330
    %v3336 = vrcp.pop %v3257
    %v3337 = vmul.f32 %v3257, %v3336
    %v3338 = vsub.f32 1.0, %v3337
    %v3339 = vmul.f32 %v3336, %v3338
    %v3340 = vadd.f32 %v3336, %v3339
    %vm3341 = vweird.f32 %v3257
    %vm3342 = vweird.f32 %v3336
    %vm3343 = vmor %vm3341, %vm3342
    %v3344 = vsel %vm3343, %v3336, %v3340
    %v3345 = vand.u32 2147483647, %v3257
    %vm3346 = vcmp.eq.f32.partialorder %v3345, 8.507059e+37
    %v3347 = vand.u32 %v3257, 2147483648
    %v3348 = vor.u32 1.1754944e-38, %v3347
    %v3349 = vsel %vm3346, %v3348, %v3344
    %v3350 = vrcp.pop %v3162
    %v3351 = vmul.f32 %v3162, %v3350
    %v3352 = vsub.f32 1.0, %v3351
    %v3353 = vmul.f32 %v3350, %v3352
    %v3354 = vadd.f32 %v3350, %v3353
    %vm3355 = vweird.f32 %v3162
    %vm3356 = vweird.f32 %v3350
    %vm3357 = vmor %vm3355, %vm3356
    %v3358 = vsel %vm3357, %v3350, %v3354
    %v3359 = vand.u32 2147483647, %v3162
    %vm3360 = vcmp.eq.f32.partialorder %v3359, 8.507059e+37
    %v3361 = vand.u32 %v3162, 2147483648
    %v3362 = vor.u32 1.1754944e-38, %v3361
    %v3363 = vsel %vm3360, %v3362, %v3358
    %v3364 = vrcp.pop %v3260
    %v3365 = vmul.f32 %v3260, %v3364
    %v3366 = vsub.f32 1.0, %v3365
    %v3367 = vmul.f32 %v3364, %v3366
    %v3368 = vadd.f32 %v3364, %v3367
    %vm3369 = vweird.f32 %v3260
    %vm3370 = vweird.f32 %v3364
    %vm3371 = vmor %vm3369, %vm3370
    %v3372 = vsel %vm3371, %v3364, %v3368
    %v3373 = vand.u32 2147483647, %v3260
    %vm3374 = vcmp.eq.f32.partialorder %v3373, 8.507059e+37
    %v3375 = vand.u32 %v3260, 2147483648
    %v3376 = vor.u32 1.1754944e-38, %v3375
    %v3377 = vsel %vm3374, %v3376, %v3372
    %v3378 = vrcp.pop %v3164
    %v3379 = vmul.f32 %v3164, %v3378
    %v3380 = vsub.f32 1.0, %v3379
    %v3381 = vmul.f32 %v3378, %v3380
    %v3382 = vadd.f32 %v3378, %v3381
    %vm3383 = vweird.f32 %v3164
    %vm3384 = vweird.f32 %v3378
    %vm3385 = vmor %vm3383, %vm3384
    %v3386 = vsel %vm3385, %v3378, %v3382
    %v3387 = vand.u32 2147483647, %v3164
    %vm3388 = vcmp.eq.f32.partialorder %v3387, 8.507059e+37
    %v3389 = vand.u32 %v3164, 2147483648
    %v3390 = vor.u32 1.1754944e-38, %v3389
    %v3391 = vsel %vm3388, %v3390, %v3386
    %v3392 = vrcp.pop %v3262
    %v3393 = vmul.f32 %v3262, %v3392
    %v3394 = vsub.f32 1.0, %v3393
    %v3395 = vmul.f32 %v3392, %v3394
    %v3396 = vadd.f32 %v3392, %v3395
    %vm3397 = vweird.f32 %v3262
    %vm3398 = vweird.f32 %v3392
    %vm3399 = vmor %vm3397, %vm3398
    %v3400 = vsel %vm3399, %v3392, %v3396
    %v3401 = vand.u32 2147483647, %v3262
    %vm3402 = vcmp.eq.f32.partialorder %v3401, 8.507059e+37
    %v3403 = vand.u32 %v3262, 2147483648
    %v3404 = vor.u32 1.1754944e-38, %v3403
    %v3405 = vsel %vm3402, %v3404, %v3400
    %v3406 = vrcp.pop %v3167
    %v3407 = vmul.f32 %v3167, %v3406
    %v3408 = vsub.f32 1.0, %v3407
    %v3409 = vmul.f32 %v3406, %v3408
    %v3410 = vadd.f32 %v3406, %v3409
    %vm3411 = vweird.f32 %v3167
    %vm3412 = vweird.f32 %v3406
    %vm3413 = vmor %vm3411, %vm3412
    %v3414 = vsel %vm3413, %v3406, %v3410
    %v3415 = vand.u32 2147483647, %v3167
    %vm3416 = vcmp.eq.f32.partialorder %v3415, 8.507059e+37
    %v3417 = vand.u32 %v3167, 2147483648
    %v3418 = vor.u32 1.1754944e-38, %v3417
    %v3419 = vsel %vm3416, %v3418, %v3414
    %v3420 = vrcp.pop %v3265
    %v3421 = vmul.f32 %v3265, %v3420
    %v3422 = vsub.f32 1.0, %v3421
    %v3423 = vmul.f32 %v3420, %v3422
    %v3424 = vadd.f32 %v3420, %v3423
    %vm3425 = vweird.f32 %v3265
    %vm3426 = vweird.f32 %v3420
    %vm3427 = vmor %vm3425, %vm3426
    %v3428 = vsel %vm3427, %v3420, %v3424
    %v3429 = vand.u32 2147483647, %v3265
    %vm3430 = vcmp.eq.f32.partialorder %v3429, 8.507059e+37
    %v3431 = vand.u32 %v3265, 2147483648
    %v3432 = vor.u32 1.1754944e-38, %v3431
    %v3433 = vsel %vm3430, %v3432, %v3428
    %v3434 = vrcp.pop %v3169
    %v3435 = vmul.f32 %v3169, %v3434
    %v3436 = vsub.f32 1.0, %v3435
    %v3437 = vmul.f32 %v3434, %v3436
    %v3438 = vadd.f32 %v3434, %v3437
    %vm3439 = vweird.f32 %v3169
    %vm3440 = vweird.f32 %v3434
    %vm3441 = vmor %vm3439, %vm3440
    %v3442 = vsel %vm3441, %v3434, %v3438
    %v3443 = vand.u32 2147483647, %v3169
    %vm3444 = vcmp.eq.f32.partialorder %v3443, 8.507059e+37
    %v3445 = vand.u32 %v3169, 2147483648
    %v3446 = vor.u32 1.1754944e-38, %v3445
    %v3447 = vsel %vm3444, %v3446, %v3442
    %v3448 = vrcp.pop %v3267
    %v3449 = vmul.f32 %v3267, %v3448
    %v3450 = vsub.f32 1.0, %v3449
    %v3451 = vmul.f32 %v3448, %v3450
    %v3452 = vadd.f32 %v3448, %v3451
    %vm3453 = vweird.f32 %v3267
    %vm3454 = vweird.f32 %v3448
    %vm3455 = vmor %vm3453, %vm3454
    %v3456 = vsel %vm3455, %v3448, %v3452
    %v3457 = vand.u32 2147483647, %v3267
    %vm3458 = vcmp.eq.f32.partialorder %v3457, 8.507059e+37
    %v3459 = vand.u32 %v3267, 2147483648
    %v3460 = vor.u32 1.1754944e-38, %v3459
    %v3461 = vsel %vm3458, %v3460, %v3456
    %v3462 = vrcp.pop %v3172
    %v3463 = vmul.f32 %v3172, %v3462
    %v3464 = vsub.f32 1.0, %v3463
    %v3465 = vmul.f32 %v3462, %v3464
    %v3466 = vadd.f32 %v3462, %v3465
    %vm3467 = vweird.f32 %v3172
    %vm3468 = vweird.f32 %v3462
    %vm3469 = vmor %vm3467, %vm3468
    %v3470 = vsel %vm3469, %v3462, %v3466
    %v3471 = vand.u32 2147483647, %v3172
    %vm3472 = vcmp.eq.f32.partialorder %v3471, 8.507059e+37
    %v3473 = vand.u32 %v3172, 2147483648
    %v3474 = vor.u32 1.1754944e-38, %v3473
    %v3475 = vsel %vm3472, %v3474, %v3470
    %v3476 = vrcp.pop %v3270
    %v3477 = vmul.f32 %v3270, %v3476
    %v3478 = vsub.f32 1.0, %v3477
    %v3479 = vmul.f32 %v3476, %v3478
    %v3480 = vadd.f32 %v3476, %v3479
    %vm3481 = vweird.f32 %v3270
    %vm3482 = vweird.f32 %v3476
    %vm3483 = vmor %vm3481, %vm3482
    %v3484 = vsel %vm3483, %v3476, %v3480
    %v3485 = vand.u32 2147483647, %v3270
    %vm3486 = vcmp.eq.f32.partialorder %v3485, 8.507059e+37
    %v3487 = vand.u32 %v3270, 2147483648
    %v3488 = vor.u32 1.1754944e-38, %v3487
    %v3489 = vsel %vm3486, %v3488, %v3484
    %v3490 = vrcp.pop %v3174
    %v3491 = vmul.f32 %v3174, %v3490
    %v3492 = vsub.f32 1.0, %v3491
    %v3493 = vmul.f32 %v3490, %v3492
    %v3494 = vadd.f32 %v3490, %v3493
    %vm3495 = vweird.f32 %v3174
    %vm3496 = vweird.f32 %v3490
    %vm3497 = vmor %vm3495, %vm3496
    %v3498 = vsel %vm3497, %v3490, %v3494
    %v3499 = vand.u32 2147483647, %v3174
    %vm3500 = vcmp.eq.f32.partialorder %v3499, 8.507059e+37
    %v3501 = vand.u32 %v3174, 2147483648
    %v3502 = vor.u32 1.1754944e-38, %v3501
    %v3503 = vsel %vm3500, %v3502, %v3498
    %v3504 = vrcp.pop %v3272
    %v3505 = vmul.f32 %v3272, %v3504
    %v3506 = vsub.f32 1.0, %v3505
    %v3507 = vmul.f32 %v3504, %v3506
    %v3508 = vadd.f32 %v3504, %v3507
    %vm3509 = vweird.f32 %v3272
    %vm3510 = vweird.f32 %v3504
    %vm3511 = vmor %vm3509, %vm3510
    %v3512 = vsel %vm3511, %v3504, %v3508
    %v3513 = vand.u32 2147483647, %v3272
    %vm3514 = vcmp.eq.f32.partialorder %v3513, 8.507059e+37
    %v3515 = vand.u32 %v3272, 2147483648
    %v3516 = vor.u32 1.1754944e-38, %v3515
    %v3517 = vsel %vm3514, %v3516, %v3512
    %v3518 = vrcp.pop %v3177
    %v3519 = vmul.f32 %v3177, %v3518
    %v3520 = vsub.f32 1.0, %v3519
    %v3521 = vmul.f32 %v3518, %v3520
    %v3522 = vadd.f32 %v3518, %v3521
    %vm3523 = vweird.f32 %v3177
    %vm3524 = vweird.f32 %v3518
    %vm3525 = vmor %vm3523, %vm3524
    %v3526 = vsel %vm3525, %v3518, %v3522
    %v3527 = vand.u32 2147483647, %v3177
    %vm3528 = vcmp.eq.f32.partialorder %v3527, 8.507059e+37
    %v3529 = vand.u32 %v3177, 2147483648
    %v3530 = vor.u32 1.1754944e-38, %v3529
    %v3531 = vsel %vm3528, %v3530, %v3526
    %v3532 = vrcp.pop %v3275
    %v3533 = vmul.f32 %v3275, %v3532
    %v3534 = vsub.f32 1.0, %v3533
    %v3535 = vmul.f32 %v3532, %v3534
    %v3536 = vadd.f32 %v3532, %v3535
    %vm3537 = vweird.f32 %v3275
    %vm3538 = vweird.f32 %v3532
    %vm3539 = vmor %vm3537, %vm3538
    %v3540 = vsel %vm3539, %v3532, %v3536
    %v3541 = vand.u32 2147483647, %v3275
    %vm3542 = vcmp.eq.f32.partialorder %v3541, 8.507059e+37
    %v3543 = vand.u32 %v3275, 2147483648
    %v3544 = vor.u32 1.1754944e-38, %v3543
    %v3545 = vsel %vm3542, %v3544, %v3540
    %v3546 = vrcp.pop %v3179
    %v3547 = vmul.f32 %v3179, %v3546
    %v3548 = vsub.f32 1.0, %v3547
    %v3549 = vmul.f32 %v3546, %v3548
    %v3550 = vadd.f32 %v3546, %v3549
    %vm3551 = vweird.f32 %v3179
    %vm3552 = vweird.f32 %v3546
    %vm3553 = vmor %vm3551, %vm3552
    %v3554 = vsel %vm3553, %v3546, %v3550
    %v3555 = vand.u32 2147483647, %v3179
    %vm3556 = vcmp.eq.f32.partialorder %v3555, 8.507059e+37
    %v3557 = vand.u32 %v3179, 2147483648
    %v3558 = vor.u32 1.1754944e-38, %v3557
    %v3559 = vsel %vm3556, %v3558, %v3554
    %v3560 = vrcp.pop %v3277
    %v3561 = vmul.f32 %v3277, %v3560
    %v3562 = vsub.f32 1.0, %v3561
    %v3563 = vmul.f32 %v3560, %v3562
    %v3564 = vadd.f32 %v3560, %v3563
    %vm3565 = vweird.f32 %v3277
    %vm3566 = vweird.f32 %v3560
    %vm3567 = vmor %vm3565, %vm3566
    %v3568 = vsel %vm3567, %v3560, %v3564
    %v3569 = vand.u32 2147483647, %v3277
    %vm3570 = vcmp.eq.f32.partialorder %v3569, 8.507059e+37
    %v3571 = vand.u32 %v3277, 2147483648
    %v3572 = vor.u32 1.1754944e-38, %v3571
    %v3573 = vsel %vm3570, %v3572, %v3568
    %v3574 = vrcp.pop %v3182
    %v3575 = vmul.f32 %v3182, %v3574
    %v3576 = vsub.f32 1.0, %v3575
    %v3577 = vmul.f32 %v3574, %v3576
    %v3578 = vadd.f32 %v3574, %v3577
    %vm3579 = vweird.f32 %v3182
    %vm3580 = vweird.f32 %v3574
    %vm3581 = vmor %vm3579, %vm3580
    %v3582 = vsel %vm3581, %v3574, %v3578
    %v3583 = vand.u32 2147483647, %v3182
    %vm3584 = vcmp.eq.f32.partialorder %v3583, 8.507059e+37
    %v3585 = vand.u32 %v3182, 2147483648
    %v3586 = vor.u32 1.1754944e-38, %v3585
    %v3587 = vsel %vm3584, %v3586, %v3582
    %v3588 = vrcp.pop %v3280
    %v3589 = vmul.f32 %v3280, %v3588
    %v3590 = vsub.f32 1.0, %v3589
    %v3591 = vmul.f32 %v3588, %v3590
    %v3592 = vadd.f32 %v3588, %v3591
    %vm3593 = vweird.f32 %v3280
    %vm3594 = vweird.f32 %v3588
    %vm3595 = vmor %vm3593, %vm3594
    %v3596 = vsel %vm3595, %v3588, %v3592
    %v3597 = vand.u32 2147483647, %v3280
    %vm3598 = vcmp.eq.f32.partialorder %v3597, 8.507059e+37
    %v3599 = vand.u32 %v3280, 2147483648
    %v3600 = vor.u32 1.1754944e-38, %v3599
    %v3601 = vsel %vm3598, %v3600, %v3596
    %v3602 = vrcp.pop %v3184
    %v3603 = vmul.f32 %v3184, %v3602
    %v3604 = vsub.f32 1.0, %v3603
    %v3605 = vmul.f32 %v3602, %v3604
    %v3606 = vadd.f32 %v3602, %v3605
    %vm3607 = vweird.f32 %v3184
    %vm3608 = vweird.f32 %v3602
    %vm3609 = vmor %vm3607, %vm3608
    %v3610 = vsel %vm3609, %v3602, %v3606
    %v3611 = vand.u32 2147483647, %v3184
    %vm3612 = vcmp.eq.f32.partialorder %v3611, 8.507059e+37
    %v3613 = vand.u32 %v3184, 2147483648
    %v3614 = vor.u32 1.1754944e-38, %v3613
    %v3615 = vsel %vm3612, %v3614, %v3610
    %v3616 = vrcp.pop %v3282
    %v3617 = vmul.f32 %v3282, %v3616
    %v3618 = vsub.f32 1.0, %v3617
    %v3619 = vmul.f32 %v3616, %v3618
    %v3620 = vadd.f32 %v3616, %v3619
    %vm3621 = vweird.f32 %v3282
    %vm3622 = vweird.f32 %v3616
    %vm3623 = vmor %vm3621, %vm3622
    %v3624 = vsel %vm3623, %v3616, %v3620
    %v3625 = vand.u32 2147483647, %v3282
    %vm3626 = vcmp.eq.f32.partialorder %v3625, 8.507059e+37
    %v3627 = vand.u32 %v3282, 2147483648
    %v3628 = vor.u32 1.1754944e-38, %v3627
    %v3629 = vsel %vm3626, %v3628, %v3624
    %v3630 = vrcp.pop %v3187
    %v3631 = vmul.f32 %v3187, %v3630
    %v3632 = vsub.f32 1.0, %v3631
    %v3633 = vmul.f32 %v3630, %v3632
    %v3634 = vadd.f32 %v3630, %v3633
    %vm3635 = vweird.f32 %v3187
    %vm3636 = vweird.f32 %v3630
    %vm3637 = vmor %vm3635, %vm3636
    %v3638 = vsel %vm3637, %v3630, %v3634
    %v3639 = vand.u32 2147483647, %v3187
    %vm3640 = vcmp.eq.f32.partialorder %v3639, 8.507059e+37
    %v3641 = vand.u32 %v3187, 2147483648
    %v3642 = vor.u32 1.1754944e-38, %v3641
    %v3643 = vsel %vm3640, %v3642, %v3638
    %v3644 = vrcp.pop %v3285
    %v3645 = vmul.f32 %v3285, %v3644
    %v3646 = vsub.f32 1.0, %v3645
    %v3647 = vmul.f32 %v3644, %v3646
    %v3648 = vadd.f32 %v3644, %v3647
    %vm3649 = vweird.f32 %v3285
    %vm3650 = vweird.f32 %v3644
    %vm3651 = vmor %vm3649, %vm3650
    %v3652 = vsel %vm3651, %v3644, %v3648
    %v3653 = vand.u32 2147483647, %v3285
    %vm3654 = vcmp.eq.f32.partialorder %v3653, 8.507059e+37
    %v3655 = vand.u32 %v3285, 2147483648
    %v3656 = vor.u32 1.1754944e-38, %v3655
    %v3657 = vsel %vm3654, %v3656, %v3652
    %v3658 = vrcp.pop %v3189
    %v3659 = vmul.f32 %v3189, %v3658
    %v3660 = vsub.f32 1.0, %v3659
    %v3661 = vmul.f32 %v3658, %v3660
    %v3662 = vadd.f32 %v3658, %v3661
    %vm3663 = vweird.f32 %v3189
    %vm3664 = vweird.f32 %v3658
    %vm3665 = vmor %vm3663, %vm3664
    %v3666 = vsel %vm3665, %v3658, %v3662
    %v3667 = vand.u32 2147483647, %v3189
    %vm3668 = vcmp.eq.f32.partialorder %v3667, 8.507059e+37
    %v3669 = vand.u32 %v3189, 2147483648
    %v3670 = vor.u32 1.1754944e-38, %v3669
    %v3671 = vsel %vm3668, %v3670, %v3666
    %v3672 = vrcp.pop %v3287
    %v3673 = vmul.f32 %v3287, %v3672
    %v3674 = vsub.f32 1.0, %v3673
    %v3675 = vmul.f32 %v3672, %v3674
    %v3676 = vadd.f32 %v3672, %v3675
    %vm3677 = vweird.f32 %v3287
    %vm3678 = vweird.f32 %v3672
    %vm3679 = vmor %vm3677, %vm3678
    %v3680 = vsel %vm3679, %v3672, %v3676
    %v3681 = vand.u32 2147483647, %v3287
    %vm3682 = vcmp.eq.f32.partialorder %v3681, 8.507059e+37
    %v3683 = vand.u32 %v3287, 2147483648
    %v3684 = vor.u32 1.1754944e-38, %v3683
    %v3685 = vsel %vm3682, %v3684, %v3680
    %v3686 = vrcp.pop %v3192
    %v3687 = vmul.f32 %v3192, %v3686
    %v3688 = vsub.f32 1.0, %v3687
    %v3689 = vmul.f32 %v3686, %v3688
    %v3690 = vadd.f32 %v3686, %v3689
    %vm3691 = vweird.f32 %v3192
    %vm3692 = vweird.f32 %v3686
    %vm3693 = vmor %vm3691, %vm3692
    %v3694 = vsel %vm3693, %v3686, %v3690
    %v3695 = vand.u32 2147483647, %v3192
    %vm3696 = vcmp.eq.f32.partialorder %v3695, 8.507059e+37
    %v3697 = vand.u32 %v3192, 2147483648
    %v3698 = vor.u32 1.1754944e-38, %v3697
    %v3699 = vsel %vm3696, %v3698, %v3694
    %v3700 = vrcp.pop %v3290
    %v3701 = vmul.f32 %v3290, %v3700
    %v3702 = vsub.f32 1.0, %v3701
    %v3703 = vmul.f32 %v3700, %v3702
    %v3704 = vadd.f32 %v3700, %v3703
    %vm3705 = vweird.f32 %v3290
    %vm3706 = vweird.f32 %v3700
    %vm3707 = vmor %vm3705, %vm3706
    %v3708 = vsel %vm3707, %v3700, %v3704
    %v3709 = vand.u32 2147483647, %v3290
    %vm3710 = vcmp.eq.f32.partialorder %v3709, 8.507059e+37
    %v3711 = vand.u32 %v3290, 2147483648
    %v3712 = vor.u32 1.1754944e-38, %v3711
    %v3713 = vsel %vm3710, %v3712, %v3708
    %v3714 = vrcp.pop %v3194
    %v3715 = vmul.f32 %v3194, %v3714
    %v3716 = vsub.f32 1.0, %v3715
    %v3717 = vmul.f32 %v3714, %v3716
    %v3718 = vadd.f32 %v3714, %v3717
    %vm3719 = vweird.f32 %v3194
    %vm3720 = vweird.f32 %v3714
    %vm3721 = vmor %vm3719, %vm3720
    %v3722 = vsel %vm3721, %v3714, %v3718
    %v3723 = vand.u32 2147483647, %v3194
    %vm3724 = vcmp.eq.f32.partialorder %v3723, 8.507059e+37
    %v3725 = vand.u32 %v3194, 2147483648
    %v3726 = vor.u32 1.1754944e-38, %v3725
    %v3727 = vsel %vm3724, %v3726, %v3722
    %v3728 = vrcp.pop %v3292
    %v3729 = vmul.f32 %v3292, %v3728
    %v3730 = vsub.f32 1.0, %v3729
    %v3731 = vmul.f32 %v3728, %v3730
    %v3732 = vadd.f32 %v3728, %v3731
    %vm3733 = vweird.f32 %v3292
    %vm3734 = vweird.f32 %v3728
    %vm3735 = vmor %vm3733, %vm3734
    %v3736 = vsel %vm3735, %v3728, %v3732
    %v3737 = vand.u32 2147483647, %v3292
    %vm3738 = vcmp.eq.f32.partialorder %v3737, 8.507059e+37
    %v3739 = vand.u32 %v3292, 2147483648
    %v3740 = vor.u32 1.1754944e-38, %v3739
    %v3741 = vsel %vm3738, %v3740, %v3736
    %v3742 = vmul.f32 %v2730, %v3307
    %v3743 = vmul.f32 %v2732, %v3321
    %v3744 = vmul.f32 %v2734, %v3335
    %v3745 = vmul.f32 %v2736, %v3349
    %v3746 = vmul.f32 %v2738, %v3363
    %v3747 = vmul.f32 %v2740, %v3377
    %v3748 = vmul.f32 %v2742, %v3391
    %v3749 = vmul.f32 %v2744, %v3405
    %v3750 = vmul.f32 %v2746, %v3419
    %v3751 = vmul.f32 %v2748, %v3433
    %v3752 = vmul.f32 %v2750, %v3447
    %v3753 = vmul.f32 %v2752, %v3461
    %v3754 = vmul.f32 %v2754, %v3475
    %v3755 = vmul.f32 %v2756, %v3489
    %v3756 = vmul.f32 %v2758, %v3503
    %v3757 = vmul.f32 %v2760, %v3517
    %v3758 = vmul.f32 %v2762, %v3531
    %v3759 = vmul.f32 %v2764, %v3545
    %v3760 = vmul.f32 %v2766, %v3559
    %v3761 = vmul.f32 %v2768, %v3573
    %v3762 = vmul.f32 %v2770, %v3587
    %v3763 = vmul.f32 %v2772, %v3601
    %v3764 = vmul.f32 %v2774, %v3615
    %v3765 = vmul.f32 %v2776, %v3629
    %v3766 = vmul.f32 %v2778, %v3643
    %v3767 = vmul.f32 %v2780, %v3657
    %v3768 = vmul.f32 %v2782, %v3671
    %v3769 = vmul.f32 %v2784, %v3685
    %v3770 = vmul.f32 %v2786, %v3699
    %v3771 = vmul.f32 %v2788, %v3713
    %v3772 = vmul.f32 %v2790, %v3727
    %v3773 = vmul.f32 %v2792, %v3741
    %3774 = vst [vmem:[#allocation14] sm:$0xff] %v3742
    %3775 = vst [vmem:[#allocation14 + $0x8] sm:$0xff] %v3743
    %3776 = vst [vmem:[#allocation14 + $0x10] sm:$0xff] %v3744
    %3777 = vst [vmem:[#allocation14 + $0x18] sm:$0xff] %v3745
    %3778 = vst [vmem:[#allocation14 + $0x20] sm:$0xff] %v3746
    %3779 = vst [vmem:[#allocation14 + $0x28] sm:$0xff] %v3747
    %3780 = vst [vmem:[#allocation14 + $0x30] sm:$0xff] %v3748
    %3781 = vst [vmem:[#allocation14 + $0x38] sm:$0xff] %v3749
    %3782 = vst [vmem:[#allocation14 + $0x40] sm:$0xff] %v3750
    %3783 = vst [vmem:[#allocation14 + $0x48] sm:$0xff] %v3751
    %3784 = vst [vmem:[#allocation14 + $0x50] sm:$0xff] %v3752
    %3785 = vst [vmem:[#allocation14 + $0x58] sm:$0xff] %v3753
    %3786 = vst [vmem:[#allocation14 + $0x60] sm:$0xff] %v3754
    %3787 = vst [vmem:[#allocation14 + $0x68] sm:$0xff] %v3755
    %3788 = vst [vmem:[#allocation14 + $0x70] sm:$0xff] %v3756
    %3789 = vst [vmem:[#allocation14 + $0x78] sm:$0xff] %v3757
    %3790 = vst [vmem:[#allocation14 + $0x80] sm:$0xff] %v3758
    %3791 = vst [vmem:[#allocation14 + $0x88] sm:$0xff] %v3759
    %3792 = vst [vmem:[#allocation14 + $0x90] sm:$0xff] %v3760
    %3793 = vst [vmem:[#allocation14 + $0x98] sm:$0xff] %v3761
    %3794 = vst [vmem:[#allocation14 + $0xa0] sm:$0xff] %v3762
    %3795 = vst [vmem:[#allocation14 + $0xa8] sm:$0xff] %v3763
    %3796 = vst [vmem:[#allocation14 + $0xb0] sm:$0xff] %v3764
    %3797 = vst [vmem:[#allocation14 + $0xb8] sm:$0xff] %v3765
    %3798 = vst [vmem:[#allocation14 + $0xc0] sm:$0xff] %v3766
    %3799 = vst [vmem:[#allocation14 + $0xc8] sm:$0xff] %v3767
    %3800 = vst [vmem:[#allocation14 + $0xd0] sm:$0xff] %v3768
    %3801 = vst [vmem:[#allocation14 + $0xd8] sm:$0xff] %v3769
    %3802 = vst [vmem:[#allocation14 + $0xe0] sm:$0xff] %v3770
    %3803 = vst [vmem:[#allocation14 + $0xe8] sm:$0xff] %v3771
    %3804 = vst [vmem:[#allocation14 + $0xf0] sm:$0xff] %v3772
    %3805 = vst [vmem:[#allocation14 + $0xf8] sm:$0xff] %v3773
    // Predicated region
    $region46: #{tpu_custom_call.1} parent=1 // pred_check
      _
    $region47: #{tpu_custom_call.1} parent=1 // pred_check_branch
      %3807 = sbr.rel (0) target = $region49
    $region48: #{tpu_custom_call.1} parent=1 // pred_region
      %3809 = vsyncadd [#allocation4], 0
      %s3810 = sshll.u32 [#allocation11], 4
      %s3811 = int_to_ptr.vmem [resolvable:$true] %s3810
      %s3812 = sshll.u32 %s6, 4
      %s3813 = int_to_ptr.hbm [resolvable:$true] %s3812
      %3818 = dma.vmem_to_hbm [thread:$0]  %s3811, 2048, %s3813, [#allocation4], 256, 256, 16
    $region49: #{tpu_custom_call.1} parent=1 // pred_fallthru
      _
    // Predicated region
    $region50: #{tpu_custom_call.1} parent=1 // pred_check
      _
    $region51: #{tpu_custom_call.1} parent=1 // pred_check_branch
      %3820 = sbr.rel (0) target = $region53
    $region52: #{tpu_custom_call.1} parent=1 // pred_region
      %3822 = vsyncadd [#allocation13], 0
      %s3823 = sshll.u32 [#allocation12], 4
      %s3824 = int_to_ptr.vmem [resolvable:$true] %s3823
      %s3825 = sshll.u32 %s7, 4
      %s3826 = int_to_ptr.hbm [resolvable:$true] %s3825
      %3831 = dma.vmem_to_hbm [thread:$0]  %s3824, 8192, %s3826, [#allocation13], 512, 512, 32
    $region53: #{tpu_custom_call.1} parent=1 // pred_fallthru
      _
    // Predicated region
    $region54: #{tpu_custom_call.1} parent=1 // pred_check
      _
    $region55: #{tpu_custom_call.1} parent=1 // pred_check_branch
      %3833 = sbr.rel (0) target = $region57
    $region56: #{tpu_custom_call.1} parent=1 // pred_region
      %3835 = vsyncadd [#allocation13], 0
      %s3836 = sshll.u32 [#allocation14], 4
      %s3837 = int_to_ptr.vmem [resolvable:$true] %s3836
      %s3838 = sshll.u32 %s8, 4
      %s3839 = int_to_ptr.hbm [resolvable:$true] %s3838
      %3844 = dma.vmem_to_hbm [thread:$0]  %s3837, 4096, %s3839, [#allocation13], 256, 256, 16
    $region57: #{tpu_custom_call.1} parent=1 // pred_fallthru
      _
    // Predicated region
    $region58: #{tpu_custom_call.1} parent=1 // pred_check
      _
    $region59: #{tpu_custom_call.1} parent=1 // pred_check_branch
      %3846 = sbr.rel (0) target = $region61
    $region60: #{tpu_custom_call.1} parent=1 // pred_region
      %3848 = dma.done [#allocation4], 2048
    $region61: #{tpu_custom_call.1} parent=1 // pred_fallthru
      _
    // Predicated region
    $region62: #{tpu_custom_call.1} parent=1 // pred_check
      _
    $region63: #{tpu_custom_call.1} parent=1 // pred_check_branch
      %3850 = sbr.rel (0) target = $region65
    $region64: #{tpu_custom_call.1} parent=1 // pred_region
      %3852 = dma.done [#allocation13], 8192
    $region65: #{tpu_custom_call.1} parent=1 // pred_fallthru
      _
    // Predicated region
    $region66: #{tpu_custom_call.1} parent=1 // pred_check
      _
    $region67: #{tpu_custom_call.1} parent=1 // pred_check_branch
      %3854 = sbr.rel (0) target = $region69
    $region68: #{tpu_custom_call.1} parent=1 // pred_region
      %3856 = dma.done [#allocation13], 4096
    $region69: #{tpu_custom_call.1} parent=1 // pred_fallthru
      _
    %3857 = vsyncpa [#allocation3], 1
    %3858 = vsyncpa [#allocation6], 1
    %3859 = vsyncpa [#allocation9], 1
    %3860 = vsyncpa [#allocation4], 1
    %3861 = vsyncpa [#allocation13], 1

</llo_original>
